<compile_context>
chip_gen: v7x
topology: tpu7x:2x2x1
jax: 0.10.0
libtpu: 0.0.40
codegen_flags: <defaults>
</compile_context>

<pallas_src>
import math
import numpy as np

import jax
import jax.numpy as jnp
from jax import lax
from jax.experimental import pallas as pl
from jax.experimental.pallas import tpu as pltpu

OUT_POOL = 7                                   # Torch_ROI hard-codes nn.AdaptiveAvgPool2d((7, 7))
ROI_BLOCK = 8                                  # ROIs per grid step
BLK_ROWS = ROI_BLOCK * OUT_POOL * OUT_POOL     # 392 output rows per step (divisible by 8)
LANES = 128                                    # lane width; output C padded to a multiple of this

Sub_Object = ['Back', 'person', 'bench', 'backpack', 'handbag', 'bottle', 'wine glass',
              'cup', 'bowl', 'chair', 'couch', 'bed', 'dining table', 'tv', 'laptop',
              'remote', 'cell phone', 'refrigerator', 'book']


# ----------------------------------------------------------------------------
# Host-side scalar glue (exact mirrors of the PyTorch helper functions)
# ----------------------------------------------------------------------------
def compute_iou(rec1, rec2):
    S_rec1 = (rec1[2] - rec1[0]) * (rec1[3] - rec1[1])
    S_rec2 = (rec2[2] - rec2[0]) * (rec2[3] - rec2[1])
    sum_area = S_rec1 + S_rec2
    left_line = max(rec1[1], rec2[1])
    right_line = min(rec1[3], rec2[3])
    top_line = max(rec1[0], rec2[0])
    bottom_line = min(rec1[2], rec2[2])
    if left_line >= right_line or top_line >= bottom_line:
        return 0
    intersect = (right_line - left_line) * (bottom_line - top_line)
    return intersect / (sum_area - intersect)


def box_encode(h_bx, O_BOX, Im_H, Im_W):
    encode = []
    h_x1, h_y1, h_x2, h_y2, score, _ = h_bx
    h_cx, h_cy, h_w, h_h = ((h_x1 + h_x2) / 2, (h_y1 + h_y2) / 2, h_x2 - h_x1, h_y2 - h_y1)
    for o_box in O_BOX:
        o_x1, o_y1, o_x2, o_y2, sor, cls = o_box
        o_cx, o_cy, o_w, o_h = ((o_x1 + o_x2) / 2, (o_y1 + o_y2) / 2, o_x2 - o_x1, o_y2 - o_y1)
        d_x = abs(h_cx - o_cx) / h_w * 100
        d_y = abs(h_cy - o_cy) / h_h * 100
        d_xy = math.sqrt((h_cx - o_cx) ** 2 + (h_cy - o_cy) ** 2) / (h_w + h_h) * 100
        dx_ratio, dy_ratio = (abs(h_cx - o_cx) / Im_W * 100, abs(h_cy - o_cy) / Im_H * 100)
        if abs(h_cy - o_cy) > 1e-05:
            det_y = h_cy - o_cy
        elif h_cy - o_cy > 0:
            det_y = 1e-05
        else:
            det_y = -1e-05
        angle = math.atan((h_cx - o_cx) / det_y)
        o_h_area_scale = o_w * o_h / (h_w * h_h)
        o_scale = o_h / o_w
        IoU = compute_iou(h_bx[:4], o_box[:4])
        code = {'d_x': d_x, 'd_y': d_y, 'd_xy': d_xy, 'dx_ratio': dx_ratio,
                'dy_ratio': dy_ratio, 'angle': angle, 'o_h_area_scale': o_h_area_scale,
                'o_scale': o_scale, 'IoU': IoU, 'Obj_class': int(cls),
                'Obj_name': Sub_Object[int(cls)], 'Obj_score': sor}
        encode.append(code)
    return encode


def H_O_BBOX(H_BOX, O_BOX, Im_H, Im_W):
    O_BOX = np.array(O_BOX)
    H_O_ROI = []
    geometry = []
    for h_bx in H_BOX:
        h_x1, h_y1, h_x2, h_y2, score, _ = h_bx
        O_x1, O_y1, O_x2, O_y2 = O_BOX[:, 0], O_BOX[:, 1], O_BOX[:, 2], O_BOX[:, 3]
        H_O_x1 = np.minimum(O_x1, h_x1)
        H_O_y1 = np.minimum(O_y1, h_y1)
        H_O_x2 = np.maximum(O_x2, h_x2)
        H_O_y2 = np.maximum(O_y2, h_y2)
        for h_o_box in zip(H_O_x1, H_O_y1, H_O_x2, H_O_y2):
            H_O_ROI.append(list(h_o_box))
        encode = box_encode(h_bx, O_BOX.tolist(), Im_H, Im_W)
        geometry.append(encode)
    return (H_O_ROI, geometry)


def area_sacale_ratio(BBox, im_h, im_w):
    im_area = im_h * im_w
    out = []
    for bx in BBox:
        x1, y1, x2, y2, *_ = bx
        area_box = (x2 - x1) * (y2 - y1)
        out.append(area_box / im_area * 100)
    return out


# ----------------------------------------------------------------------------
# Pallas kernel: per ROI-block, rebuild the kron pooling matrix on device from the
# factored row/col weights and do one lane-dense MXU matmul against that image's fm.
# ----------------------------------------------------------------------------
def _roi_pool_kernel(bidx_ref, wr_ref, wc_ref, fm_ref, out_ref):
    # bidx_ref : (num_blocks,) SMEM  scalar-prefetched per-block batch index (used by index_map)
    # wr_ref   : (BLK_ROWS, Hf)      expanded row weights  (row m = i*7+j -> Wr[i, :])
    # wc_ref   : (BLK_ROWS, Wf)      expanded col weights  (row m = i*7+j -> Wc[j, :])
    # fm_ref   : (C_pad, Hf*Wf)      this ROI block's image feature map (C on sublanes)
    # out_ref  : (BLK_ROWS, C_pad)   lane-dense pooled output
    del bidx_ref
    wr = wr_ref[...]
    wc = wc_ref[...]
    hf = wr.shape[-1]
    # On-device kron: P[m, h*Wf + w] = wr[m, h] * wc[m, w]  (lane-concat of broadcast products;
    # this replaces DMA-ing the ~98%-zero dense kron matrix from HBM).
    p = jnp.concatenate([wr[:, h:h + 1] * wc for h in range(hf)], axis=-1)   # (BLK_ROWS, Hf*Wf)
    # NT matmul: contract P's last axis with fm's last axis -> (BLK_ROWS, C_pad).
    out_ref[...] = lax.dot_general(
        p, fm_ref[...], (((1,), (1,)), ((), ())),
        preferred_element_type=jnp.float32).astype(out_ref.dtype)


def fused_roi_adaptive_avg_pool(fm_all, wr_rows, wc_rows, block_batch_idx):
    """One fused launch for every ROI block of every image.

    fm_all          : (B, C, Hf*Wf) jnp array (free reshape of the NCHW feature maps)
    wr_rows         : (R, Hf) np.float32, R = num_blocks * BLK_ROWS (zero rows = padding)
    wc_rows         : (R, Wf) np.float32
    block_batch_idx : (num_blocks,) int32 image index per ROI block
    returns         : (R, C) jnp.float32 pooled rows (row n*49 + i*7 + j = ROI n, bin (i, j))
    """
    B, C, K = fm_all.shape
    R, Hf = wr_rows.shape
    Wf = wc_rows.shape[1]
    assert R % BLK_ROWS == 0 and Hf * Wf == K
    nblk = R // BLK_ROWS

    # Bucket the block count to a power of two (>= 2): few compile shapes and >= 2 grid steps
    # so v7x megacore can shard ROI blocks across both TensorCores (neutral on v5e/v6e).
    nblk_pad = max(2, int(pl.next_power_of_2(max(nblk, 1))))
    if nblk_pad != nblk:
        extra = (nblk_pad - nblk) * BLK_ROWS
        wr_rows = np.pad(wr_rows, ((0, extra), (0, 0)))
        wc_rows = np.pad(wc_rows, ((0, extra), (0, 0)))
        block_batch_idx = np.pad(np.asarray(block_batch_idx), (0, nblk_pad - nblk))
    R_pad = nblk_pad * BLK_ROWS

    # Lane-dense output: pad C up to a multiple of 128 (zero channels pool to zeros).
    C_pad = LANES * (-(-C // LANES))
    fm = fm_all.astype(jnp.float32)
    if C_pad != C:
        fm = jnp.pad(fm, ((0, 0), (0, C_pad - C), (0, 0)))

    out = pl.pallas_call(
        _roi_pool_kernel,
        out_shape=jax.ShapeDtypeStruct((R_pad, C_pad), jnp.float32),
        grid_spec=pltpu.PrefetchScalarGridSpec(
            num_scalar_prefetch=1,
            grid=(nblk_pad,),
            in_specs=[
                pl.BlockSpec((BLK_ROWS, Hf), lambda r, bidx: (r, 0)),
                pl.BlockSpec((BLK_ROWS, Wf), lambda r, bidx: (r, 0)),
                # Per-block image selection via the scalar-prefetched batch index.
                pl.BlockSpec((None, C_pad, K), lambda r, bidx: (bidx[r], 0, 0)),
            ],
            out_specs=pl.BlockSpec((BLK_ROWS, C_pad), lambda r, bidx: (r, 0)),
        ),
        compiler_params=pltpu.CompilerParams(dimension_semantics=("parallel",)),
    )(jnp.asarray(block_batch_idx, dtype=jnp.int32),
      jnp.asarray(wr_rows, dtype=jnp.float32),
      jnp.asarray(wc_rows, dtype=jnp.float32),
      fm)

    out = out[:R]
    if C_pad != C:
        out = out[:, :C]
    return out


# ----------------------------------------------------------------------------
# Torch_ROI equivalent (coordinate snapping + factored-weight build on host,
# pooling itself in the fused Pallas kernel)
# ----------------------------------------------------------------------------
class TorchROIPallas:
    def __init__(self, feature_scal=14):
        self.scale = 1 / 16.0
        self.fea_scal = feature_scal

    def get_Cord(self, float_ROI):
        x1, y1, x2, y2 = float_ROI
        x1 = max(math.floor(x1), 0)
        y1 = max(math.floor(y1), 0)
        x2 = min(math.ceil(x2), self.fea_scal)
        y2 = min(math.ceil(y2), self.fea_scal)
        return int(x1), int(y1), int(x2), int(y2)

    @staticmethod
    def _adaptive_weights(start, end, full_len):
        """Row/col weight matrix of PyTorch AdaptiveAvgPool over slice [start:end).
        NOTE: degenerate/over-extent ROIs are clamped to 1-pixel pools instead of PyTorch's
        NaN/empty-slice behaviour (deliberate, documented semantic deviation)."""
        start = int(max(0, min(start, full_len - 1)))
        end = int(max(start + 1, min(end, full_len)))
        length = end - start
        Wm = np.zeros((OUT_POOL, full_len), dtype=np.float32)
        for i in range(OUT_POOL):
            a = (i * length) // OUT_POOL                 # floor(i*len/out)
            b = -((-(i + 1) * length) // OUT_POOL)       # ceil((i+1)*len/out)
            Wm[i, start + a: start + b] = 1.0 / (b - a)
        return Wm

    def pooling_factors(self, ROI, Hf, Wf):
        """ROI: (N, 5) [batch_idx, x1, y1, x2, y2] -> factored pooling weights, expanded to
        the 49 output bins: wr_exp (N, 49, Hf), wc_exp (N, 49, Wf) such that
        np.kron(Wr, Wc)[i*7+j] == outer(wr_exp[i*7+j], wc_exp[i*7+j])."""
        wr_out, wc_out = [], []
        for sg in np.asarray(ROI, dtype=np.float32).tolist():
            x1, y1, x2, y2 = self.get_Cord(np.array(sg[1:]) * self.scale)
            wr = self._adaptive_weights(y1, y2, Hf)                 # (7, Hf)
            wc = self._adaptive_weights(x1, x2, Wf)                 # (7, Wf)
            wr_out.append(np.repeat(wr, OUT_POOL, axis=0))          # row i*7+j -> wr[i]
            wc_out.append(np.tile(wc, (OUT_POOL, 1)))               # row i*7+j -> wc[j]
        return np.stack(wr_out), np.stack(wc_out)

    def __call__(self, tensor, ROI):
        """Single-image path (parity with Torch_ROI.forward): tensor (1,C,H,W), ROI (N,5)."""
        fm = tensor[0]
        C, Hf, Wf = fm.shape
        wr, wc = self.pooling_factors(np.asarray(ROI, dtype=np.float32), Hf, Wf)
        N = wr.shape[0]
        n_pad = ROI_BLOCK * (-(-N // ROI_BLOCK))
        rows = n_pad * OUT_POOL * OUT_POOL
        wr_rows = np.zeros((rows, Hf), np.float32)
        wc_rows = np.zeros((rows, Wf), np.float32)
        wr_rows[:N * OUT_POOL * OUT_POOL] = wr.reshape(-1, Hf)
        wc_rows[:N * OUT_POOL * OUT_POOL] = wc.reshape(-1, Wf)
        bidx = np.zeros((n_pad // ROI_BLOCK,), np.int32)
        pooled = fused_roi_adaptive_avg_pool(
            jnp.reshape(fm, (1, C, Hf * Wf)), wr_rows, wc_rows, bidx)
        pooled = pooled[:N * OUT_POOL * OUT_POOL].reshape(N, OUT_POOL, OUT_POOL, C)
        return jnp.transpose(pooled, (0, 3, 1, 2))                  # (N, C, 7, 7)


# ----------------------------------------------------------------------------
# RoI_layer_Pt equivalent
# ----------------------------------------------------------------------------
class RoILayerPtPallas:
    def __init__(self, out_size, in_im_sz):
        self.out_size = out_size            # NOTE: unused by forward (Torch_ROI hardcodes 7x7)
        self.in_img_sz = in_im_sz
        self.Ptorch_ROI = TorchROIPallas(feature_scal=self.in_img_sz / 16)
        self.Scens_Sparse = np.array([[0, 0, 0, self.in_img_sz - 32, self.in_img_sz - 32]])
        # TODO(synk): RoIAlignAvg / _RoIPooling are constructed in the original __init__ but
        # never used in forward; they are intentionally not reimplemented.

    def forward(self, input, BBox_info=None):
        B, C, Hf, Wf = input.shape
        K = Hf * Wf

        # ---- Pass 1 (host): per-image metadata + factored pooling weights -------------
        metas = []
        wr_chunks, wc_chunks, block_bidx = [], [], []
        total_rows = 0
        for bc_No, Box_fm in enumerate(BBox_info):
            H_Box, O_Box, im_h, im_w, vid, fn_No, h_num, o_num = Box_fm
            out_key = [True, len(Box_fm[0]) > 0, len(Box_fm[1]) > 0,
                       len(Box_fm[0]) > 0 and len(Box_fm[1]) > 0]
            out_num = [1, Box_fm[6], Box_fm[7], Box_fm[6] * Box_fm[7]]
            Score = [[0], [], [], []]
            H_area_FM_ratio, O_area_FM_ratio, HO_area_FM_ratio = [], [], []
            Object_cls, geometry = [], []
            ratio_H = np.round(self.in_img_sz / im_h, 3)
            ratio_W = np.round(self.in_img_sz / im_w, 3)

            def _norm_box(boxes):
                Box = np.insert(np.array(boxes)[:, :4], 0, values=0, axis=1)
                return np.round(Box * [1, ratio_W, ratio_H, ratio_W, ratio_H], 3)

            group_sizes = []
            wr_img, wc_img = [], []
            if out_key[1]:
                Score[1] = np.array(H_Box)[:, -2]
                H_area_FM_ratio = area_sacale_ratio(H_Box, im_h, im_w)
                wr, wc = self.Ptorch_ROI.pooling_factors(_norm_box(H_Box), Hf, Wf)
                wr_img.append(wr); wc_img.append(wc); group_sizes.append(len(H_Box))
            if out_key[2]:
                Score[2] = np.array(O_Box)[:, -2]
                O_area_FM_ratio = area_sacale_ratio(O_Box, im_h, im_w)
                wr, wc = self.Ptorch_ROI.pooling_factors(_norm_box(O_Box), Hf, Wf)
                wr_img.append(wr); wc_img.append(wc); group_sizes.append(len(O_Box))
                Object_cls.append(np.array(O_Box)[:, -1])
                if out_key[3]:
                    H_O_ROI, geometry = H_O_BBOX(H_BOX=H_Box, O_BOX=O_Box, Im_H=im_h, Im_W=im_w)
                    HO_area_FM_ratio = area_sacale_ratio(H_O_ROI, im_h, im_w)
                    Score[3] = np.array(O_Box)[:, -2]
                    wr, wc = self.Ptorch_ROI.pooling_factors(_norm_box(H_O_ROI), Hf, Wf)
                    wr_img.append(wr); wc_img.append(wc); group_sizes.append(len(H_O_ROI))

            n_rois = int(sum(group_sizes))
            row_start = total_rows
            if n_rois > 0:
                n_pad = ROI_BLOCK * (-(-n_rois // ROI_BLOCK))
                rows_pad = n_pad * OUT_POOL * OUT_POOL
                wr_rows = np.zeros((rows_pad, Hf), np.float32)
                wc_rows = np.zeros((rows_pad, Wf), np.float32)
                wr_rows[:n_rois * OUT_POOL * OUT_POOL] = np.concatenate(wr_img, 0).reshape(-1, Hf)
                wc_rows[:n_rois * OUT_POOL * OUT_POOL] = np.concatenate(wc_img, 0).reshape(-1, Wf)
                wr_chunks.append(wr_rows); wc_chunks.append(wc_rows)
                block_bidx.extend([bc_No] * (n_pad // ROI_BLOCK))
                total_rows += rows_pad

            metas.append(dict(out_key=out_key, out_num=out_num, Score=Score,
                              geometry=geometry, Object_cls=Object_cls,
                              H_ratio=H_area_FM_ratio, O_ratio=O_area_FM_ratio,
                              HO_ratio=HO_area_FM_ratio, vid=vid, fn_No=fn_No,
                              group_sizes=group_sizes, n_rois=n_rois, row_start=row_start))

        # ---- Single fused device launch for every ROI of every image ------------------
        pooled_all = None
        if total_rows > 0:
            wr_all = np.concatenate(wr_chunks, 0)
            wc_all = np.concatenate(wc_chunks, 0)
            fm_all = jnp.reshape(input, (B, C, K))      # free reshape, no transpose
            pooled_all = fused_roi_adaptive_avg_pool(
                fm_all, wr_all, wc_all, np.asarray(block_bidx, np.int32))   # (total_rows, C)

        # ---- Pass 2: distribute pooled rows back to (image, group) nodes --------------
        batch_out = []
        for bc_No, m in enumerate(metas):
            S_node = input[bc_No:bc_No + 1]             # (1, C, H, W)  (== index_select)
            H_Node = O_Node = H_O_Node = None
            if m['n_rois'] > 0:
                chunk = pooled_all[m['row_start']: m['row_start'] + m['n_rois'] * OUT_POOL * OUT_POOL]
                nodes = chunk.reshape(m['n_rois'], OUT_POOL, OUT_POOL, C)
                nodes = jnp.transpose(nodes, (0, 3, 1, 2))          # (n_rois, C, 7, 7) NCHW
                offs = np.cumsum([0] + m['group_sizes'])
                pieces = [nodes[offs[i]: offs[i + 1]] for i in range(len(m['group_sizes']))]
                gi = 0
                if m['out_key'][1]:
                    H_Node = pieces[gi]; gi += 1
                if m['out_key'][2]:
                    O_Node = pieces[gi]; gi += 1
                    if m['out_key'][3]:
                        H_O_Node = pieces[gi]; gi += 1
            area_ratio_fm = [m['H_ratio'], m['O_ratio'], m['HO_ratio'],
                             m['vid'], m['fn_No'], m['Object_cls']]
            batch_out.append([S_node, H_Node, O_Node, H_O_Node, m['out_key'], m['out_num'],
                              m['Score'], m['geometry'], area_ratio_fm])
        return batch_out


# ----------------------------------------------------------------------------
# Pure-numpy reference for one ROI (PyTorch AdaptiveAvgPool2d semantics) — sanity check
# ----------------------------------------------------------------------------
def _ref_roi_pool(fm_np, x1, y1, x2, y2, out=OUT_POOL):
    roi = fm_np[:, y1:y2, x1:x2]
    C, h, w = roi.shape
    res = np.zeros((C, out, out), np.float32)
    for i in range(out):
        ra, rb = (i * h) // out, -((-(i + 1) * h) // out)
        for j in range(out):
            ca, cb = (j * w) // out, -((-(j + 1) * w) // out)
            res[:, i, j] = roi[:, ra:rb, ca:cb].mean(axis=(1, 2))
    return res


if __name__ == "__main__":
    # Small shapes consistent with the module: in_im_sz=224 -> 14x14 feature map (stride 16).
    B, C, Hf, Wf = 2, 4, 14, 14
    in_im_sz = 224

    key = jax.random.PRNGKey(0)
    x = jax.random.normal(key, (B, C, Hf, Wf), dtype=jnp.float32)   # NCHW feature map

    im_h, im_w = 180.0, 240.0
    BBox_info = [
        # [H_Box, O_Box, im_h, im_w, vid, fn_No, h_num, o_num]
        [[[20.0, 30.0, 120.0, 150.0, 0.9, 1.0]],
         [[60.0, 40.0, 200.0, 160.0, 0.8, 7.0],
          [10.0, 10.0, 90.0, 90.0, 0.7, 5.0]],
         im_h, im_w, 'v0', 0, 1, 2],
        [[[15.0, 20.0, 100.0, 170.0, 0.95, 1.0]],
         [[50.0, 60.0, 180.0, 175.0, 0.6, 13.0]],
         im_h, im_w, 'v1', 3, 1, 1],
    ]

    model = RoILayerPtPallas(out_size=7, in_im_sz=in_im_sz)
    batch_out = model.forward(x, BBox_info)

    # Block on all device outputs.
    for entry in batch_out:
        for node in entry[:4]:
            if node is not None:
                jax.block_until_ready(node)

    # ---- Sanity checks against a pure-numpy reference of the PyTorch path -------------
    ratio_H = np.round(in_im_sz / im_h, 3)
    ratio_W = np.round(in_im_sz / im_w, 3)
    roi_helper = model.Ptorch_ROI

    def _ref_nodes(boxes, fm_np):
        Box = np.insert(np.array(boxes)[:, :4], 0, values=0, axis=1)
        Nm = np.round(Box * [1, ratio_W, ratio_H, ratio_W, ratio_H], 3)
        refs = []
        for row in Nm:
            x1, y1, x2, y2 = roi_helper.get_Cord(np.array(row[1:]) * (1 / 16.0))
            refs.append(_ref_roi_pool(fm_np, x1, y1, x2, y2))
        return np.stack(refs)

    fm0 = np.asarray(x[0])
    # Batch 0: H group.
    ref_H = _ref_nodes(BBox_info[0][0], fm0)
    got_H = np.asarray(batch_out[0][1])
    assert got_H.shape == (1, C, OUT_POOL, OUT_POOL)
    assert np.allclose(got_H, ref_H, rtol=1e-4, atol=1e-5), "H ROI pooling mismatch"
    # Batch 0: O group (checks multi-ROI row ordering).
    ref_O = _ref_nodes(BBox_info[0][1], fm0)
    got_O = np.asarray(batch_out[0][2])
    assert got_O.shape == (2, C, OUT_POOL, OUT_POOL)
    assert np.allclose(got_O, ref_O, rtol=1e-4, atol=1e-5), "O ROI pooling mismatch"
    # Shape checks for the remaining nodes.
    assert batch_out[0][3].shape == (2, C, OUT_POOL, OUT_POOL)   # H_O_Node (1 human x 2 objects)
    assert batch_out[1][1].shape == (1, C, OUT_POOL, OUT_POOL)
    assert batch_out[1][3].shape == (1, C, OUT_POOL, OUT_POOL)

    # Exercise the single-image Torch_ROI-equivalent path and cross-check it.
    Box = np.insert(np.array(BBox_info[0][0])[:, :4], 0, values=0, axis=1)
    Nm_box = np.round(Box * [1, ratio_W, ratio_H, ratio_W, ratio_H], 3)
    direct = roi_helper(x[0:1], Nm_box)
    jax.block_until_ready(direct)
    assert np.allclose(np.asarray(direct), got_H, rtol=1e-5, atol=1e-6), "single-image path mismatch"

    print("KERNEL_OK")
</pallas_src>

<mosaic_0001>
module attributes {stable_mosaic.version = 11 : i64} {
  func.func @_roi_pool_kernel(%arg0: i32, %arg1: memref<2xi32, #tpu.memory_space<smem>>, %arg2: memref<392x14xf32, #tpu.memory_space<vmem>>, %arg3: memref<392x14xf32, #tpu.memory_space<vmem>>, %arg4: memref<1x128x196xf32, #tpu.memory_space<vmem>>, %arg5: memref<392x128xf32, #tpu.memory_space<vmem>>) attributes {dimension_semantics = [#tpu.dimension_semantics<parallel>], iteration_bounds = array<i64: 2>, scalar_prefetch = 1 : i64, scratch_operands = 0 : i64, tpu.core_type = #tpu.core_type<tc>, window_params = [{transform_indices = @transform_0, window_bounds = array<i64: 392, 14>}, {transform_indices = @transform_1, window_bounds = array<i64: 392, 14>}, {transform_indices = @transform_2, window_bounds = array<i64: 1, 128, 196>}, {transform_indices = @transform_3, window_bounds = array<i64: 392, 128>}]} {
    %c0 = arith.constant 0 : index
    %c0_0 = arith.constant 0 : index
    %0 = vector.load %arg2[%c0, %c0_0] : memref<392x14xf32, #tpu.memory_space<vmem>>, vector<392x14xf32>
    %c0_1 = arith.constant 0 : index
    %c0_2 = arith.constant 0 : index
    %1 = vector.load %arg3[%c0_1, %c0_2] : memref<392x14xf32, #tpu.memory_space<vmem>>, vector<392x14xf32>
    %2 = vector.extract_strided_slice %0 {offsets = [0, 0], sizes = [392, 1], strides = [1, 1]} : vector<392x14xf32> to vector<392x1xf32>
    %3 = vector.broadcast %2 : vector<392x1xf32> to vector<392x14xf32>
    %4 = arith.mulf %3, %1 : vector<392x14xf32>
    %5 = vector.extract_strided_slice %0 {offsets = [0, 1], sizes = [392, 1], strides = [1, 1]} : vector<392x14xf32> to vector<392x1xf32>
    %6 = vector.broadcast %5 : vector<392x1xf32> to vector<392x14xf32>
    %7 = arith.mulf %6, %1 : vector<392x14xf32>
    %8 = vector.extract_strided_slice %0 {offsets = [0, 2], sizes = [392, 1], strides = [1, 1]} : vector<392x14xf32> to vector<392x1xf32>
    %9 = vector.broadcast %8 : vector<392x1xf32> to vector<392x14xf32>
    %10 = arith.mulf %9, %1 : vector<392x14xf32>
    %11 = vector.extract_strided_slice %0 {offsets = [0, 3], sizes = [392, 1], strides = [1, 1]} : vector<392x14xf32> to vector<392x1xf32>
    %12 = vector.broadcast %11 : vector<392x1xf32> to vector<392x14xf32>
    %13 = arith.mulf %12, %1 : vector<392x14xf32>
    %14 = vector.extract_strided_slice %0 {offsets = [0, 4], sizes = [392, 1], strides = [1, 1]} : vector<392x14xf32> to vector<392x1xf32>
    %15 = vector.broadcast %14 : vector<392x1xf32> to vector<392x14xf32>
    %16 = arith.mulf %15, %1 : vector<392x14xf32>
    %17 = vector.extract_strided_slice %0 {offsets = [0, 5], sizes = [392, 1], strides = [1, 1]} : vector<392x14xf32> to vector<392x1xf32>
    %18 = vector.broadcast %17 : vector<392x1xf32> to vector<392x14xf32>
    %19 = arith.mulf %18, %1 : vector<392x14xf32>
    %20 = vector.extract_strided_slice %0 {offsets = [0, 6], sizes = [392, 1], strides = [1, 1]} : vector<392x14xf32> to vector<392x1xf32>
    %21 = vector.broadcast %20 : vector<392x1xf32> to vector<392x14xf32>
    %22 = arith.mulf %21, %1 : vector<392x14xf32>
    %23 = vector.extract_strided_slice %0 {offsets = [0, 7], sizes = [392, 1], strides = [1, 1]} : vector<392x14xf32> to vector<392x1xf32>
    %24 = vector.broadcast %23 : vector<392x1xf32> to vector<392x14xf32>
    %25 = arith.mulf %24, %1 : vector<392x14xf32>
    %26 = vector.extract_strided_slice %0 {offsets = [0, 8], sizes = [392, 1], strides = [1, 1]} : vector<392x14xf32> to vector<392x1xf32>
    %27 = vector.broadcast %26 : vector<392x1xf32> to vector<392x14xf32>
    %28 = arith.mulf %27, %1 : vector<392x14xf32>
    %29 = vector.extract_strided_slice %0 {offsets = [0, 9], sizes = [392, 1], strides = [1, 1]} : vector<392x14xf32> to vector<392x1xf32>
    %30 = vector.broadcast %29 : vector<392x1xf32> to vector<392x14xf32>
    %31 = arith.mulf %30, %1 : vector<392x14xf32>
    %32 = vector.extract_strided_slice %0 {offsets = [0, 10], sizes = [392, 1], strides = [1, 1]} : vector<392x14xf32> to vector<392x1xf32>
    %33 = vector.broadcast %32 : vector<392x1xf32> to vector<392x14xf32>
    %34 = arith.mulf %33, %1 : vector<392x14xf32>
    %35 = vector.extract_strided_slice %0 {offsets = [0, 11], sizes = [392, 1], strides = [1, 1]} : vector<392x14xf32> to vector<392x1xf32>
    %36 = vector.broadcast %35 : vector<392x1xf32> to vector<392x14xf32>
    %37 = arith.mulf %36, %1 : vector<392x14xf32>
    %38 = vector.extract_strided_slice %0 {offsets = [0, 12], sizes = [392, 1], strides = [1, 1]} : vector<392x14xf32> to vector<392x1xf32>
    %39 = vector.broadcast %38 : vector<392x1xf32> to vector<392x14xf32>
    %40 = arith.mulf %39, %1 : vector<392x14xf32>
    %41 = vector.extract_strided_slice %0 {offsets = [0, 13], sizes = [392, 1], strides = [1, 1]} : vector<392x14xf32> to vector<392x1xf32>
    %42 = vector.broadcast %41 : vector<392x1xf32> to vector<392x14xf32>
    %43 = arith.mulf %42, %1 : vector<392x14xf32>
    %44 = tpu.concatenate %4, %7, %10, %13, %16, %19, %22, %25, %28, %31, %34, %37, %40, %43 in 1 : vector<392x14xf32>, vector<392x14xf32>, vector<392x14xf32>, vector<392x14xf32>, vector<392x14xf32>, vector<392x14xf32>, vector<392x14xf32>, vector<392x14xf32>, vector<392x14xf32>, vector<392x14xf32>, vector<392x14xf32>, vector<392x14xf32>, vector<392x14xf32>, vector<392x14xf32> -> vector<392x196xf32>
    %c0_3 = arith.constant 0 : index
    %c0_4 = arith.constant 0 : index
    %c0_5 = arith.constant 0 : index
    %45 = vector.load %arg4[%c0_3, %c0_4, %c0_5] : memref<1x128x196xf32, #tpu.memory_space<vmem>>, vector<1x128x196xf32>
    %46 = vector.shape_cast %45 : vector<1x128x196xf32> to vector<128x196xf32>
    %cst = arith.constant dense<0.000000e+00> : vector<392x128xf32>
    %47 = tpu.matmul %44, %46, %cst {dimension_numbers = #tpu.dot_dimension_numbers<[1], [1], [0], [0], [0, 0, 1, 0], [], []>} : vector<392x196xf32>, vector<128x196xf32>, vector<392x128xf32> -> vector<392x128xf32>
    %c0_6 = arith.constant 0 : index
    %c0_7 = arith.constant 0 : index
    %48 = vector.load %arg5[%c0_6, %c0_7] : memref<392x128xf32, #tpu.memory_space<vmem>>, vector<392x128xf32>
    tpu.vector_store %arg5[%c0_6, %c0_7], %47 {strides = array<i32>} : memref<392x128xf32, #tpu.memory_space<vmem>>, vector<392x128xf32>,
    return
  }
  func.func @transform_0(%arg0: i32, %arg1: memref<2xi32, #tpu.memory_space<smem>>) -> (i32, i32) {
    %c0_i32 = arith.constant 0 : i32
    %c0_i32_0 = arith.constant 0 : i32
    return %arg0, %c0_i32 : i32, i32
  }
  func.func @transform_1(%arg0: i32, %arg1: memref<2xi32, #tpu.memory_space<smem>>) -> (i32, i32) {
    %c0_i32 = arith.constant 0 : i32
    %c0_i32_0 = arith.constant 0 : i32
    return %arg0, %c0_i32 : i32, i32
  }
  func.func @transform_2(%arg0: i32, %arg1: memref<2xi32, #tpu.memory_space<smem>>) -> (i32, i32, i32) {
    %0 = arith.index_cast %arg0 : i32 to index
    %1 = memref.load %arg1[%0] : memref<2xi32, #tpu.memory_space<smem>>
    %c0_i32 = arith.constant 0 : i32
    %c0_i32_0 = arith.constant 0 : i32
    %c0_i32_1 = arith.constant 0 : i32
    return %1, %c0_i32, %c0_i32_0 : i32, i32, i32
  }
  func.func @transform_3(%arg0: i32, %arg1: memref<2xi32, #tpu.memory_space<smem>>) -> (i32, i32) {
    %c0_i32 = arith.constant 0 : i32
    %c0_i32_0 = arith.constant 0 : i32
    return %arg0, %c0_i32 : i32, i32
  }
}

</mosaic_0001>

<llo_original>
// kernel: tpu_custom_call.1
$region0: #{tpu_custom_call.1}
  #allocation0 [shape = 'u32[]', space=smem, size = 0x4, offset = 0x4, fixed_abs, tag = 'smem constant byte address 0x4 - core index']
  #allocation1 [shape = 'u32[144,128]{1,0:T(1,128)}', space=vmem, size = 0x12000, scoped, tag = 'internal scratch']
  #allocation2 [shape = 's32[1]{0}', space=sflag, size = 0x4, scoped, tag = 'scoped memory for tpu_custom_call.1']
  #allocation3 [shape = 'u8[512]{0}', space=smem, size = 0x200, scoped, tag = 'prefetched SMEM operand 0']
  %s0 = inlined_call_operand.vmem [shape: s32[2], index: 0, kind: input, shape index: {}]
  %s1 = inlined_call_operand.vmem [shape: f32[784,14], index: 1, kind: input, shape index: {}]
  %s2 = inlined_call_operand.vmem [shape: f32[784,14], index: 2, kind: input, shape index: {}]
  %s3 = inlined_call_operand.vmem [shape: f32[2,128,196], index: 3, kind: input, shape index: {}]
  %s4 = inlined_call_operand.hbm [shape: f32[784,128], index: 4, kind: output, shape index: {}]
  %s5 = sld [smem:[#allocation0]]
  $region45: #{tpu_custom_call.1} parent=0
    _
  %s7 = ssub.s32 1, %s5
  %s8 = scalar_select 0, %s7, %s5
  %s9 = sshll.u32 %s0, 4
  %s10 = int_to_ptr.vmem [resolvable:$true] %s9
  %12 = dma.vmem_to_smem %s10, 16, [#allocation3], [#allocation2]
  %13 = dma.done [#allocation2], 16
  %14 = sfence
  $region1: #{tpu_custom_call.1} parent=0
    #allocation4 [shape = 'u8[401408]{0}', space=vmem, size = 0x62000, scoped, tag = 'output window, operand 0']
    #allocation5 [shape = 's32[2]{0}', space=sflag, size = 0x8, scoped, tag = 'scoped memory for tpu_custom_call.1']
    %15 = vsyncpa [#allocation5], 0
    %s16 = scalar_lea.sflag [#allocation5], 1
    %17 = vsyncpa %s16, 0
    loop: start=0, step=1, limit=4
    $region2: #{tpu_custom_call.1} parent=1 // loop_pre_header
      _
    $region3: #{tpu_custom_call.1} parent=1 // loop_header
      %s19 = sphi 0, %s23
      %p20 = scmp.ge.s32.totalorder %s19, 4
      %s29 = sphi 0, %s31
      %s32 = sphi 0, %s29
      %s33 = sphi 0, %s32
      %s49 = sphi 0, %s33
      %s55 = sphi 0, %s57
      %s58 = sphi 0, %s55
      %s59 = sphi 0, %s58
      %s75 = sphi 0, %s59
      %s83 = sphi 0, %s85
      %s86 = sphi 0, %s83
      %s87 = sphi 0, %s86
      %s103 = sphi 0, %s87
      %s109 = sphi 0, %s111
      %s112 = sphi 0, %s109
      %s113 = sphi 0, %s112
      %s129 = sphi 0, %s113
    $region4: #{tpu_custom_call.1} parent=1 // loop_header_branch
      %22 = sbr.rel (%p20) target = $region8
    $region5: #{tpu_custom_call.1} parent=1 // loop_body
      %s24 = ssub.s32 %s19, 1
      %s25 = ssub.s32 %s19, 2
      %s26 = sadd.s32 %s19, 1
      %s27 = ssub.s32 %s19, %s26
      %p28 = scmp.eq.s32.totalorder %s27, 0
      %s30 = sadd.s32 %s29, 1
      %s31 = scalar_select %p28, %s29, %s30
      %p34 = pneg %p28
      %p35 = scmp.eq.s32.totalorder %s19, 1
      %p36 = por %p34, %p35
      %p37 = scmp.ne.s32.totalorder %s29, %s32
      %p38 = scmp.eq.s32.totalorder %s19, 0
      %p39 = por %p37, %p38
      %p40 = scmp.ne.s32.totalorder %s29, %s32
      %p41 = scmp.eq.s32.totalorder %s24, 1
      %p42 = por %p40, %p41
      %p43 = scmp.ne.s32.totalorder %s32, %s33
      %p44 = scmp.eq.s32.totalorder %s24, 0
      %p45 = por %p43, %p44
      %p46 = scmp.ne.s32.totalorder %s32, %s33
      %p47 = scmp.eq.s32.totalorder %s25, 1
      %p48 = por %p46, %p47
      %p50 = scmp.ne.s32.totalorder %s33, %s49
      %p51 = scmp.eq.s32.totalorder %s25, 0
      %p52 = por %p50, %p51
      %s53 = ssub.s32 %s19, %s26
      %p54 = scmp.eq.s32.totalorder %s53, 0
      %s56 = sadd.s32 %s55, 1
      %s57 = scalar_select %p54, %s55, %s56
      %p60 = pneg %p54
      %p61 = scmp.eq.s32.totalorder %s19, 1
      %p62 = por %p60, %p61
      %p63 = scmp.ne.s32.totalorder %s55, %s58
      %p64 = scmp.eq.s32.totalorder %s19, 0
      %p65 = por %p63, %p64
      %p66 = scmp.ne.s32.totalorder %s55, %s58
      %p67 = scmp.eq.s32.totalorder %s24, 1
      %p68 = por %p66, %p67
      %p69 = scmp.ne.s32.totalorder %s58, %s59
      %p70 = scmp.eq.s32.totalorder %s24, 0
      %p71 = por %p69, %p70
      %p72 = scmp.ne.s32.totalorder %s58, %s59
      %p73 = scmp.eq.s32.totalorder %s25, 1
      %p74 = por %p72, %p73
      %p76 = scmp.ne.s32.totalorder %s59, %s75
      %p77 = scmp.eq.s32.totalorder %s25, 0
      %p78 = por %p76, %p77
      %s79 = sld [smem:[#allocation3 + %s19]]
      %s80 = sld [smem:[#allocation3 + %s26]]
      %s81 = ssub.s32 %s79, %s80
      %p82 = scmp.eq.s32.totalorder %s81, 0
      %s84 = sadd.s32 %s83, 1
      %s85 = scalar_select %p82, %s83, %s84
      %p88 = pneg %p82
      %p89 = scmp.eq.s32.totalorder %s19, 1
      %p90 = por %p88, %p89
      %p91 = scmp.ne.s32.totalorder %s83, %s86
      %p92 = scmp.eq.s32.totalorder %s19, 0
      %p93 = por %p91, %p92
      %p94 = scmp.ne.s32.totalorder %s83, %s86
      %p95 = scmp.eq.s32.totalorder %s24, 1
      %p96 = por %p94, %p95
      %p97 = scmp.ne.s32.totalorder %s86, %s87
      %p98 = scmp.eq.s32.totalorder %s24, 0
      %p99 = por %p97, %p98
      %p100 = scmp.ne.s32.totalorder %s86, %s87
      %p101 = scmp.eq.s32.totalorder %s25, 1
      %p102 = por %p100, %p101
      %p104 = scmp.ne.s32.totalorder %s87, %s103
      %p105 = scmp.eq.s32.totalorder %s25, 0
      %p106 = por %p104, %p105
      %s107 = ssub.s32 %s19, %s26
      %p108 = scmp.eq.s32.totalorder %s107, 0
      %s110 = sadd.s32 %s109, 1
      %s111 = scalar_select %p108, %s109, %s110
      %p114 = pneg %p108
      %p115 = scmp.eq.s32.totalorder %s19, 1
      %p116 = por %p114, %p115
      %p117 = scmp.ne.s32.totalorder %s109, %s112
      %p118 = scmp.eq.s32.totalorder %s19, 0
      %p119 = por %p117, %p118
      %p120 = scmp.ne.s32.totalorder %s109, %s112
      %p121 = scmp.eq.s32.totalorder %s24, 1
      %p122 = por %p120, %p121
      %p123 = scmp.ne.s32.totalorder %s112, %s113
      %p124 = scmp.eq.s32.totalorder %s24, 0
      %p125 = por %p123, %p124
      %p126 = scmp.ne.s32.totalorder %s112, %s113
      %p127 = scmp.eq.s32.totalorder %s25, 1
      %p128 = por %p126, %p127
      %p130 = scmp.ne.s32.totalorder %s113, %s129
      %p131 = scmp.eq.s32.totalorder %s25, 0
      %p132 = por %p130, %p131
      %p133 = scmp.le.s32.totalorder 1, %s19
      %p134 = scmp.lt.s32.totalorder %s19, 3
      %p135 = pnand %p133, %p134
      %p136 = pneg %p135
      // Predicated region
      $region9: #{tpu_custom_call.1} parent=5 // pred_check
        _
      $region10: #{tpu_custom_call.1} parent=5 // pred_check_branch
        %138 = sbr.rel (%p135) target = $region12
      $region11: #{tpu_custom_call.1} parent=5 // pred_region
        %s139 = ssub.s32 %s19, 1
      $region12: #{tpu_custom_call.1} parent=5 // pred_fallthru
        _
      %p140 = scmp.lt.s32.totalorder %s19, 2
      // Predicated region
      $region13: #{tpu_custom_call.1} parent=5 // pred_check
        %p141 = pneg %p140
      $region14: #{tpu_custom_call.1} parent=5 // pred_check_branch
        %143 = sbr.rel (%p141) target = $region16
      $region15: #{tpu_custom_call.1} parent=5 // pred_region
        // Predicated region
        $region17: #{tpu_custom_call.1} parent=15 // pred_check
          %p144 = pneg %p39
        $region18: #{tpu_custom_call.1} parent=15 // pred_check_branch
          %146 = sbr.rel (%p144) target = $region20
        $region19: #{tpu_custom_call.1} parent=15 // pred_region
          %s147 = smul.u32 49, %s19
          %p148 = scmp.lt.s32.totalorder %s147, 97
          %s149 = scalar_select %p148, %s147, 97
          %s150 = smul.addr %s149, 8
          %s151 = scalar_lea.vmem %s1, %s150
          %s152 = smul.u32 49, %s19
        $region20: #{tpu_custom_call.1} parent=15 // pred_fallthru
          _
        // Predicated region
        $region21: #{tpu_custom_call.1} parent=15 // pred_check
          %p153 = pneg %p65
        $region22: #{tpu_custom_call.1} parent=15 // pred_check_branch
          %155 = sbr.rel (%p153) target = $region24
        $region23: #{tpu_custom_call.1} parent=15 // pred_region
          %s156 = smul.u32 49, %s19
          %p157 = scmp.lt.s32.totalorder %s156, 97
          %s158 = scalar_select %p157, %s156, 97
          %s159 = smul.addr %s158, 8
          %s160 = scalar_lea.vmem %s2, %s159
          %s161 = smul.u32 49, %s19
        $region24: #{tpu_custom_call.1} parent=15 // pred_fallthru
          _
        // Predicated region
        $region25: #{tpu_custom_call.1} parent=15 // pred_check
          %p162 = pneg %p93
        $region26: #{tpu_custom_call.1} parent=15 // pred_check_branch
          %164 = sbr.rel (%p162) target = $region28
        $region27: #{tpu_custom_call.1} parent=15 // pred_region
          %s165 = sld [smem:[#allocation3 + %s19]]
          %p166 = scmp.lt.s32.totalorder %s165, 1
          %s167 = scalar_select %p166, %s165, 1
          %s168 = smul.addr %s167, 32
          %s169 = smul.addr %s168, 8
          %s170 = scalar_lea.vmem %s3, %s169
          %s171 = sld [smem:[#allocation3 + %s19]]
        $region28: #{tpu_custom_call.1} parent=15 // pred_fallthru
          _
      $region16: #{tpu_custom_call.1} parent=5 // pred_fallthru
        _
      %p172 = scmp.le.s32.totalorder 1, %s19
      %p173 = scmp.lt.s32.totalorder %s19, 3
      %p174 = pnand %p172, %p173
      %p175 = pneg %p174
      // Predicated region
      $region29: #{tpu_custom_call.1} parent=5 // pred_check
        _
      $region30: #{tpu_custom_call.1} parent=5 // pred_check_branch
        %177 = sbr.rel (%p174) target = $region32
      $region31: #{tpu_custom_call.1} parent=5 // pred_region
        %s178 = ssub.s32 %s19, 1
        %s179 = smul.u32 49, %s24
        %p180 = scmp.lt.s32.totalorder %s179, 97
        %s181 = scalar_select %p180, %s179, 97
        %s182 = smul.addr %s181, 8
        %s183 = scalar_lea.vmem %s1, %s182
        %p184 = pneg %p45
        %p185 = pneg %p42
        %s186 = smul.u32 49, %s24
        %p187 = scmp.lt.s32.totalorder %s186, 97
        %s188 = scalar_select %p187, %s186, 97
        %s189 = smul.addr %s188, 8
        %s190 = scalar_lea.vmem %s2, %s189
        %p191 = pneg %p71
        %p192 = pneg %p68
        %s193 = sld [smem:[#allocation3 + %s24]]
        %p194 = scmp.lt.s32.totalorder %s193, 1
        %s195 = scalar_select %p194, %s193, 1
        %s196 = smul.addr %s195, 32
        %s197 = smul.addr %s196, 8
        %s198 = scalar_lea.vmem %s3, %s197
        %p199 = pneg %p99
        %p200 = pneg %p96
        %p201 = pneg %p125
        %p202 = pneg %p122
        %s203 = sand.u32 %s112, 1
        %s204 = scalar_lea.sflag [#allocation5], %s203
        %s205 = sand.u32 %s112, 1
        %s206 = smul.addr %s205, 392
        %s207 = scalar_lea.vmem [#allocation4], %s206
        %s208 = smul.u32 49, %s24
        %p209 = scmp.lt.s32.totalorder %s208, 97
        %s210 = scalar_select %p209, %s208, 97
        %s211 = smul.addr %s210, 8
        %s212 = scalar_lea.vmem %s1, %s211
        %s213 = smul.u32 49, %s24
        %s214 = smul.u32 49, %s24
        %p215 = scmp.lt.s32.totalorder %s214, 97
        %s216 = scalar_select %p215, %s214, 97
        %s217 = smul.addr %s216, 8
        %s218 = scalar_lea.vmem %s2, %s217
        %s219 = smul.u32 49, %s24
        %s220 = sld [smem:[#allocation3 + %s24]]
        %p221 = scmp.lt.s32.totalorder %s220, 1
        %s222 = scalar_select %p221, %s220, 1
        %s223 = smul.addr %s222, 32
        %s224 = smul.addr %s223, 8
        %s225 = scalar_lea.vmem %s3, %s224
        %s226 = sld [smem:[#allocation3 + %s24]]
        %s227 = smul.u32 49, %s24
        %v228 = vld [vmem:[%s212] sm:$0xff]
        %v229 = vld [vmem:[%s212 + $0x8] sm:$0xff]
        %v230 = vld [vmem:[%s212 + $0x10] sm:$0xff]
        %v231 = vld [vmem:[%s212 + $0x18] sm:$0xff]
        %v232 = vld [vmem:[%s212 + $0x20] sm:$0xff]
        %v233 = vld [vmem:[%s212 + $0x28] sm:$0xff]
        %v234 = vld [vmem:[%s212 + $0x30] sm:$0xff]
        %v235 = vld [vmem:[%s212 + $0x38] sm:$0xff]
        %v236 = vld [vmem:[%s212 + $0x40] sm:$0xff]
        %v237 = vld [vmem:[%s212 + $0x48] sm:$0xff]
        %v238 = vld [vmem:[%s212 + $0x50] sm:$0xff]
        %v239 = vld [vmem:[%s212 + $0x58] sm:$0xff]
        %v240 = vld [vmem:[%s212 + $0x60] sm:$0xff]
        %v241 = vld [vmem:[%s212 + $0x68] sm:$0xff]
        %v242 = vld [vmem:[%s212 + $0x70] sm:$0xff]
        %v243 = vld [vmem:[%s212 + $0x78] sm:$0xff]
        %v244 = vld [vmem:[%s212 + $0x80] sm:$0xff]
        %v245 = vld [vmem:[%s212 + $0x88] sm:$0xff]
        %v246 = vld [vmem:[%s212 + $0x90] sm:$0xff]
        %v247 = vld [vmem:[%s212 + $0x98] sm:$0xff]
        %v248 = vld [vmem:[%s212 + $0xa0] sm:$0xff]
        %v249 = vld [vmem:[%s212 + $0xa8] sm:$0xff]
        %v250 = vld [vmem:[%s212 + $0xb0] sm:$0xff]
        %v251 = vld [vmem:[%s212 + $0xb8] sm:$0xff]
        %v252 = vld [vmem:[%s212 + $0xc0] sm:$0xff]
        %v253 = vld [vmem:[%s212 + $0xc8] sm:$0xff]
        %v254 = vld [vmem:[%s212 + $0xd0] sm:$0xff]
        %v255 = vld [vmem:[%s212 + $0xd8] sm:$0xff]
        %v256 = vld [vmem:[%s212 + $0xe0] sm:$0xff]
        %v257 = vld [vmem:[%s212 + $0xe8] sm:$0xff]
        %v258 = vld [vmem:[%s212 + $0xf0] sm:$0xff]
        %v259 = vld [vmem:[%s212 + $0xf8] sm:$0xff]
        %v260 = vld [vmem:[%s212 + $0x100] sm:$0xff]
        %v261 = vld [vmem:[%s212 + $0x108] sm:$0xff]
        %v262 = vld [vmem:[%s212 + $0x110] sm:$0xff]
        %v263 = vld [vmem:[%s212 + $0x118] sm:$0xff]
        %v264 = vld [vmem:[%s212 + $0x120] sm:$0xff]
        %v265 = vld [vmem:[%s212 + $0x128] sm:$0xff]
        %v266 = vld [vmem:[%s212 + $0x130] sm:$0xff]
        %v267 = vld [vmem:[%s212 + $0x138] sm:$0xff]
        %v268 = vld [vmem:[%s212 + $0x140] sm:$0xff]
        %v269 = vld [vmem:[%s212 + $0x148] sm:$0xff]
        %v270 = vld [vmem:[%s212 + $0x150] sm:$0xff]
        %v271 = vld [vmem:[%s212 + $0x158] sm:$0xff]
        %v272 = vld [vmem:[%s212 + $0x160] sm:$0xff]
        %v273 = vld [vmem:[%s212 + $0x168] sm:$0xff]
        %v274 = vld [vmem:[%s212 + $0x170] sm:$0xff]
        %v275 = vld [vmem:[%s212 + $0x178] sm:$0xff]
        %v276 = vld [vmem:[%s212 + $0x180] sm:$0xff]
        %v277 = vld [vmem:[%s218] sm:$0xff]
        %v278 = vld [vmem:[%s218 + $0x8] sm:$0xff]
        %v279 = vld [vmem:[%s218 + $0x10] sm:$0xff]
        %v280 = vld [vmem:[%s218 + $0x18] sm:$0xff]
        %v281 = vld [vmem:[%s218 + $0x20] sm:$0xff]
        %v282 = vld [vmem:[%s218 + $0x28] sm:$0xff]
        %v283 = vld [vmem:[%s218 + $0x30] sm:$0xff]
        %v284 = vld [vmem:[%s218 + $0x38] sm:$0xff]
        %v285 = vld [vmem:[%s218 + $0x40] sm:$0xff]
        %v286 = vld [vmem:[%s218 + $0x48] sm:$0xff]
        %v287 = vld [vmem:[%s218 + $0x50] sm:$0xff]
        %v288 = vld [vmem:[%s218 + $0x58] sm:$0xff]
        %v289 = vld [vmem:[%s218 + $0x60] sm:$0xff]
        %v290 = vld [vmem:[%s218 + $0x68] sm:$0xff]
        %v291 = vld [vmem:[%s218 + $0x70] sm:$0xff]
        %v292 = vld [vmem:[%s218 + $0x78] sm:$0xff]
        %v293 = vld [vmem:[%s218 + $0x80] sm:$0xff]
        %v294 = vld [vmem:[%s218 + $0x88] sm:$0xff]
        %v295 = vld [vmem:[%s218 + $0x90] sm:$0xff]
        %v296 = vld [vmem:[%s218 + $0x98] sm:$0xff]
        %v297 = vld [vmem:[%s218 + $0xa0] sm:$0xff]
        %v298 = vld [vmem:[%s218 + $0xa8] sm:$0xff]
        %v299 = vld [vmem:[%s218 + $0xb0] sm:$0xff]
        %v300 = vld [vmem:[%s218 + $0xb8] sm:$0xff]
        %v301 = vld [vmem:[%s218 + $0xc0] sm:$0xff]
        %v302 = vld [vmem:[%s218 + $0xc8] sm:$0xff]
        %v303 = vld [vmem:[%s218 + $0xd0] sm:$0xff]
        %v304 = vld [vmem:[%s218 + $0xd8] sm:$0xff]
        %v305 = vld [vmem:[%s218 + $0xe0] sm:$0xff]
        %v306 = vld [vmem:[%s218 + $0xe8] sm:$0xff]
        %v307 = vld [vmem:[%s218 + $0xf0] sm:$0xff]
        %v308 = vld [vmem:[%s218 + $0xf8] sm:$0xff]
        %v309 = vld [vmem:[%s218 + $0x100] sm:$0xff]
        %v310 = vld [vmem:[%s218 + $0x108] sm:$0xff]
        %v311 = vld [vmem:[%s218 + $0x110] sm:$0xff]
        %v312 = vld [vmem:[%s218 + $0x118] sm:$0xff]
        %v313 = vld [vmem:[%s218 + $0x120] sm:$0xff]
        %v314 = vld [vmem:[%s218 + $0x128] sm:$0xff]
        %v315 = vld [vmem:[%s218 + $0x130] sm:$0xff]
        %v316 = vld [vmem:[%s218 + $0x138] sm:$0xff]
        %v317 = vld [vmem:[%s218 + $0x140] sm:$0xff]
        %v318 = vld [vmem:[%s218 + $0x148] sm:$0xff]
        %v319 = vld [vmem:[%s218 + $0x150] sm:$0xff]
        %v320 = vld [vmem:[%s218 + $0x158] sm:$0xff]
        %v321 = vld [vmem:[%s218 + $0x160] sm:$0xff]
        %v322 = vld [vmem:[%s218 + $0x168] sm:$0xff]
        %v323 = vld [vmem:[%s218 + $0x170] sm:$0xff]
        %v324 = vld [vmem:[%s218 + $0x178] sm:$0xff]
        %v325 = vld [vmem:[%s218 + $0x180] sm:$0xff]
        %327 = vset.pattern.permute.xlu0 0
        %328 = vperm.xlu0 %327, %v228
        %v329 = vpop.permute.xlu0 %328
        %332 = vset.pattern.permute.xlu0 0
        %333 = vperm.xlu0 %332, %v229
        %v334 = vpop.permute.xlu0 %333
        %337 = vset.pattern.permute.xlu0 0
        %338 = vperm.xlu0 %337, %v230
        %v339 = vpop.permute.xlu0 %338
        %342 = vset.pattern.permute.xlu0 0
        %343 = vperm.xlu0 %342, %v231
        %v344 = vpop.permute.xlu0 %343
        %347 = vset.pattern.permute.xlu0 0
        %348 = vperm.xlu0 %347, %v232
        %v349 = vpop.permute.xlu0 %348
        %352 = vset.pattern.permute.xlu0 0
        %353 = vperm.xlu0 %352, %v233
        %v354 = vpop.permute.xlu0 %353
        %357 = vset.pattern.permute.xlu0 0
        %358 = vperm.xlu0 %357, %v234
        %v359 = vpop.permute.xlu0 %358
        %362 = vset.pattern.permute.xlu0 0
        %363 = vperm.xlu0 %362, %v235
        %v364 = vpop.permute.xlu0 %363
        %367 = vset.pattern.permute.xlu0 0
        %368 = vperm.xlu0 %367, %v236
        %v369 = vpop.permute.xlu0 %368
        %372 = vset.pattern.permute.xlu0 0
        %373 = vperm.xlu0 %372, %v237
        %v374 = vpop.permute.xlu0 %373
        %377 = vset.pattern.permute.xlu0 0
        %378 = vperm.xlu0 %377, %v238
        %v379 = vpop.permute.xlu0 %378
        %382 = vset.pattern.permute.xlu0 0
        %383 = vperm.xlu0 %382, %v239
        %v384 = vpop.permute.xlu0 %383
        %387 = vset.pattern.permute.xlu0 0
        %388 = vperm.xlu0 %387, %v240
        %v389 = vpop.permute.xlu0 %388
        %392 = vset.pattern.permute.xlu0 0
        %393 = vperm.xlu0 %392, %v241
        %v394 = vpop.permute.xlu0 %393
        %397 = vset.pattern.permute.xlu0 0
        %398 = vperm.xlu0 %397, %v242
        %v399 = vpop.permute.xlu0 %398
        %402 = vset.pattern.permute.xlu0 0
        %403 = vperm.xlu0 %402, %v243
        %v404 = vpop.permute.xlu0 %403
        %407 = vset.pattern.permute.xlu0 0
        %408 = vperm.xlu0 %407, %v244
        %v409 = vpop.permute.xlu0 %408
        %412 = vset.pattern.permute.xlu0 0
        %413 = vperm.xlu0 %412, %v245
        %v414 = vpop.permute.xlu0 %413
        %417 = vset.pattern.permute.xlu0 0
        %418 = vperm.xlu0 %417, %v246
        %v419 = vpop.permute.xlu0 %418
        %422 = vset.pattern.permute.xlu0 0
        %423 = vperm.xlu0 %422, %v247
        %v424 = vpop.permute.xlu0 %423
        %427 = vset.pattern.permute.xlu0 0
        %428 = vperm.xlu0 %427, %v248
        %v429 = vpop.permute.xlu0 %428
        %432 = vset.pattern.permute.xlu0 0
        %433 = vperm.xlu0 %432, %v249
        %v434 = vpop.permute.xlu0 %433
        %437 = vset.pattern.permute.xlu0 0
        %438 = vperm.xlu0 %437, %v250
        %v439 = vpop.permute.xlu0 %438
        %442 = vset.pattern.permute.xlu0 0
        %443 = vperm.xlu0 %442, %v251
        %v444 = vpop.permute.xlu0 %443
        %447 = vset.pattern.permute.xlu0 0
        %448 = vperm.xlu0 %447, %v252
        %v449 = vpop.permute.xlu0 %448
        %452 = vset.pattern.permute.xlu0 0
        %453 = vperm.xlu0 %452, %v253
        %v454 = vpop.permute.xlu0 %453
        %457 = vset.pattern.permute.xlu0 0
        %458 = vperm.xlu0 %457, %v254
        %v459 = vpop.permute.xlu0 %458
        %462 = vset.pattern.permute.xlu0 0
        %463 = vperm.xlu0 %462, %v255
        %v464 = vpop.permute.xlu0 %463
        %467 = vset.pattern.permute.xlu0 0
        %468 = vperm.xlu0 %467, %v256
        %v469 = vpop.permute.xlu0 %468
        %472 = vset.pattern.permute.xlu0 0
        %473 = vperm.xlu0 %472, %v257
        %v474 = vpop.permute.xlu0 %473
        %477 = vset.pattern.permute.xlu0 0
        %478 = vperm.xlu0 %477, %v258
        %v479 = vpop.permute.xlu0 %478
        %482 = vset.pattern.permute.xlu0 0
        %483 = vperm.xlu0 %482, %v259
        %v484 = vpop.permute.xlu0 %483
        %487 = vset.pattern.permute.xlu0 0
        %488 = vperm.xlu0 %487, %v260
        %v489 = vpop.permute.xlu0 %488
        %492 = vset.pattern.permute.xlu0 0
        %493 = vperm.xlu0 %492, %v261
        %v494 = vpop.permute.xlu0 %493
        %497 = vset.pattern.permute.xlu0 0
        %498 = vperm.xlu0 %497, %v262
        %v499 = vpop.permute.xlu0 %498
        %502 = vset.pattern.permute.xlu0 0
        %503 = vperm.xlu0 %502, %v263
        %v504 = vpop.permute.xlu0 %503
        %507 = vset.pattern.permute.xlu0 0
        %508 = vperm.xlu0 %507, %v264
        %v509 = vpop.permute.xlu0 %508
        %512 = vset.pattern.permute.xlu0 0
        %513 = vperm.xlu0 %512, %v265
        %v514 = vpop.permute.xlu0 %513
        %517 = vset.pattern.permute.xlu0 0
        %518 = vperm.xlu0 %517, %v266
        %v519 = vpop.permute.xlu0 %518
        %522 = vset.pattern.permute.xlu0 0
        %523 = vperm.xlu0 %522, %v267
        %v524 = vpop.permute.xlu0 %523
        %527 = vset.pattern.permute.xlu0 0
        %528 = vperm.xlu0 %527, %v268
        %v529 = vpop.permute.xlu0 %528
        %532 = vset.pattern.permute.xlu0 0
        %533 = vperm.xlu0 %532, %v269
        %v534 = vpop.permute.xlu0 %533
        %537 = vset.pattern.permute.xlu0 0
        %538 = vperm.xlu0 %537, %v270
        %v539 = vpop.permute.xlu0 %538
        %542 = vset.pattern.permute.xlu0 0
        %543 = vperm.xlu0 %542, %v271
        %v544 = vpop.permute.xlu0 %543
        %547 = vset.pattern.permute.xlu0 0
        %548 = vperm.xlu0 %547, %v272
        %v549 = vpop.permute.xlu0 %548
        %552 = vset.pattern.permute.xlu0 0
        %553 = vperm.xlu0 %552, %v273
        %v554 = vpop.permute.xlu0 %553
        %557 = vset.pattern.permute.xlu0 0
        %558 = vperm.xlu0 %557, %v274
        %v559 = vpop.permute.xlu0 %558
        %562 = vset.pattern.permute.xlu0 0
        %563 = vperm.xlu0 %562, %v275
        %v564 = vpop.permute.xlu0 %563
        %567 = vset.pattern.permute.xlu0 0
        %568 = vperm.xlu0 %567, %v276
        %v569 = vpop.permute.xlu0 %568
        %v571 = vmul.f32 %v329, %v277
        %v572 = vmul.f32 %v334, %v278
        %v573 = vmul.f32 %v339, %v279
        %v574 = vmul.f32 %v344, %v280
        %v575 = vmul.f32 %v349, %v281
        %v576 = vmul.f32 %v354, %v282
        %v577 = vmul.f32 %v359, %v283
        %v578 = vmul.f32 %v364, %v284
        %v579 = vmul.f32 %v369, %v285
        %v580 = vmul.f32 %v374, %v286
        %v581 = vmul.f32 %v379, %v287
        %v582 = vmul.f32 %v384, %v288
        %v583 = vmul.f32 %v389, %v289
        %v584 = vmul.f32 %v394, %v290
        %v585 = vmul.f32 %v399, %v291
        %v586 = vmul.f32 %v404, %v292
        %v587 = vmul.f32 %v409, %v293
        %v588 = vmul.f32 %v414, %v294
        %v589 = vmul.f32 %v419, %v295
        %v590 = vmul.f32 %v424, %v296
        %v591 = vmul.f32 %v429, %v297
        %v592 = vmul.f32 %v434, %v298
        %v593 = vmul.f32 %v439, %v299
        %v594 = vmul.f32 %v444, %v300
        %v595 = vmul.f32 %v449, %v301
        %v596 = vmul.f32 %v454, %v302
        %v597 = vmul.f32 %v459, %v303
        %v598 = vmul.f32 %v464, %v304
        %v599 = vmul.f32 %v469, %v305
        %v600 = vmul.f32 %v474, %v306
        %v601 = vmul.f32 %v479, %v307
        %v602 = vmul.f32 %v484, %v308
        %v603 = vmul.f32 %v489, %v309
        %v604 = vmul.f32 %v494, %v310
        %v605 = vmul.f32 %v499, %v311
        %v606 = vmul.f32 %v504, %v312
        %v607 = vmul.f32 %v509, %v313
        %v608 = vmul.f32 %v514, %v314
        %v609 = vmul.f32 %v519, %v315
        %v610 = vmul.f32 %v524, %v316
        %v611 = vmul.f32 %v529, %v317
        %v612 = vmul.f32 %v534, %v318
        %v613 = vmul.f32 %v539, %v319
        %v614 = vmul.f32 %v544, %v320
        %v615 = vmul.f32 %v549, %v321
        %v616 = vmul.f32 %v554, %v322
        %v617 = vmul.f32 %v559, %v323
        %v618 = vmul.f32 %v564, %v324
        %v619 = vmul.f32 %v569, %v325
        %620 = vset.pattern.permute.xlu0 1
        %621 = vperm.xlu0 %620, %v228
        %v622 = vpop.permute.xlu0 %621
        %624 = vset.pattern.permute.xlu0 1
        %625 = vperm.xlu0 %624, %v229
        %v626 = vpop.permute.xlu0 %625
        %628 = vset.pattern.permute.xlu0 1
        %629 = vperm.xlu0 %628, %v230
        %v630 = vpop.permute.xlu0 %629
        %632 = vset.pattern.permute.xlu0 1
        %633 = vperm.xlu0 %632, %v231
        %v634 = vpop.permute.xlu0 %633
        %636 = vset.pattern.permute.xlu0 1
        %637 = vperm.xlu0 %636, %v232
        %v638 = vpop.permute.xlu0 %637
        %640 = vset.pattern.permute.xlu0 1
        %641 = vperm.xlu0 %640, %v233
        %v642 = vpop.permute.xlu0 %641
        %644 = vset.pattern.permute.xlu0 1
        %645 = vperm.xlu0 %644, %v234
        %v646 = vpop.permute.xlu0 %645
        %648 = vset.pattern.permute.xlu0 1
        %649 = vperm.xlu0 %648, %v235
        %v650 = vpop.permute.xlu0 %649
        %652 = vset.pattern.permute.xlu0 1
        %653 = vperm.xlu0 %652, %v236
        %v654 = vpop.permute.xlu0 %653
        %656 = vset.pattern.permute.xlu0 1
        %657 = vperm.xlu0 %656, %v237
        %v658 = vpop.permute.xlu0 %657
        %660 = vset.pattern.permute.xlu0 1
        %661 = vperm.xlu0 %660, %v238
        %v662 = vpop.permute.xlu0 %661
        %664 = vset.pattern.permute.xlu0 1
        %665 = vperm.xlu0 %664, %v239
        %v666 = vpop.permute.xlu0 %665
        %668 = vset.pattern.permute.xlu0 1
        %669 = vperm.xlu0 %668, %v240
        %v670 = vpop.permute.xlu0 %669
        %672 = vset.pattern.permute.xlu0 1
        %673 = vperm.xlu0 %672, %v241
        %v674 = vpop.permute.xlu0 %673
        %676 = vset.pattern.permute.xlu0 1
        %677 = vperm.xlu0 %676, %v242
        %v678 = vpop.permute.xlu0 %677
        %680 = vset.pattern.permute.xlu0 1
        %681 = vperm.xlu0 %680, %v243
        %v682 = vpop.permute.xlu0 %681
        %684 = vset.pattern.permute.xlu0 1
        %685 = vperm.xlu0 %684, %v244
        %v686 = vpop.permute.xlu0 %685
        %688 = vset.pattern.permute.xlu0 1
        %689 = vperm.xlu0 %688, %v245
        %v690 = vpop.permute.xlu0 %689
        %692 = vset.pattern.permute.xlu0 1
        %693 = vperm.xlu0 %692, %v246
        %v694 = vpop.permute.xlu0 %693
        %696 = vset.pattern.permute.xlu0 1
        %697 = vperm.xlu0 %696, %v247
        %v698 = vpop.permute.xlu0 %697
        %700 = vset.pattern.permute.xlu0 1
        %701 = vperm.xlu0 %700, %v248
        %v702 = vpop.permute.xlu0 %701
        %704 = vset.pattern.permute.xlu0 1
        %705 = vperm.xlu0 %704, %v249
        %v706 = vpop.permute.xlu0 %705
        %708 = vset.pattern.permute.xlu0 1
        %709 = vperm.xlu0 %708, %v250
        %v710 = vpop.permute.xlu0 %709
        %712 = vset.pattern.permute.xlu0 1
        %713 = vperm.xlu0 %712, %v251
        %v714 = vpop.permute.xlu0 %713
        %716 = vset.pattern.permute.xlu0 1
        %717 = vperm.xlu0 %716, %v252
        %v718 = vpop.permute.xlu0 %717
        %720 = vset.pattern.permute.xlu0 1
        %721 = vperm.xlu0 %720, %v253
        %v722 = vpop.permute.xlu0 %721
        %724 = vset.pattern.permute.xlu0 1
        %725 = vperm.xlu0 %724, %v254
        %v726 = vpop.permute.xlu0 %725
        %728 = vset.pattern.permute.xlu0 1
        %729 = vperm.xlu0 %728, %v255
        %v730 = vpop.permute.xlu0 %729
        %732 = vset.pattern.permute.xlu0 1
        %733 = vperm.xlu0 %732, %v256
        %v734 = vpop.permute.xlu0 %733
        %736 = vset.pattern.permute.xlu0 1
        %737 = vperm.xlu0 %736, %v257
        %v738 = vpop.permute.xlu0 %737
        %740 = vset.pattern.permute.xlu0 1
        %741 = vperm.xlu0 %740, %v258
        %v742 = vpop.permute.xlu0 %741
        %744 = vset.pattern.permute.xlu0 1
        %745 = vperm.xlu0 %744, %v259
        %v746 = vpop.permute.xlu0 %745
        %748 = vset.pattern.permute.xlu0 1
        %749 = vperm.xlu0 %748, %v260
        %v750 = vpop.permute.xlu0 %749
        %752 = vset.pattern.permute.xlu0 1
        %753 = vperm.xlu0 %752, %v261
        %v754 = vpop.permute.xlu0 %753
        %756 = vset.pattern.permute.xlu0 1
        %757 = vperm.xlu0 %756, %v262
        %v758 = vpop.permute.xlu0 %757
        %760 = vset.pattern.permute.xlu0 1
        %761 = vperm.xlu0 %760, %v263
        %v762 = vpop.permute.xlu0 %761
        %764 = vset.pattern.permute.xlu0 1
        %765 = vperm.xlu0 %764, %v264
        %v766 = vpop.permute.xlu0 %765
        %768 = vset.pattern.permute.xlu0 1
        %769 = vperm.xlu0 %768, %v265
        %v770 = vpop.permute.xlu0 %769
        %772 = vset.pattern.permute.xlu0 1
        %773 = vperm.xlu0 %772, %v266
        %v774 = vpop.permute.xlu0 %773
        %776 = vset.pattern.permute.xlu0 1
        %777 = vperm.xlu0 %776, %v267
        %v778 = vpop.permute.xlu0 %777
        %780 = vset.pattern.permute.xlu0 1
        %781 = vperm.xlu0 %780, %v268
        %v782 = vpop.permute.xlu0 %781
        %784 = vset.pattern.permute.xlu0 1
        %785 = vperm.xlu0 %784, %v269
        %v786 = vpop.permute.xlu0 %785
        %788 = vset.pattern.permute.xlu0 1
        %789 = vperm.xlu0 %788, %v270
        %v790 = vpop.permute.xlu0 %789
        %792 = vset.pattern.permute.xlu0 1
        %793 = vperm.xlu0 %792, %v271
        %v794 = vpop.permute.xlu0 %793
        %796 = vset.pattern.permute.xlu0 1
        %797 = vperm.xlu0 %796, %v272
        %v798 = vpop.permute.xlu0 %797
        %800 = vset.pattern.permute.xlu0 1
        %801 = vperm.xlu0 %800, %v273
        %v802 = vpop.permute.xlu0 %801
        %804 = vset.pattern.permute.xlu0 1
        %805 = vperm.xlu0 %804, %v274
        %v806 = vpop.permute.xlu0 %805
        %808 = vset.pattern.permute.xlu0 1
        %809 = vperm.xlu0 %808, %v275
        %v810 = vpop.permute.xlu0 %809
        %812 = vset.pattern.permute.xlu0 1
        %813 = vperm.xlu0 %812, %v276
        %v814 = vpop.permute.xlu0 %813
        %v816 = vmul.f32 %v622, %v277
        %v817 = vmul.f32 %v626, %v278
        %v818 = vmul.f32 %v630, %v279
        %v819 = vmul.f32 %v634, %v280
        %v820 = vmul.f32 %v638, %v281
        %v821 = vmul.f32 %v642, %v282
        %v822 = vmul.f32 %v646, %v283
        %v823 = vmul.f32 %v650, %v284
        %v824 = vmul.f32 %v654, %v285
        %v825 = vmul.f32 %v658, %v286
        %v826 = vmul.f32 %v662, %v287
        %v827 = vmul.f32 %v666, %v288
        %v828 = vmul.f32 %v670, %v289
        %v829 = vmul.f32 %v674, %v290
        %v830 = vmul.f32 %v678, %v291
        %v831 = vmul.f32 %v682, %v292
        %v832 = vmul.f32 %v686, %v293
        %v833 = vmul.f32 %v690, %v294
        %v834 = vmul.f32 %v694, %v295
        %v835 = vmul.f32 %v698, %v296
        %v836 = vmul.f32 %v702, %v297
        %v837 = vmul.f32 %v706, %v298
        %v838 = vmul.f32 %v710, %v299
        %v839 = vmul.f32 %v714, %v300
        %v840 = vmul.f32 %v718, %v301
        %v841 = vmul.f32 %v722, %v302
        %v842 = vmul.f32 %v726, %v303
        %v843 = vmul.f32 %v730, %v304
        %v844 = vmul.f32 %v734, %v305
        %v845 = vmul.f32 %v738, %v306
        %v846 = vmul.f32 %v742, %v307
        %v847 = vmul.f32 %v746, %v308
        %v848 = vmul.f32 %v750, %v309
        %v849 = vmul.f32 %v754, %v310
        %v850 = vmul.f32 %v758, %v311
        %v851 = vmul.f32 %v762, %v312
        %v852 = vmul.f32 %v766, %v313
        %v853 = vmul.f32 %v770, %v314
        %v854 = vmul.f32 %v774, %v315
        %v855 = vmul.f32 %v778, %v316
        %v856 = vmul.f32 %v782, %v317
        %v857 = vmul.f32 %v786, %v318
        %v858 = vmul.f32 %v790, %v319
        %v859 = vmul.f32 %v794, %v320
        %v860 = vmul.f32 %v798, %v321
        %v861 = vmul.f32 %v802, %v322
        %v862 = vmul.f32 %v806, %v323
        %v863 = vmul.f32 %v810, %v324
        %v864 = vmul.f32 %v814, %v325
        %865 = vset.pattern.permute.xlu0 2
        %866 = vperm.xlu0 %865, %v228
        %v867 = vpop.permute.xlu0 %866
        %869 = vset.pattern.permute.xlu0 2
        %870 = vperm.xlu0 %869, %v229
        %v871 = vpop.permute.xlu0 %870
        %873 = vset.pattern.permute.xlu0 2
        %874 = vperm.xlu0 %873, %v230
        %v875 = vpop.permute.xlu0 %874
        %877 = vset.pattern.permute.xlu0 2
        %878 = vperm.xlu0 %877, %v231
        %v879 = vpop.permute.xlu0 %878
        %881 = vset.pattern.permute.xlu0 2
        %882 = vperm.xlu0 %881, %v232
        %v883 = vpop.permute.xlu0 %882
        %885 = vset.pattern.permute.xlu0 2
        %886 = vperm.xlu0 %885, %v233
        %v887 = vpop.permute.xlu0 %886
        %889 = vset.pattern.permute.xlu0 2
        %890 = vperm.xlu0 %889, %v234
        %v891 = vpop.permute.xlu0 %890
        %893 = vset.pattern.permute.xlu0 2
        %894 = vperm.xlu0 %893, %v235
        %v895 = vpop.permute.xlu0 %894
        %897 = vset.pattern.permute.xlu0 2
        %898 = vperm.xlu0 %897, %v236
        %v899 = vpop.permute.xlu0 %898
        %901 = vset.pattern.permute.xlu0 2
        %902 = vperm.xlu0 %901, %v237
        %v903 = vpop.permute.xlu0 %902
        %905 = vset.pattern.permute.xlu0 2
        %906 = vperm.xlu0 %905, %v238
        %v907 = vpop.permute.xlu0 %906
        %909 = vset.pattern.permute.xlu0 2
        %910 = vperm.xlu0 %909, %v239
        %v911 = vpop.permute.xlu0 %910
        %913 = vset.pattern.permute.xlu0 2
        %914 = vperm.xlu0 %913, %v240
        %v915 = vpop.permute.xlu0 %914
        %917 = vset.pattern.permute.xlu0 2
        %918 = vperm.xlu0 %917, %v241
        %v919 = vpop.permute.xlu0 %918
        %921 = vset.pattern.permute.xlu0 2
        %922 = vperm.xlu0 %921, %v242
        %v923 = vpop.permute.xlu0 %922
        %925 = vset.pattern.permute.xlu0 2
        %926 = vperm.xlu0 %925, %v243
        %v927 = vpop.permute.xlu0 %926
        %929 = vset.pattern.permute.xlu0 2
        %930 = vperm.xlu0 %929, %v244
        %v931 = vpop.permute.xlu0 %930
        %933 = vset.pattern.permute.xlu0 2
        %934 = vperm.xlu0 %933, %v245
        %v935 = vpop.permute.xlu0 %934
        %937 = vset.pattern.permute.xlu0 2
        %938 = vperm.xlu0 %937, %v246
        %v939 = vpop.permute.xlu0 %938
        %941 = vset.pattern.permute.xlu0 2
        %942 = vperm.xlu0 %941, %v247
        %v943 = vpop.permute.xlu0 %942
        %945 = vset.pattern.permute.xlu0 2
        %946 = vperm.xlu0 %945, %v248
        %v947 = vpop.permute.xlu0 %946
        %949 = vset.pattern.permute.xlu0 2
        %950 = vperm.xlu0 %949, %v249
        %v951 = vpop.permute.xlu0 %950
        %953 = vset.pattern.permute.xlu0 2
        %954 = vperm.xlu0 %953, %v250
        %v955 = vpop.permute.xlu0 %954
        %957 = vset.pattern.permute.xlu0 2
        %958 = vperm.xlu0 %957, %v251
        %v959 = vpop.permute.xlu0 %958
        %961 = vset.pattern.permute.xlu0 2
        %962 = vperm.xlu0 %961, %v252
        %v963 = vpop.permute.xlu0 %962
        %965 = vset.pattern.permute.xlu0 2
        %966 = vperm.xlu0 %965, %v253
        %v967 = vpop.permute.xlu0 %966
        %969 = vset.pattern.permute.xlu0 2
        %970 = vperm.xlu0 %969, %v254
        %v971 = vpop.permute.xlu0 %970
        %973 = vset.pattern.permute.xlu0 2
        %974 = vperm.xlu0 %973, %v255
        %v975 = vpop.permute.xlu0 %974
        %977 = vset.pattern.permute.xlu0 2
        %978 = vperm.xlu0 %977, %v256
        %v979 = vpop.permute.xlu0 %978
        %981 = vset.pattern.permute.xlu0 2
        %982 = vperm.xlu0 %981, %v257
        %v983 = vpop.permute.xlu0 %982
        %985 = vset.pattern.permute.xlu0 2
        %986 = vperm.xlu0 %985, %v258
        %v987 = vpop.permute.xlu0 %986
        %989 = vset.pattern.permute.xlu0 2
        %990 = vperm.xlu0 %989, %v259
        %v991 = vpop.permute.xlu0 %990
        %993 = vset.pattern.permute.xlu0 2
        %994 = vperm.xlu0 %993, %v260
        %v995 = vpop.permute.xlu0 %994
        %997 = vset.pattern.permute.xlu0 2
        %998 = vperm.xlu0 %997, %v261
        %v999 = vpop.permute.xlu0 %998
        %1001 = vset.pattern.permute.xlu0 2
        %1002 = vperm.xlu0 %1001, %v262
        %v1003 = vpop.permute.xlu0 %1002
        %1005 = vset.pattern.permute.xlu0 2
        %1006 = vperm.xlu0 %1005, %v263
        %v1007 = vpop.permute.xlu0 %1006
        %1009 = vset.pattern.permute.xlu0 2
        %1010 = vperm.xlu0 %1009, %v264
        %v1011 = vpop.permute.xlu0 %1010
        %1013 = vset.pattern.permute.xlu0 2
        %1014 = vperm.xlu0 %1013, %v265
        %v1015 = vpop.permute.xlu0 %1014
        %1017 = vset.pattern.permute.xlu0 2
        %1018 = vperm.xlu0 %1017, %v266
        %v1019 = vpop.permute.xlu0 %1018
        %1021 = vset.pattern.permute.xlu0 2
        %1022 = vperm.xlu0 %1021, %v267
        %v1023 = vpop.permute.xlu0 %1022
        %1025 = vset.pattern.permute.xlu0 2
        %1026 = vperm.xlu0 %1025, %v268
        %v1027 = vpop.permute.xlu0 %1026
        %1029 = vset.pattern.permute.xlu0 2
        %1030 = vperm.xlu0 %1029, %v269
        %v1031 = vpop.permute.xlu0 %1030
        %1033 = vset.pattern.permute.xlu0 2
        %1034 = vperm.xlu0 %1033, %v270
        %v1035 = vpop.permute.xlu0 %1034
        %1037 = vset.pattern.permute.xlu0 2
        %1038 = vperm.xlu0 %1037, %v271
        %v1039 = vpop.permute.xlu0 %1038
        %1041 = vset.pattern.permute.xlu0 2
        %1042 = vperm.xlu0 %1041, %v272
        %v1043 = vpop.permute.xlu0 %1042
        %1045 = vset.pattern.permute.xlu0 2
        %1046 = vperm.xlu0 %1045, %v273
        %v1047 = vpop.permute.xlu0 %1046
        %1049 = vset.pattern.permute.xlu0 2
        %1050 = vperm.xlu0 %1049, %v274
        %v1051 = vpop.permute.xlu0 %1050
        %1053 = vset.pattern.permute.xlu0 2
        %1054 = vperm.xlu0 %1053, %v275
        %v1055 = vpop.permute.xlu0 %1054
        %1057 = vset.pattern.permute.xlu0 2
        %1058 = vperm.xlu0 %1057, %v276
        %v1059 = vpop.permute.xlu0 %1058
        %v1061 = vmul.f32 %v867, %v277
        %v1062 = vmul.f32 %v871, %v278
        %v1063 = vmul.f32 %v875, %v279
        %v1064 = vmul.f32 %v879, %v280
        %v1065 = vmul.f32 %v883, %v281
        %v1066 = vmul.f32 %v887, %v282
        %v1067 = vmul.f32 %v891, %v283
        %v1068 = vmul.f32 %v895, %v284
        %v1069 = vmul.f32 %v899, %v285
        %v1070 = vmul.f32 %v903, %v286
        %v1071 = vmul.f32 %v907, %v287
        %v1072 = vmul.f32 %v911, %v288
        %v1073 = vmul.f32 %v915, %v289
        %v1074 = vmul.f32 %v919, %v290
        %v1075 = vmul.f32 %v923, %v291
        %v1076 = vmul.f32 %v927, %v292
        %v1077 = vmul.f32 %v931, %v293
        %v1078 = vmul.f32 %v935, %v294
        %v1079 = vmul.f32 %v939, %v295
        %v1080 = vmul.f32 %v943, %v296
        %v1081 = vmul.f32 %v947, %v297
        %v1082 = vmul.f32 %v951, %v298
        %v1083 = vmul.f32 %v955, %v299
        %v1084 = vmul.f32 %v959, %v300
        %v1085 = vmul.f32 %v963, %v301
        %v1086 = vmul.f32 %v967, %v302
        %v1087 = vmul.f32 %v971, %v303
        %v1088 = vmul.f32 %v975, %v304
        %v1089 = vmul.f32 %v979, %v305
        %v1090 = vmul.f32 %v983, %v306
        %v1091 = vmul.f32 %v987, %v307
        %v1092 = vmul.f32 %v991, %v308
        %v1093 = vmul.f32 %v995, %v309
        %v1094 = vmul.f32 %v999, %v310
        %v1095 = vmul.f32 %v1003, %v311
        %v1096 = vmul.f32 %v1007, %v312
        %v1097 = vmul.f32 %v1011, %v313
        %v1098 = vmul.f32 %v1015, %v314
        %v1099 = vmul.f32 %v1019, %v315
        %v1100 = vmul.f32 %v1023, %v316
        %v1101 = vmul.f32 %v1027, %v317
        %v1102 = vmul.f32 %v1031, %v318
        %v1103 = vmul.f32 %v1035, %v319
        %v1104 = vmul.f32 %v1039, %v320
        %v1105 = vmul.f32 %v1043, %v321
        %v1106 = vmul.f32 %v1047, %v322
        %v1107 = vmul.f32 %v1051, %v323
        %v1108 = vmul.f32 %v1055, %v324
        %v1109 = vmul.f32 %v1059, %v325
        %1110 = vset.pattern.permute.xlu0 3
        %1111 = vperm.xlu0 %1110, %v228
        %v1112 = vpop.permute.xlu0 %1111
        %1114 = vset.pattern.permute.xlu0 3
        %1115 = vperm.xlu0 %1114, %v229
        %v1116 = vpop.permute.xlu0 %1115
        %1118 = vset.pattern.permute.xlu0 3
        %1119 = vperm.xlu0 %1118, %v230
        %v1120 = vpop.permute.xlu0 %1119
        %1122 = vset.pattern.permute.xlu0 3
        %1123 = vperm.xlu0 %1122, %v231
        %v1124 = vpop.permute.xlu0 %1123
        %1126 = vset.pattern.permute.xlu0 3
        %1127 = vperm.xlu0 %1126, %v232
        %v1128 = vpop.permute.xlu0 %1127
        %1130 = vset.pattern.permute.xlu0 3
        %1131 = vperm.xlu0 %1130, %v233
        %v1132 = vpop.permute.xlu0 %1131
        %1134 = vset.pattern.permute.xlu0 3
        %1135 = vperm.xlu0 %1134, %v234
        %v1136 = vpop.permute.xlu0 %1135
        %1138 = vset.pattern.permute.xlu0 3
        %1139 = vperm.xlu0 %1138, %v235
        %v1140 = vpop.permute.xlu0 %1139
        %1142 = vset.pattern.permute.xlu0 3
        %1143 = vperm.xlu0 %1142, %v236
        %v1144 = vpop.permute.xlu0 %1143
        %1146 = vset.pattern.permute.xlu0 3
        %1147 = vperm.xlu0 %1146, %v237
        %v1148 = vpop.permute.xlu0 %1147
        %1150 = vset.pattern.permute.xlu0 3
        %1151 = vperm.xlu0 %1150, %v238
        %v1152 = vpop.permute.xlu0 %1151
        %1154 = vset.pattern.permute.xlu0 3
        %1155 = vperm.xlu0 %1154, %v239
        %v1156 = vpop.permute.xlu0 %1155
        %1158 = vset.pattern.permute.xlu0 3
        %1159 = vperm.xlu0 %1158, %v240
        %v1160 = vpop.permute.xlu0 %1159
        %1162 = vset.pattern.permute.xlu0 3
        %1163 = vperm.xlu0 %1162, %v241
        %v1164 = vpop.permute.xlu0 %1163
        %1166 = vset.pattern.permute.xlu0 3
        %1167 = vperm.xlu0 %1166, %v242
        %v1168 = vpop.permute.xlu0 %1167
        %1170 = vset.pattern.permute.xlu0 3
        %1171 = vperm.xlu0 %1170, %v243
        %v1172 = vpop.permute.xlu0 %1171
        %1174 = vset.pattern.permute.xlu0 3
        %1175 = vperm.xlu0 %1174, %v244
        %v1176 = vpop.permute.xlu0 %1175
        %1178 = vset.pattern.permute.xlu0 3
        %1179 = vperm.xlu0 %1178, %v245
        %v1180 = vpop.permute.xlu0 %1179
        %1182 = vset.pattern.permute.xlu0 3
        %1183 = vperm.xlu0 %1182, %v246
        %v1184 = vpop.permute.xlu0 %1183
        %1186 = vset.pattern.permute.xlu0 3
        %1187 = vperm.xlu0 %1186, %v247
        %v1188 = vpop.permute.xlu0 %1187
        %1190 = vset.pattern.permute.xlu0 3
        %1191 = vperm.xlu0 %1190, %v248
        %v1192 = vpop.permute.xlu0 %1191
        %1194 = vset.pattern.permute.xlu0 3
        %1195 = vperm.xlu0 %1194, %v249
        %v1196 = vpop.permute.xlu0 %1195
        %1198 = vset.pattern.permute.xlu0 3
        %1199 = vperm.xlu0 %1198, %v250
        %v1200 = vpop.permute.xlu0 %1199
        %1202 = vset.pattern.permute.xlu0 3
        %1203 = vperm.xlu0 %1202, %v251
        %v1204 = vpop.permute.xlu0 %1203
        %1206 = vset.pattern.permute.xlu0 3
        %1207 = vperm.xlu0 %1206, %v252
        %v1208 = vpop.permute.xlu0 %1207
        %1210 = vset.pattern.permute.xlu0 3
        %1211 = vperm.xlu0 %1210, %v253
        %v1212 = vpop.permute.xlu0 %1211
        %1214 = vset.pattern.permute.xlu0 3
        %1215 = vperm.xlu0 %1214, %v254
        %v1216 = vpop.permute.xlu0 %1215
        %1218 = vset.pattern.permute.xlu0 3
        %1219 = vperm.xlu0 %1218, %v255
        %v1220 = vpop.permute.xlu0 %1219
        %1222 = vset.pattern.permute.xlu0 3
        %1223 = vperm.xlu0 %1222, %v256
        %v1224 = vpop.permute.xlu0 %1223
        %1226 = vset.pattern.permute.xlu0 3
        %1227 = vperm.xlu0 %1226, %v257
        %v1228 = vpop.permute.xlu0 %1227
        %1230 = vset.pattern.permute.xlu0 3
        %1231 = vperm.xlu0 %1230, %v258
        %v1232 = vpop.permute.xlu0 %1231
        %1234 = vset.pattern.permute.xlu0 3
        %1235 = vperm.xlu0 %1234, %v259
        %v1236 = vpop.permute.xlu0 %1235
        %1238 = vset.pattern.permute.xlu0 3
        %1239 = vperm.xlu0 %1238, %v260
        %v1240 = vpop.permute.xlu0 %1239
        %1242 = vset.pattern.permute.xlu0 3
        %1243 = vperm.xlu0 %1242, %v261
        %v1244 = vpop.permute.xlu0 %1243
        %1246 = vset.pattern.permute.xlu0 3
        %1247 = vperm.xlu0 %1246, %v262
        %v1248 = vpop.permute.xlu0 %1247
        %1250 = vset.pattern.permute.xlu0 3
        %1251 = vperm.xlu0 %1250, %v263
        %v1252 = vpop.permute.xlu0 %1251
        %1254 = vset.pattern.permute.xlu0 3
        %1255 = vperm.xlu0 %1254, %v264
        %v1256 = vpop.permute.xlu0 %1255
        %1258 = vset.pattern.permute.xlu0 3
        %1259 = vperm.xlu0 %1258, %v265
        %v1260 = vpop.permute.xlu0 %1259
        %1262 = vset.pattern.permute.xlu0 3
        %1263 = vperm.xlu0 %1262, %v266
        %v1264 = vpop.permute.xlu0 %1263
        %1266 = vset.pattern.permute.xlu0 3
        %1267 = vperm.xlu0 %1266, %v267
        %v1268 = vpop.permute.xlu0 %1267
        %1270 = vset.pattern.permute.xlu0 3
        %1271 = vperm.xlu0 %1270, %v268
        %v1272 = vpop.permute.xlu0 %1271
        %1274 = vset.pattern.permute.xlu0 3
        %1275 = vperm.xlu0 %1274, %v269
        %v1276 = vpop.permute.xlu0 %1275
        %1278 = vset.pattern.permute.xlu0 3
        %1279 = vperm.xlu0 %1278, %v270
        %v1280 = vpop.permute.xlu0 %1279
        %1282 = vset.pattern.permute.xlu0 3
        %1283 = vperm.xlu0 %1282, %v271
        %v1284 = vpop.permute.xlu0 %1283
        %1286 = vset.pattern.permute.xlu0 3
        %1287 = vperm.xlu0 %1286, %v272
        %v1288 = vpop.permute.xlu0 %1287
        %1290 = vset.pattern.permute.xlu0 3
        %1291 = vperm.xlu0 %1290, %v273
        %v1292 = vpop.permute.xlu0 %1291
        %1294 = vset.pattern.permute.xlu0 3
        %1295 = vperm.xlu0 %1294, %v274
        %v1296 = vpop.permute.xlu0 %1295
        %1298 = vset.pattern.permute.xlu0 3
        %1299 = vperm.xlu0 %1298, %v275
        %v1300 = vpop.permute.xlu0 %1299
        %1302 = vset.pattern.permute.xlu0 3
        %1303 = vperm.xlu0 %1302, %v276
        %v1304 = vpop.permute.xlu0 %1303
        %v1306 = vmul.f32 %v1112, %v277
        %v1307 = vmul.f32 %v1116, %v278
        %v1308 = vmul.f32 %v1120, %v279
        %v1309 = vmul.f32 %v1124, %v280
        %v1310 = vmul.f32 %v1128, %v281
        %v1311 = vmul.f32 %v1132, %v282
        %v1312 = vmul.f32 %v1136, %v283
        %v1313 = vmul.f32 %v1140, %v284
        %v1314 = vmul.f32 %v1144, %v285
        %v1315 = vmul.f32 %v1148, %v286
        %v1316 = vmul.f32 %v1152, %v287
        %v1317 = vmul.f32 %v1156, %v288
        %v1318 = vmul.f32 %v1160, %v289
        %v1319 = vmul.f32 %v1164, %v290
        %v1320 = vmul.f32 %v1168, %v291
        %v1321 = vmul.f32 %v1172, %v292
        %v1322 = vmul.f32 %v1176, %v293
        %v1323 = vmul.f32 %v1180, %v294
        %v1324 = vmul.f32 %v1184, %v295
        %v1325 = vmul.f32 %v1188, %v296
        %v1326 = vmul.f32 %v1192, %v297
        %v1327 = vmul.f32 %v1196, %v298
        %v1328 = vmul.f32 %v1200, %v299
        %v1329 = vmul.f32 %v1204, %v300
        %v1330 = vmul.f32 %v1208, %v301
        %v1331 = vmul.f32 %v1212, %v302
        %v1332 = vmul.f32 %v1216, %v303
        %v1333 = vmul.f32 %v1220, %v304
        %v1334 = vmul.f32 %v1224, %v305
        %v1335 = vmul.f32 %v1228, %v306
        %v1336 = vmul.f32 %v1232, %v307
        %v1337 = vmul.f32 %v1236, %v308
        %v1338 = vmul.f32 %v1240, %v309
        %v1339 = vmul.f32 %v1244, %v310
        %v1340 = vmul.f32 %v1248, %v311
        %v1341 = vmul.f32 %v1252, %v312
        %v1342 = vmul.f32 %v1256, %v313
        %v1343 = vmul.f32 %v1260, %v314
        %v1344 = vmul.f32 %v1264, %v315
        %v1345 = vmul.f32 %v1268, %v316
        %v1346 = vmul.f32 %v1272, %v317
        %v1347 = vmul.f32 %v1276, %v318
        %v1348 = vmul.f32 %v1280, %v319
        %v1349 = vmul.f32 %v1284, %v320
        %v1350 = vmul.f32 %v1288, %v321
        %v1351 = vmul.f32 %v1292, %v322
        %v1352 = vmul.f32 %v1296, %v323
        %v1353 = vmul.f32 %v1300, %v324
        %v1354 = vmul.f32 %v1304, %v325
        %1355 = vset.pattern.permute.xlu0 4
        %1356 = vperm.xlu0 %1355, %v228
        %v1357 = vpop.permute.xlu0 %1356
        %1359 = vset.pattern.permute.xlu0 4
        %1360 = vperm.xlu0 %1359, %v229
        %v1361 = vpop.permute.xlu0 %1360
        %1363 = vset.pattern.permute.xlu0 4
        %1364 = vperm.xlu0 %1363, %v230
        %v1365 = vpop.permute.xlu0 %1364
        %1367 = vset.pattern.permute.xlu0 4
        %1368 = vperm.xlu0 %1367, %v231
        %v1369 = vpop.permute.xlu0 %1368
        %1371 = vset.pattern.permute.xlu0 4
        %1372 = vperm.xlu0 %1371, %v232
        %v1373 = vpop.permute.xlu0 %1372
        %1375 = vset.pattern.permute.xlu0 4
        %1376 = vperm.xlu0 %1375, %v233
        %v1377 = vpop.permute.xlu0 %1376
        %1379 = vset.pattern.permute.xlu0 4
        %1380 = vperm.xlu0 %1379, %v234
        %v1381 = vpop.permute.xlu0 %1380
        %1383 = vset.pattern.permute.xlu0 4
        %1384 = vperm.xlu0 %1383, %v235
        %v1385 = vpop.permute.xlu0 %1384
        %1387 = vset.pattern.permute.xlu0 4
        %1388 = vperm.xlu0 %1387, %v236
        %v1389 = vpop.permute.xlu0 %1388
        %1391 = vset.pattern.permute.xlu0 4
        %1392 = vperm.xlu0 %1391, %v237
        %v1393 = vpop.permute.xlu0 %1392
        %1395 = vset.pattern.permute.xlu0 4
        %1396 = vperm.xlu0 %1395, %v238
        %v1397 = vpop.permute.xlu0 %1396
        %1399 = vset.pattern.permute.xlu0 4
        %1400 = vperm.xlu0 %1399, %v239
        %v1401 = vpop.permute.xlu0 %1400
        %1403 = vset.pattern.permute.xlu0 4
        %1404 = vperm.xlu0 %1403, %v240
        %v1405 = vpop.permute.xlu0 %1404
        %1407 = vset.pattern.permute.xlu0 4
        %1408 = vperm.xlu0 %1407, %v241
        %v1409 = vpop.permute.xlu0 %1408
        %1411 = vset.pattern.permute.xlu0 4
        %1412 = vperm.xlu0 %1411, %v242
        %v1413 = vpop.permute.xlu0 %1412
        %1415 = vset.pattern.permute.xlu0 4
        %1416 = vperm.xlu0 %1415, %v243
        %v1417 = vpop.permute.xlu0 %1416
        %1419 = vset.pattern.permute.xlu0 4
        %1420 = vperm.xlu0 %1419, %v244
        %v1421 = vpop.permute.xlu0 %1420
        %1423 = vset.pattern.permute.xlu0 4
        %1424 = vperm.xlu0 %1423, %v245
        %v1425 = vpop.permute.xlu0 %1424
        %1427 = vset.pattern.permute.xlu0 4
        %1428 = vperm.xlu0 %1427, %v246
        %v1429 = vpop.permute.xlu0 %1428
        %1431 = vset.pattern.permute.xlu0 4
        %1432 = vperm.xlu0 %1431, %v247
        %v1433 = vpop.permute.xlu0 %1432
        %1435 = vset.pattern.permute.xlu0 4
        %1436 = vperm.xlu0 %1435, %v248
        %v1437 = vpop.permute.xlu0 %1436
        %1439 = vset.pattern.permute.xlu0 4
        %1440 = vperm.xlu0 %1439, %v249
        %v1441 = vpop.permute.xlu0 %1440
        %1443 = vset.pattern.permute.xlu0 4
        %1444 = vperm.xlu0 %1443, %v250
        %v1445 = vpop.permute.xlu0 %1444
        %1447 = vset.pattern.permute.xlu0 4
        %1448 = vperm.xlu0 %1447, %v251
        %v1449 = vpop.permute.xlu0 %1448
        %1451 = vset.pattern.permute.xlu0 4
        %1452 = vperm.xlu0 %1451, %v252
        %v1453 = vpop.permute.xlu0 %1452
        %1455 = vset.pattern.permute.xlu0 4
        %1456 = vperm.xlu0 %1455, %v253
        %v1457 = vpop.permute.xlu0 %1456
        %1459 = vset.pattern.permute.xlu0 4
        %1460 = vperm.xlu0 %1459, %v254
        %v1461 = vpop.permute.xlu0 %1460
        %1463 = vset.pattern.permute.xlu0 4
        %1464 = vperm.xlu0 %1463, %v255
        %v1465 = vpop.permute.xlu0 %1464
        %1467 = vset.pattern.permute.xlu0 4
        %1468 = vperm.xlu0 %1467, %v256
        %v1469 = vpop.permute.xlu0 %1468
        %1471 = vset.pattern.permute.xlu0 4
        %1472 = vperm.xlu0 %1471, %v257
        %v1473 = vpop.permute.xlu0 %1472
        %1475 = vset.pattern.permute.xlu0 4
        %1476 = vperm.xlu0 %1475, %v258
        %v1477 = vpop.permute.xlu0 %1476
        %1479 = vset.pattern.permute.xlu0 4
        %1480 = vperm.xlu0 %1479, %v259
        %v1481 = vpop.permute.xlu0 %1480
        %1483 = vset.pattern.permute.xlu0 4
        %1484 = vperm.xlu0 %1483, %v260
        %v1485 = vpop.permute.xlu0 %1484
        %1487 = vset.pattern.permute.xlu0 4
        %1488 = vperm.xlu0 %1487, %v261
        %v1489 = vpop.permute.xlu0 %1488
        %1491 = vset.pattern.permute.xlu0 4
        %1492 = vperm.xlu0 %1491, %v262
        %v1493 = vpop.permute.xlu0 %1492
        %1495 = vset.pattern.permute.xlu0 4
        %1496 = vperm.xlu0 %1495, %v263
        %v1497 = vpop.permute.xlu0 %1496
        %1499 = vset.pattern.permute.xlu0 4
        %1500 = vperm.xlu0 %1499, %v264
        %v1501 = vpop.permute.xlu0 %1500
        %1503 = vset.pattern.permute.xlu0 4
        %1504 = vperm.xlu0 %1503, %v265
        %v1505 = vpop.permute.xlu0 %1504
        %1507 = vset.pattern.permute.xlu0 4
        %1508 = vperm.xlu0 %1507, %v266
        %v1509 = vpop.permute.xlu0 %1508
        %1511 = vset.pattern.permute.xlu0 4
        %1512 = vperm.xlu0 %1511, %v267
        %v1513 = vpop.permute.xlu0 %1512
        %1515 = vset.pattern.permute.xlu0 4
        %1516 = vperm.xlu0 %1515, %v268
        %v1517 = vpop.permute.xlu0 %1516
        %1519 = vset.pattern.permute.xlu0 4
        %1520 = vperm.xlu0 %1519, %v269
        %v1521 = vpop.permute.xlu0 %1520
        %1523 = vset.pattern.permute.xlu0 4
        %1524 = vperm.xlu0 %1523, %v270
        %v1525 = vpop.permute.xlu0 %1524
        %1527 = vset.pattern.permute.xlu0 4
        %1528 = vperm.xlu0 %1527, %v271
        %v1529 = vpop.permute.xlu0 %1528
        %1531 = vset.pattern.permute.xlu0 4
        %1532 = vperm.xlu0 %1531, %v272
        %v1533 = vpop.permute.xlu0 %1532
        %1535 = vset.pattern.permute.xlu0 4
        %1536 = vperm.xlu0 %1535, %v273
        %v1537 = vpop.permute.xlu0 %1536
        %1539 = vset.pattern.permute.xlu0 4
        %1540 = vperm.xlu0 %1539, %v274
        %v1541 = vpop.permute.xlu0 %1540
        %1543 = vset.pattern.permute.xlu0 4
        %1544 = vperm.xlu0 %1543, %v275
        %v1545 = vpop.permute.xlu0 %1544
        %1547 = vset.pattern.permute.xlu0 4
        %1548 = vperm.xlu0 %1547, %v276
        %v1549 = vpop.permute.xlu0 %1548
        %v1551 = vmul.f32 %v1357, %v277
        %v1552 = vmul.f32 %v1361, %v278
        %v1553 = vmul.f32 %v1365, %v279
        %v1554 = vmul.f32 %v1369, %v280
        %v1555 = vmul.f32 %v1373, %v281
        %v1556 = vmul.f32 %v1377, %v282
        %v1557 = vmul.f32 %v1381, %v283
        %v1558 = vmul.f32 %v1385, %v284
        %v1559 = vmul.f32 %v1389, %v285
        %v1560 = vmul.f32 %v1393, %v286
        %v1561 = vmul.f32 %v1397, %v287
        %v1562 = vmul.f32 %v1401, %v288
        %v1563 = vmul.f32 %v1405, %v289
        %v1564 = vmul.f32 %v1409, %v290
        %v1565 = vmul.f32 %v1413, %v291
        %v1566 = vmul.f32 %v1417, %v292
        %v1567 = vmul.f32 %v1421, %v293
        %v1568 = vmul.f32 %v1425, %v294
        %v1569 = vmul.f32 %v1429, %v295
        %v1570 = vmul.f32 %v1433, %v296
        %v1571 = vmul.f32 %v1437, %v297
        %v1572 = vmul.f32 %v1441, %v298
        %v1573 = vmul.f32 %v1445, %v299
        %v1574 = vmul.f32 %v1449, %v300
        %v1575 = vmul.f32 %v1453, %v301
        %v1576 = vmul.f32 %v1457, %v302
        %v1577 = vmul.f32 %v1461, %v303
        %v1578 = vmul.f32 %v1465, %v304
        %v1579 = vmul.f32 %v1469, %v305
        %v1580 = vmul.f32 %v1473, %v306
        %v1581 = vmul.f32 %v1477, %v307
        %v1582 = vmul.f32 %v1481, %v308
        %v1583 = vmul.f32 %v1485, %v309
        %v1584 = vmul.f32 %v1489, %v310
        %v1585 = vmul.f32 %v1493, %v311
        %v1586 = vmul.f32 %v1497, %v312
        %v1587 = vmul.f32 %v1501, %v313
        %v1588 = vmul.f32 %v1505, %v314
        %v1589 = vmul.f32 %v1509, %v315
        %v1590 = vmul.f32 %v1513, %v316
        %v1591 = vmul.f32 %v1517, %v317
        %v1592 = vmul.f32 %v1521, %v318
        %v1593 = vmul.f32 %v1525, %v319
        %v1594 = vmul.f32 %v1529, %v320
        %v1595 = vmul.f32 %v1533, %v321
        %v1596 = vmul.f32 %v1537, %v322
        %v1597 = vmul.f32 %v1541, %v323
        %v1598 = vmul.f32 %v1545, %v324
        %v1599 = vmul.f32 %v1549, %v325
        %1600 = vset.pattern.permute.xlu0 5
        %1601 = vperm.xlu0 %1600, %v228
        %v1602 = vpop.permute.xlu0 %1601
        %1604 = vset.pattern.permute.xlu0 5
        %1605 = vperm.xlu0 %1604, %v229
        %v1606 = vpop.permute.xlu0 %1605
        %1608 = vset.pattern.permute.xlu0 5
        %1609 = vperm.xlu0 %1608, %v230
        %v1610 = vpop.permute.xlu0 %1609
        %1612 = vset.pattern.permute.xlu0 5
        %1613 = vperm.xlu0 %1612, %v231
        %v1614 = vpop.permute.xlu0 %1613
        %1616 = vset.pattern.permute.xlu0 5
        %1617 = vperm.xlu0 %1616, %v232
        %v1618 = vpop.permute.xlu0 %1617
        %1620 = vset.pattern.permute.xlu0 5
        %1621 = vperm.xlu0 %1620, %v233
        %v1622 = vpop.permute.xlu0 %1621
        %1624 = vset.pattern.permute.xlu0 5
        %1625 = vperm.xlu0 %1624, %v234
        %v1626 = vpop.permute.xlu0 %1625
        %1628 = vset.pattern.permute.xlu0 5
        %1629 = vperm.xlu0 %1628, %v235
        %v1630 = vpop.permute.xlu0 %1629
        %1632 = vset.pattern.permute.xlu0 5
        %1633 = vperm.xlu0 %1632, %v236
        %v1634 = vpop.permute.xlu0 %1633
        %1636 = vset.pattern.permute.xlu0 5
        %1637 = vperm.xlu0 %1636, %v237
        %v1638 = vpop.permute.xlu0 %1637
        %1640 = vset.pattern.permute.xlu0 5
        %1641 = vperm.xlu0 %1640, %v238
        %v1642 = vpop.permute.xlu0 %1641
        %1644 = vset.pattern.permute.xlu0 5
        %1645 = vperm.xlu0 %1644, %v239
        %v1646 = vpop.permute.xlu0 %1645
        %1648 = vset.pattern.permute.xlu0 5
        %1649 = vperm.xlu0 %1648, %v240
        %v1650 = vpop.permute.xlu0 %1649
        %1652 = vset.pattern.permute.xlu0 5
        %1653 = vperm.xlu0 %1652, %v241
        %v1654 = vpop.permute.xlu0 %1653
        %1656 = vset.pattern.permute.xlu0 5
        %1657 = vperm.xlu0 %1656, %v242
        %v1658 = vpop.permute.xlu0 %1657
        %1660 = vset.pattern.permute.xlu0 5
        %1661 = vperm.xlu0 %1660, %v243
        %v1662 = vpop.permute.xlu0 %1661
        %1664 = vset.pattern.permute.xlu0 5
        %1665 = vperm.xlu0 %1664, %v244
        %v1666 = vpop.permute.xlu0 %1665
        %1668 = vset.pattern.permute.xlu0 5
        %1669 = vperm.xlu0 %1668, %v245
        %v1670 = vpop.permute.xlu0 %1669
        %1672 = vset.pattern.permute.xlu0 5
        %1673 = vperm.xlu0 %1672, %v246
        %v1674 = vpop.permute.xlu0 %1673
        %1676 = vset.pattern.permute.xlu0 5
        %1677 = vperm.xlu0 %1676, %v247
        %v1678 = vpop.permute.xlu0 %1677
        %1680 = vset.pattern.permute.xlu0 5
        %1681 = vperm.xlu0 %1680, %v248
        %v1682 = vpop.permute.xlu0 %1681
        %1684 = vset.pattern.permute.xlu0 5
        %1685 = vperm.xlu0 %1684, %v249
        %v1686 = vpop.permute.xlu0 %1685
        %1688 = vset.pattern.permute.xlu0 5
        %1689 = vperm.xlu0 %1688, %v250
        %v1690 = vpop.permute.xlu0 %1689
        %1692 = vset.pattern.permute.xlu0 5
        %1693 = vperm.xlu0 %1692, %v251
        %v1694 = vpop.permute.xlu0 %1693
        %1696 = vset.pattern.permute.xlu0 5
        %1697 = vperm.xlu0 %1696, %v252
        %v1698 = vpop.permute.xlu0 %1697
        %1700 = vset.pattern.permute.xlu0 5
        %1701 = vperm.xlu0 %1700, %v253
        %v1702 = vpop.permute.xlu0 %1701
        %1704 = vset.pattern.permute.xlu0 5
        %1705 = vperm.xlu0 %1704, %v254
        %v1706 = vpop.permute.xlu0 %1705
        %1708 = vset.pattern.permute.xlu0 5
        %1709 = vperm.xlu0 %1708, %v255
        %v1710 = vpop.permute.xlu0 %1709
        %1712 = vset.pattern.permute.xlu0 5
        %1713 = vperm.xlu0 %1712, %v256
        %v1714 = vpop.permute.xlu0 %1713
        %1716 = vset.pattern.permute.xlu0 5
        %1717 = vperm.xlu0 %1716, %v257
        %v1718 = vpop.permute.xlu0 %1717
        %1720 = vset.pattern.permute.xlu0 5
        %1721 = vperm.xlu0 %1720, %v258
        %v1722 = vpop.permute.xlu0 %1721
        %1724 = vset.pattern.permute.xlu0 5
        %1725 = vperm.xlu0 %1724, %v259
        %v1726 = vpop.permute.xlu0 %1725
        %1728 = vset.pattern.permute.xlu0 5
        %1729 = vperm.xlu0 %1728, %v260
        %v1730 = vpop.permute.xlu0 %1729
        %1732 = vset.pattern.permute.xlu0 5
        %1733 = vperm.xlu0 %1732, %v261
        %v1734 = vpop.permute.xlu0 %1733
        %1736 = vset.pattern.permute.xlu0 5
        %1737 = vperm.xlu0 %1736, %v262
        %v1738 = vpop.permute.xlu0 %1737
        %1740 = vset.pattern.permute.xlu0 5
        %1741 = vperm.xlu0 %1740, %v263
        %v1742 = vpop.permute.xlu0 %1741
        %1744 = vset.pattern.permute.xlu0 5
        %1745 = vperm.xlu0 %1744, %v264
        %v1746 = vpop.permute.xlu0 %1745
        %1748 = vset.pattern.permute.xlu0 5
        %1749 = vperm.xlu0 %1748, %v265
        %v1750 = vpop.permute.xlu0 %1749
        %1752 = vset.pattern.permute.xlu0 5
        %1753 = vperm.xlu0 %1752, %v266
        %v1754 = vpop.permute.xlu0 %1753
        %1756 = vset.pattern.permute.xlu0 5
        %1757 = vperm.xlu0 %1756, %v267
        %v1758 = vpop.permute.xlu0 %1757
        %1760 = vset.pattern.permute.xlu0 5
        %1761 = vperm.xlu0 %1760, %v268
        %v1762 = vpop.permute.xlu0 %1761
        %1764 = vset.pattern.permute.xlu0 5
        %1765 = vperm.xlu0 %1764, %v269
        %v1766 = vpop.permute.xlu0 %1765
        %1768 = vset.pattern.permute.xlu0 5
        %1769 = vperm.xlu0 %1768, %v270
        %v1770 = vpop.permute.xlu0 %1769
        %1772 = vset.pattern.permute.xlu0 5
        %1773 = vperm.xlu0 %1772, %v271
        %v1774 = vpop.permute.xlu0 %1773
        %1776 = vset.pattern.permute.xlu0 5
        %1777 = vperm.xlu0 %1776, %v272
        %v1778 = vpop.permute.xlu0 %1777
        %1780 = vset.pattern.permute.xlu0 5
        %1781 = vperm.xlu0 %1780, %v273
        %v1782 = vpop.permute.xlu0 %1781
        %1784 = vset.pattern.permute.xlu0 5
        %1785 = vperm.xlu0 %1784, %v274
        %v1786 = vpop.permute.xlu0 %1785
        %1788 = vset.pattern.permute.xlu0 5
        %1789 = vperm.xlu0 %1788, %v275
        %v1790 = vpop.permute.xlu0 %1789
        %1792 = vset.pattern.permute.xlu0 5
        %1793 = vperm.xlu0 %1792, %v276
        %v1794 = vpop.permute.xlu0 %1793
        %v1796 = vmul.f32 %v1602, %v277
        %v1797 = vmul.f32 %v1606, %v278
        %v1798 = vmul.f32 %v1610, %v279
        %v1799 = vmul.f32 %v1614, %v280
        %v1800 = vmul.f32 %v1618, %v281
        %v1801 = vmul.f32 %v1622, %v282
        %v1802 = vmul.f32 %v1626, %v283
        %v1803 = vmul.f32 %v1630, %v284
        %v1804 = vmul.f32 %v1634, %v285
        %v1805 = vmul.f32 %v1638, %v286
        %v1806 = vmul.f32 %v1642, %v287
        %v1807 = vmul.f32 %v1646, %v288
        %v1808 = vmul.f32 %v1650, %v289
        %v1809 = vmul.f32 %v1654, %v290
        %v1810 = vmul.f32 %v1658, %v291
        %v1811 = vmul.f32 %v1662, %v292
        %v1812 = vmul.f32 %v1666, %v293
        %v1813 = vmul.f32 %v1670, %v294
        %v1814 = vmul.f32 %v1674, %v295
        %v1815 = vmul.f32 %v1678, %v296
        %v1816 = vmul.f32 %v1682, %v297
        %v1817 = vmul.f32 %v1686, %v298
        %v1818 = vmul.f32 %v1690, %v299
        %v1819 = vmul.f32 %v1694, %v300
        %v1820 = vmul.f32 %v1698, %v301
        %v1821 = vmul.f32 %v1702, %v302
        %v1822 = vmul.f32 %v1706, %v303
        %v1823 = vmul.f32 %v1710, %v304
        %v1824 = vmul.f32 %v1714, %v305
        %v1825 = vmul.f32 %v1718, %v306
        %v1826 = vmul.f32 %v1722, %v307
        %v1827 = vmul.f32 %v1726, %v308
        %v1828 = vmul.f32 %v1730, %v309
        %v1829 = vmul.f32 %v1734, %v310
        %v1830 = vmul.f32 %v1738, %v311
        %v1831 = vmul.f32 %v1742, %v312
        %v1832 = vmul.f32 %v1746, %v313
        %v1833 = vmul.f32 %v1750, %v314
        %v1834 = vmul.f32 %v1754, %v315
        %v1835 = vmul.f32 %v1758, %v316
        %v1836 = vmul.f32 %v1762, %v317
        %v1837 = vmul.f32 %v1766, %v318
        %v1838 = vmul.f32 %v1770, %v319
        %v1839 = vmul.f32 %v1774, %v320
        %v1840 = vmul.f32 %v1778, %v321
        %v1841 = vmul.f32 %v1782, %v322
        %v1842 = vmul.f32 %v1786, %v323
        %v1843 = vmul.f32 %v1790, %v324
        %v1844 = vmul.f32 %v1794, %v325
        %1845 = vset.pattern.permute.xlu0 6
        %1846 = vperm.xlu0 %1845, %v228
        %v1847 = vpop.permute.xlu0 %1846
        %1849 = vset.pattern.permute.xlu0 6
        %1850 = vperm.xlu0 %1849, %v229
        %v1851 = vpop.permute.xlu0 %1850
        %1853 = vset.pattern.permute.xlu0 6
        %1854 = vperm.xlu0 %1853, %v230
        %v1855 = vpop.permute.xlu0 %1854
        %1857 = vset.pattern.permute.xlu0 6
        %1858 = vperm.xlu0 %1857, %v231
        %v1859 = vpop.permute.xlu0 %1858
        %1861 = vset.pattern.permute.xlu0 6
        %1862 = vperm.xlu0 %1861, %v232
        %v1863 = vpop.permute.xlu0 %1862
        %1865 = vset.pattern.permute.xlu0 6
        %1866 = vperm.xlu0 %1865, %v233
        %v1867 = vpop.permute.xlu0 %1866
        %1869 = vset.pattern.permute.xlu0 6
        %1870 = vperm.xlu0 %1869, %v234
        %v1871 = vpop.permute.xlu0 %1870
        %1873 = vset.pattern.permute.xlu0 6
        %1874 = vperm.xlu0 %1873, %v235
        %v1875 = vpop.permute.xlu0 %1874
        %1877 = vset.pattern.permute.xlu0 6
        %1878 = vperm.xlu0 %1877, %v236
        %v1879 = vpop.permute.xlu0 %1878
        %1881 = vset.pattern.permute.xlu0 6
        %1882 = vperm.xlu0 %1881, %v237
        %v1883 = vpop.permute.xlu0 %1882
        %1885 = vset.pattern.permute.xlu0 6
        %1886 = vperm.xlu0 %1885, %v238
        %v1887 = vpop.permute.xlu0 %1886
        %1889 = vset.pattern.permute.xlu0 6
        %1890 = vperm.xlu0 %1889, %v239
        %v1891 = vpop.permute.xlu0 %1890
        %1893 = vset.pattern.permute.xlu0 6
        %1894 = vperm.xlu0 %1893, %v240
        %v1895 = vpop.permute.xlu0 %1894
        %1897 = vset.pattern.permute.xlu0 6
        %1898 = vperm.xlu0 %1897, %v241
        %v1899 = vpop.permute.xlu0 %1898
        %1901 = vset.pattern.permute.xlu0 6
        %1902 = vperm.xlu0 %1901, %v242
        %v1903 = vpop.permute.xlu0 %1902
        %1905 = vset.pattern.permute.xlu0 6
        %1906 = vperm.xlu0 %1905, %v243
        %v1907 = vpop.permute.xlu0 %1906
        %1909 = vset.pattern.permute.xlu0 6
        %1910 = vperm.xlu0 %1909, %v244
        %v1911 = vpop.permute.xlu0 %1910
        %1913 = vset.pattern.permute.xlu0 6
        %1914 = vperm.xlu0 %1913, %v245
        %v1915 = vpop.permute.xlu0 %1914
        %1917 = vset.pattern.permute.xlu0 6
        %1918 = vperm.xlu0 %1917, %v246
        %v1919 = vpop.permute.xlu0 %1918
        %1921 = vset.pattern.permute.xlu0 6
        %1922 = vperm.xlu0 %1921, %v247
        %v1923 = vpop.permute.xlu0 %1922
        %1925 = vset.pattern.permute.xlu0 6
        %1926 = vperm.xlu0 %1925, %v248
        %v1927 = vpop.permute.xlu0 %1926
        %1929 = vset.pattern.permute.xlu0 6
        %1930 = vperm.xlu0 %1929, %v249
        %v1931 = vpop.permute.xlu0 %1930
        %1933 = vset.pattern.permute.xlu0 6
        %1934 = vperm.xlu0 %1933, %v250
        %v1935 = vpop.permute.xlu0 %1934
        %1937 = vset.pattern.permute.xlu0 6
        %1938 = vperm.xlu0 %1937, %v251
        %v1939 = vpop.permute.xlu0 %1938
        %1941 = vset.pattern.permute.xlu0 6
        %1942 = vperm.xlu0 %1941, %v252
        %v1943 = vpop.permute.xlu0 %1942
        %1945 = vset.pattern.permute.xlu0 6
        %1946 = vperm.xlu0 %1945, %v253
        %v1947 = vpop.permute.xlu0 %1946
        %1949 = vset.pattern.permute.xlu0 6
        %1950 = vperm.xlu0 %1949, %v254
        %v1951 = vpop.permute.xlu0 %1950
        %1953 = vset.pattern.permute.xlu0 6
        %1954 = vperm.xlu0 %1953, %v255
        %v1955 = vpop.permute.xlu0 %1954
        %1957 = vset.pattern.permute.xlu0 6
        %1958 = vperm.xlu0 %1957, %v256
        %v1959 = vpop.permute.xlu0 %1958
        %1961 = vset.pattern.permute.xlu0 6
        %1962 = vperm.xlu0 %1961, %v257
        %v1963 = vpop.permute.xlu0 %1962
        %1965 = vset.pattern.permute.xlu0 6
        %1966 = vperm.xlu0 %1965, %v258
        %v1967 = vpop.permute.xlu0 %1966
        %1969 = vset.pattern.permute.xlu0 6
        %1970 = vperm.xlu0 %1969, %v259
        %v1971 = vpop.permute.xlu0 %1970
        %1973 = vset.pattern.permute.xlu0 6
        %1974 = vperm.xlu0 %1973, %v260
        %v1975 = vpop.permute.xlu0 %1974
        %1977 = vset.pattern.permute.xlu0 6
        %1978 = vperm.xlu0 %1977, %v261
        %v1979 = vpop.permute.xlu0 %1978
        %1981 = vset.pattern.permute.xlu0 6
        %1982 = vperm.xlu0 %1981, %v262
        %v1983 = vpop.permute.xlu0 %1982
        %1985 = vset.pattern.permute.xlu0 6
        %1986 = vperm.xlu0 %1985, %v263
        %v1987 = vpop.permute.xlu0 %1986
        %1989 = vset.pattern.permute.xlu0 6
        %1990 = vperm.xlu0 %1989, %v264
        %v1991 = vpop.permute.xlu0 %1990
        %1993 = vset.pattern.permute.xlu0 6
        %1994 = vperm.xlu0 %1993, %v265
        %v1995 = vpop.permute.xlu0 %1994
        %1997 = vset.pattern.permute.xlu0 6
        %1998 = vperm.xlu0 %1997, %v266
        %v1999 = vpop.permute.xlu0 %1998
        %2001 = vset.pattern.permute.xlu0 6
        %2002 = vperm.xlu0 %2001, %v267
        %v2003 = vpop.permute.xlu0 %2002
        %2005 = vset.pattern.permute.xlu0 6
        %2006 = vperm.xlu0 %2005, %v268
        %v2007 = vpop.permute.xlu0 %2006
        %2009 = vset.pattern.permute.xlu0 6
        %2010 = vperm.xlu0 %2009, %v269
        %v2011 = vpop.permute.xlu0 %2010
        %2013 = vset.pattern.permute.xlu0 6
        %2014 = vperm.xlu0 %2013, %v270
        %v2015 = vpop.permute.xlu0 %2014
        %2017 = vset.pattern.permute.xlu0 6
        %2018 = vperm.xlu0 %2017, %v271
        %v2019 = vpop.permute.xlu0 %2018
        %2021 = vset.pattern.permute.xlu0 6
        %2022 = vperm.xlu0 %2021, %v272
        %v2023 = vpop.permute.xlu0 %2022
        %2025 = vset.pattern.permute.xlu0 6
        %2026 = vperm.xlu0 %2025, %v273
        %v2027 = vpop.permute.xlu0 %2026
        %2029 = vset.pattern.permute.xlu0 6
        %2030 = vperm.xlu0 %2029, %v274
        %v2031 = vpop.permute.xlu0 %2030
        %2033 = vset.pattern.permute.xlu0 6
        %2034 = vperm.xlu0 %2033, %v275
        %v2035 = vpop.permute.xlu0 %2034
        %2037 = vset.pattern.permute.xlu0 6
        %2038 = vperm.xlu0 %2037, %v276
        %v2039 = vpop.permute.xlu0 %2038
        %v2041 = vmul.f32 %v1847, %v277
        %v2042 = vmul.f32 %v1851, %v278
        %v2043 = vmul.f32 %v1855, %v279
        %v2044 = vmul.f32 %v1859, %v280
        %v2045 = vmul.f32 %v1863, %v281
        %v2046 = vmul.f32 %v1867, %v282
        %v2047 = vmul.f32 %v1871, %v283
        %v2048 = vmul.f32 %v1875, %v284
        %v2049 = vmul.f32 %v1879, %v285
        %v2050 = vmul.f32 %v1883, %v286
        %v2051 = vmul.f32 %v1887, %v287
        %v2052 = vmul.f32 %v1891, %v288
        %v2053 = vmul.f32 %v1895, %v289
        %v2054 = vmul.f32 %v1899, %v290
        %v2055 = vmul.f32 %v1903, %v291
        %v2056 = vmul.f32 %v1907, %v292
        %v2057 = vmul.f32 %v1911, %v293
        %v2058 = vmul.f32 %v1915, %v294
        %v2059 = vmul.f32 %v1919, %v295
        %v2060 = vmul.f32 %v1923, %v296
        %v2061 = vmul.f32 %v1927, %v297
        %v2062 = vmul.f32 %v1931, %v298
        %v2063 = vmul.f32 %v1935, %v299
        %v2064 = vmul.f32 %v1939, %v300
        %v2065 = vmul.f32 %v1943, %v301
        %v2066 = vmul.f32 %v1947, %v302
        %v2067 = vmul.f32 %v1951, %v303
        %v2068 = vmul.f32 %v1955, %v304
        %v2069 = vmul.f32 %v1959, %v305
        %v2070 = vmul.f32 %v1963, %v306
        %v2071 = vmul.f32 %v1967, %v307
        %v2072 = vmul.f32 %v1971, %v308
        %v2073 = vmul.f32 %v1975, %v309
        %v2074 = vmul.f32 %v1979, %v310
        %v2075 = vmul.f32 %v1983, %v311
        %v2076 = vmul.f32 %v1987, %v312
        %v2077 = vmul.f32 %v1991, %v313
        %v2078 = vmul.f32 %v1995, %v314
        %v2079 = vmul.f32 %v1999, %v315
        %v2080 = vmul.f32 %v2003, %v316
        %v2081 = vmul.f32 %v2007, %v317
        %v2082 = vmul.f32 %v2011, %v318
        %v2083 = vmul.f32 %v2015, %v319
        %v2084 = vmul.f32 %v2019, %v320
        %v2085 = vmul.f32 %v2023, %v321
        %v2086 = vmul.f32 %v2027, %v322
        %v2087 = vmul.f32 %v2031, %v323
        %v2088 = vmul.f32 %v2035, %v324
        %v2089 = vmul.f32 %v2039, %v325
        %2090 = vset.pattern.permute.xlu0 7
        %2091 = vperm.xlu0 %2090, %v228
        %v2092 = vpop.permute.xlu0 %2091
        %2094 = vset.pattern.permute.xlu0 7
        %2095 = vperm.xlu0 %2094, %v229
        %v2096 = vpop.permute.xlu0 %2095
        %2098 = vset.pattern.permute.xlu0 7
        %2099 = vperm.xlu0 %2098, %v230
        %v2100 = vpop.permute.xlu0 %2099
        %2102 = vset.pattern.permute.xlu0 7
        %2103 = vperm.xlu0 %2102, %v231
        %v2104 = vpop.permute.xlu0 %2103
        %2106 = vset.pattern.permute.xlu0 7
        %2107 = vperm.xlu0 %2106, %v232
        %v2108 = vpop.permute.xlu0 %2107
        %2110 = vset.pattern.permute.xlu0 7
        %2111 = vperm.xlu0 %2110, %v233
        %v2112 = vpop.permute.xlu0 %2111
        %2114 = vset.pattern.permute.xlu0 7
        %2115 = vperm.xlu0 %2114, %v234
        %v2116 = vpop.permute.xlu0 %2115
        %2118 = vset.pattern.permute.xlu0 7
        %2119 = vperm.xlu0 %2118, %v235
        %v2120 = vpop.permute.xlu0 %2119
        %2122 = vset.pattern.permute.xlu0 7
        %2123 = vperm.xlu0 %2122, %v236
        %v2124 = vpop.permute.xlu0 %2123
        %2126 = vset.pattern.permute.xlu0 7
        %2127 = vperm.xlu0 %2126, %v237
        %v2128 = vpop.permute.xlu0 %2127
        %2130 = vset.pattern.permute.xlu0 7
        %2131 = vperm.xlu0 %2130, %v238
        %v2132 = vpop.permute.xlu0 %2131
        %2134 = vset.pattern.permute.xlu0 7
        %2135 = vperm.xlu0 %2134, %v239
        %v2136 = vpop.permute.xlu0 %2135
        %2138 = vset.pattern.permute.xlu0 7
        %2139 = vperm.xlu0 %2138, %v240
        %v2140 = vpop.permute.xlu0 %2139
        %2142 = vset.pattern.permute.xlu0 7
        %2143 = vperm.xlu0 %2142, %v241
        %v2144 = vpop.permute.xlu0 %2143
        %2146 = vset.pattern.permute.xlu0 7
        %2147 = vperm.xlu0 %2146, %v242
        %v2148 = vpop.permute.xlu0 %2147
        %2150 = vset.pattern.permute.xlu0 7
        %2151 = vperm.xlu0 %2150, %v243
        %v2152 = vpop.permute.xlu0 %2151
        %2154 = vset.pattern.permute.xlu0 7
        %2155 = vperm.xlu0 %2154, %v244
        %v2156 = vpop.permute.xlu0 %2155
        %2158 = vset.pattern.permute.xlu0 7
        %2159 = vperm.xlu0 %2158, %v245
        %v2160 = vpop.permute.xlu0 %2159
        %2162 = vset.pattern.permute.xlu0 7
        %2163 = vperm.xlu0 %2162, %v246
        %v2164 = vpop.permute.xlu0 %2163
        %2166 = vset.pattern.permute.xlu0 7
        %2167 = vperm.xlu0 %2166, %v247
        %v2168 = vpop.permute.xlu0 %2167
        %2170 = vset.pattern.permute.xlu0 7
        %2171 = vperm.xlu0 %2170, %v248
        %v2172 = vpop.permute.xlu0 %2171
        %2174 = vset.pattern.permute.xlu0 7
        %2175 = vperm.xlu0 %2174, %v249
        %v2176 = vpop.permute.xlu0 %2175
        %2178 = vset.pattern.permute.xlu0 7
        %2179 = vperm.xlu0 %2178, %v250
        %v2180 = vpop.permute.xlu0 %2179
        %2182 = vset.pattern.permute.xlu0 7
        %2183 = vperm.xlu0 %2182, %v251
        %v2184 = vpop.permute.xlu0 %2183
        %2186 = vset.pattern.permute.xlu0 7
        %2187 = vperm.xlu0 %2186, %v252
        %v2188 = vpop.permute.xlu0 %2187
        %2190 = vset.pattern.permute.xlu0 7
        %2191 = vperm.xlu0 %2190, %v253
        %v2192 = vpop.permute.xlu0 %2191
        %2194 = vset.pattern.permute.xlu0 7
        %2195 = vperm.xlu0 %2194, %v254
        %v2196 = vpop.permute.xlu0 %2195
        %2198 = vset.pattern.permute.xlu0 7
        %2199 = vperm.xlu0 %2198, %v255
        %v2200 = vpop.permute.xlu0 %2199
        %2202 = vset.pattern.permute.xlu0 7
        %2203 = vperm.xlu0 %2202, %v256
        %v2204 = vpop.permute.xlu0 %2203
        %2206 = vset.pattern.permute.xlu0 7
        %2207 = vperm.xlu0 %2206, %v257
        %v2208 = vpop.permute.xlu0 %2207
        %2210 = vset.pattern.permute.xlu0 7
        %2211 = vperm.xlu0 %2210, %v258
        %v2212 = vpop.permute.xlu0 %2211
        %2214 = vset.pattern.permute.xlu0 7
        %2215 = vperm.xlu0 %2214, %v259
        %v2216 = vpop.permute.xlu0 %2215
        %2218 = vset.pattern.permute.xlu0 7
        %2219 = vperm.xlu0 %2218, %v260
        %v2220 = vpop.permute.xlu0 %2219
        %2222 = vset.pattern.permute.xlu0 7
        %2223 = vperm.xlu0 %2222, %v261
        %v2224 = vpop.permute.xlu0 %2223
        %2226 = vset.pattern.permute.xlu0 7
        %2227 = vperm.xlu0 %2226, %v262
        %v2228 = vpop.permute.xlu0 %2227
        %2230 = vset.pattern.permute.xlu0 7
        %2231 = vperm.xlu0 %2230, %v263
        %v2232 = vpop.permute.xlu0 %2231
        %2234 = vset.pattern.permute.xlu0 7
        %2235 = vperm.xlu0 %2234, %v264
        %v2236 = vpop.permute.xlu0 %2235
        %2238 = vset.pattern.permute.xlu0 7
        %2239 = vperm.xlu0 %2238, %v265
        %v2240 = vpop.permute.xlu0 %2239
        %2242 = vset.pattern.permute.xlu0 7
        %2243 = vperm.xlu0 %2242, %v266
        %v2244 = vpop.permute.xlu0 %2243
        %2246 = vset.pattern.permute.xlu0 7
        %2247 = vperm.xlu0 %2246, %v267
        %v2248 = vpop.permute.xlu0 %2247
        %2250 = vset.pattern.permute.xlu0 7
        %2251 = vperm.xlu0 %2250, %v268
        %v2252 = vpop.permute.xlu0 %2251
        %2254 = vset.pattern.permute.xlu0 7
        %2255 = vperm.xlu0 %2254, %v269
        %v2256 = vpop.permute.xlu0 %2255
        %2258 = vset.pattern.permute.xlu0 7
        %2259 = vperm.xlu0 %2258, %v270
        %v2260 = vpop.permute.xlu0 %2259
        %2262 = vset.pattern.permute.xlu0 7
        %2263 = vperm.xlu0 %2262, %v271
        %v2264 = vpop.permute.xlu0 %2263
        %2266 = vset.pattern.permute.xlu0 7
        %2267 = vperm.xlu0 %2266, %v272
        %v2268 = vpop.permute.xlu0 %2267
        %2270 = vset.pattern.permute.xlu0 7
        %2271 = vperm.xlu0 %2270, %v273
        %v2272 = vpop.permute.xlu0 %2271
        %2274 = vset.pattern.permute.xlu0 7
        %2275 = vperm.xlu0 %2274, %v274
        %v2276 = vpop.permute.xlu0 %2275
        %2278 = vset.pattern.permute.xlu0 7
        %2279 = vperm.xlu0 %2278, %v275
        %v2280 = vpop.permute.xlu0 %2279
        %2282 = vset.pattern.permute.xlu0 7
        %2283 = vperm.xlu0 %2282, %v276
        %v2284 = vpop.permute.xlu0 %2283
        %v2286 = vmul.f32 %v2092, %v277
        %v2287 = vmul.f32 %v2096, %v278
        %v2288 = vmul.f32 %v2100, %v279
        %v2289 = vmul.f32 %v2104, %v280
        %v2290 = vmul.f32 %v2108, %v281
        %v2291 = vmul.f32 %v2112, %v282
        %v2292 = vmul.f32 %v2116, %v283
        %v2293 = vmul.f32 %v2120, %v284
        %v2294 = vmul.f32 %v2124, %v285
        %v2295 = vmul.f32 %v2128, %v286
        %v2296 = vmul.f32 %v2132, %v287
        %v2297 = vmul.f32 %v2136, %v288
        %v2298 = vmul.f32 %v2140, %v289
        %v2299 = vmul.f32 %v2144, %v290
        %v2300 = vmul.f32 %v2148, %v291
        %v2301 = vmul.f32 %v2152, %v292
        %v2302 = vmul.f32 %v2156, %v293
        %v2303 = vmul.f32 %v2160, %v294
        %v2304 = vmul.f32 %v2164, %v295
        %v2305 = vmul.f32 %v2168, %v296
        %v2306 = vmul.f32 %v2172, %v297
        %v2307 = vmul.f32 %v2176, %v298
        %v2308 = vmul.f32 %v2180, %v299
        %v2309 = vmul.f32 %v2184, %v300
        %v2310 = vmul.f32 %v2188, %v301
        %v2311 = vmul.f32 %v2192, %v302
        %v2312 = vmul.f32 %v2196, %v303
        %v2313 = vmul.f32 %v2200, %v304
        %v2314 = vmul.f32 %v2204, %v305
        %v2315 = vmul.f32 %v2208, %v306
        %v2316 = vmul.f32 %v2212, %v307
        %v2317 = vmul.f32 %v2216, %v308
        %v2318 = vmul.f32 %v2220, %v309
        %v2319 = vmul.f32 %v2224, %v310
        %v2320 = vmul.f32 %v2228, %v311
        %v2321 = vmul.f32 %v2232, %v312
        %v2322 = vmul.f32 %v2236, %v313
        %v2323 = vmul.f32 %v2240, %v314
        %v2324 = vmul.f32 %v2244, %v315
        %v2325 = vmul.f32 %v2248, %v316
        %v2326 = vmul.f32 %v2252, %v317
        %v2327 = vmul.f32 %v2256, %v318
        %v2328 = vmul.f32 %v2260, %v319
        %v2329 = vmul.f32 %v2264, %v320
        %v2330 = vmul.f32 %v2268, %v321
        %v2331 = vmul.f32 %v2272, %v322
        %v2332 = vmul.f32 %v2276, %v323
        %v2333 = vmul.f32 %v2280, %v324
        %v2334 = vmul.f32 %v2284, %v325
        %2335 = vset.pattern.permute.xlu0 8
        %2336 = vperm.xlu0 %2335, %v228
        %v2337 = vpop.permute.xlu0 %2336
        %2339 = vset.pattern.permute.xlu0 8
        %2340 = vperm.xlu0 %2339, %v229
        %v2341 = vpop.permute.xlu0 %2340
        %2343 = vset.pattern.permute.xlu0 8
        %2344 = vperm.xlu0 %2343, %v230
        %v2345 = vpop.permute.xlu0 %2344
        %2347 = vset.pattern.permute.xlu0 8
        %2348 = vperm.xlu0 %2347, %v231
        %v2349 = vpop.permute.xlu0 %2348
        %2351 = vset.pattern.permute.xlu0 8
        %2352 = vperm.xlu0 %2351, %v232
        %v2353 = vpop.permute.xlu0 %2352
        %2355 = vset.pattern.permute.xlu0 8
        %2356 = vperm.xlu0 %2355, %v233
        %v2357 = vpop.permute.xlu0 %2356
        %2359 = vset.pattern.permute.xlu0 8
        %2360 = vperm.xlu0 %2359, %v234
        %v2361 = vpop.permute.xlu0 %2360
        %2363 = vset.pattern.permute.xlu0 8
        %2364 = vperm.xlu0 %2363, %v235
        %v2365 = vpop.permute.xlu0 %2364
        %2367 = vset.pattern.permute.xlu0 8
        %2368 = vperm.xlu0 %2367, %v236
        %v2369 = vpop.permute.xlu0 %2368
        %2371 = vset.pattern.permute.xlu0 8
        %2372 = vperm.xlu0 %2371, %v237
        %v2373 = vpop.permute.xlu0 %2372
        %2375 = vset.pattern.permute.xlu0 8
        %2376 = vperm.xlu0 %2375, %v238
        %v2377 = vpop.permute.xlu0 %2376
        %2379 = vset.pattern.permute.xlu0 8
        %2380 = vperm.xlu0 %2379, %v239
        %v2381 = vpop.permute.xlu0 %2380
        %2383 = vset.pattern.permute.xlu0 8
        %2384 = vperm.xlu0 %2383, %v240
        %v2385 = vpop.permute.xlu0 %2384
        %2387 = vset.pattern.permute.xlu0 8
        %2388 = vperm.xlu0 %2387, %v241
        %v2389 = vpop.permute.xlu0 %2388
        %2391 = vset.pattern.permute.xlu0 8
        %2392 = vperm.xlu0 %2391, %v242
        %v2393 = vpop.permute.xlu0 %2392
        %2395 = vset.pattern.permute.xlu0 8
        %2396 = vperm.xlu0 %2395, %v243
        %v2397 = vpop.permute.xlu0 %2396
        %2399 = vset.pattern.permute.xlu0 8
        %2400 = vperm.xlu0 %2399, %v244
        %v2401 = vpop.permute.xlu0 %2400
        %2403 = vset.pattern.permute.xlu0 8
        %2404 = vperm.xlu0 %2403, %v245
        %v2405 = vpop.permute.xlu0 %2404
        %2407 = vset.pattern.permute.xlu0 8
        %2408 = vperm.xlu0 %2407, %v246
        %v2409 = vpop.permute.xlu0 %2408
        %2411 = vset.pattern.permute.xlu0 8
        %2412 = vperm.xlu0 %2411, %v247
        %v2413 = vpop.permute.xlu0 %2412
        %2415 = vset.pattern.permute.xlu0 8
        %2416 = vperm.xlu0 %2415, %v248
        %v2417 = vpop.permute.xlu0 %2416
        %2419 = vset.pattern.permute.xlu0 8
        %2420 = vperm.xlu0 %2419, %v249
        %v2421 = vpop.permute.xlu0 %2420
        %2423 = vset.pattern.permute.xlu0 8
        %2424 = vperm.xlu0 %2423, %v250
        %v2425 = vpop.permute.xlu0 %2424
        %2427 = vset.pattern.permute.xlu0 8
        %2428 = vperm.xlu0 %2427, %v251
        %v2429 = vpop.permute.xlu0 %2428
        %2431 = vset.pattern.permute.xlu0 8
        %2432 = vperm.xlu0 %2431, %v252
        %v2433 = vpop.permute.xlu0 %2432
        %2435 = vset.pattern.permute.xlu0 8
        %2436 = vperm.xlu0 %2435, %v253
        %v2437 = vpop.permute.xlu0 %2436
        %2439 = vset.pattern.permute.xlu0 8
        %2440 = vperm.xlu0 %2439, %v254
        %v2441 = vpop.permute.xlu0 %2440
        %2443 = vset.pattern.permute.xlu0 8
        %2444 = vperm.xlu0 %2443, %v255
        %v2445 = vpop.permute.xlu0 %2444
        %2447 = vset.pattern.permute.xlu0 8
        %2448 = vperm.xlu0 %2447, %v256
        %v2449 = vpop.permute.xlu0 %2448
        %2451 = vset.pattern.permute.xlu0 8
        %2452 = vperm.xlu0 %2451, %v257
        %v2453 = vpop.permute.xlu0 %2452
        %2455 = vset.pattern.permute.xlu0 8
        %2456 = vperm.xlu0 %2455, %v258
        %v2457 = vpop.permute.xlu0 %2456
        %2459 = vset.pattern.permute.xlu0 8
        %2460 = vperm.xlu0 %2459, %v259
        %v2461 = vpop.permute.xlu0 %2460
        %2463 = vset.pattern.permute.xlu0 8
        %2464 = vperm.xlu0 %2463, %v260
        %v2465 = vpop.permute.xlu0 %2464
        %2467 = vset.pattern.permute.xlu0 8
        %2468 = vperm.xlu0 %2467, %v261
        %v2469 = vpop.permute.xlu0 %2468
        %2471 = vset.pattern.permute.xlu0 8
        %2472 = vperm.xlu0 %2471, %v262
        %v2473 = vpop.permute.xlu0 %2472
        %2475 = vset.pattern.permute.xlu0 8
        %2476 = vperm.xlu0 %2475, %v263
        %v2477 = vpop.permute.xlu0 %2476
        %2479 = vset.pattern.permute.xlu0 8
        %2480 = vperm.xlu0 %2479, %v264
        %v2481 = vpop.permute.xlu0 %2480
        %2483 = vset.pattern.permute.xlu0 8
        %2484 = vperm.xlu0 %2483, %v265
        %v2485 = vpop.permute.xlu0 %2484
        %2487 = vset.pattern.permute.xlu0 8
        %2488 = vperm.xlu0 %2487, %v266
        %v2489 = vpop.permute.xlu0 %2488
        %2491 = vset.pattern.permute.xlu0 8
        %2492 = vperm.xlu0 %2491, %v267
        %v2493 = vpop.permute.xlu0 %2492
        %2495 = vset.pattern.permute.xlu0 8
        %2496 = vperm.xlu0 %2495, %v268
        %v2497 = vpop.permute.xlu0 %2496
        %2499 = vset.pattern.permute.xlu0 8
        %2500 = vperm.xlu0 %2499, %v269
        %v2501 = vpop.permute.xlu0 %2500
        %2503 = vset.pattern.permute.xlu0 8
        %2504 = vperm.xlu0 %2503, %v270
        %v2505 = vpop.permute.xlu0 %2504
        %2507 = vset.pattern.permute.xlu0 8
        %2508 = vperm.xlu0 %2507, %v271
        %v2509 = vpop.permute.xlu0 %2508
        %2511 = vset.pattern.permute.xlu0 8
        %2512 = vperm.xlu0 %2511, %v272
        %v2513 = vpop.permute.xlu0 %2512
        %2515 = vset.pattern.permute.xlu0 8
        %2516 = vperm.xlu0 %2515, %v273
        %v2517 = vpop.permute.xlu0 %2516
        %2519 = vset.pattern.permute.xlu0 8
        %2520 = vperm.xlu0 %2519, %v274
        %v2521 = vpop.permute.xlu0 %2520
        %2523 = vset.pattern.permute.xlu0 8
        %2524 = vperm.xlu0 %2523, %v275
        %v2525 = vpop.permute.xlu0 %2524
        %2527 = vset.pattern.permute.xlu0 8
        %2528 = vperm.xlu0 %2527, %v276
        %v2529 = vpop.permute.xlu0 %2528
        %v2531 = vmul.f32 %v2337, %v277
        %v2532 = vmul.f32 %v2341, %v278
        %v2533 = vmul.f32 %v2345, %v279
        %v2534 = vmul.f32 %v2349, %v280
        %v2535 = vmul.f32 %v2353, %v281
        %v2536 = vmul.f32 %v2357, %v282
        %v2537 = vmul.f32 %v2361, %v283
        %v2538 = vmul.f32 %v2365, %v284
        %v2539 = vmul.f32 %v2369, %v285
        %v2540 = vmul.f32 %v2373, %v286
        %v2541 = vmul.f32 %v2377, %v287
        %v2542 = vmul.f32 %v2381, %v288
        %v2543 = vmul.f32 %v2385, %v289
        %v2544 = vmul.f32 %v2389, %v290
        %v2545 = vmul.f32 %v2393, %v291
        %v2546 = vmul.f32 %v2397, %v292
        %v2547 = vmul.f32 %v2401, %v293
        %v2548 = vmul.f32 %v2405, %v294
        %v2549 = vmul.f32 %v2409, %v295
        %v2550 = vmul.f32 %v2413, %v296
        %v2551 = vmul.f32 %v2417, %v297
        %v2552 = vmul.f32 %v2421, %v298
        %v2553 = vmul.f32 %v2425, %v299
        %v2554 = vmul.f32 %v2429, %v300
        %v2555 = vmul.f32 %v2433, %v301
        %v2556 = vmul.f32 %v2437, %v302
        %v2557 = vmul.f32 %v2441, %v303
        %v2558 = vmul.f32 %v2445, %v304
        %v2559 = vmul.f32 %v2449, %v305
        %v2560 = vmul.f32 %v2453, %v306
        %v2561 = vmul.f32 %v2457, %v307
        %v2562 = vmul.f32 %v2461, %v308
        %v2563 = vmul.f32 %v2465, %v309
        %v2564 = vmul.f32 %v2469, %v310
        %v2565 = vmul.f32 %v2473, %v311
        %v2566 = vmul.f32 %v2477, %v312
        %v2567 = vmul.f32 %v2481, %v313
        %v2568 = vmul.f32 %v2485, %v314
        %v2569 = vmul.f32 %v2489, %v315
        %v2570 = vmul.f32 %v2493, %v316
        %v2571 = vmul.f32 %v2497, %v317
        %v2572 = vmul.f32 %v2501, %v318
        %v2573 = vmul.f32 %v2505, %v319
        %v2574 = vmul.f32 %v2509, %v320
        %v2575 = vmul.f32 %v2513, %v321
        %v2576 = vmul.f32 %v2517, %v322
        %v2577 = vmul.f32 %v2521, %v323
        %v2578 = vmul.f32 %v2525, %v324
        %v2579 = vmul.f32 %v2529, %v325
        %2580 = vset.pattern.permute.xlu0 9
        %2581 = vperm.xlu0 %2580, %v228
        %v2582 = vpop.permute.xlu0 %2581
        %2584 = vset.pattern.permute.xlu0 9
        %2585 = vperm.xlu0 %2584, %v229
        %v2586 = vpop.permute.xlu0 %2585
        %2588 = vset.pattern.permute.xlu0 9
        %2589 = vperm.xlu0 %2588, %v230
        %v2590 = vpop.permute.xlu0 %2589
        %2592 = vset.pattern.permute.xlu0 9
        %2593 = vperm.xlu0 %2592, %v231
        %v2594 = vpop.permute.xlu0 %2593
        %2596 = vset.pattern.permute.xlu0 9
        %2597 = vperm.xlu0 %2596, %v232
        %v2598 = vpop.permute.xlu0 %2597
        %2600 = vset.pattern.permute.xlu0 9
        %2601 = vperm.xlu0 %2600, %v233
        %v2602 = vpop.permute.xlu0 %2601
        %2604 = vset.pattern.permute.xlu0 9
        %2605 = vperm.xlu0 %2604, %v234
        %v2606 = vpop.permute.xlu0 %2605
        %2608 = vset.pattern.permute.xlu0 9
        %2609 = vperm.xlu0 %2608, %v235
        %v2610 = vpop.permute.xlu0 %2609
        %2612 = vset.pattern.permute.xlu0 9
        %2613 = vperm.xlu0 %2612, %v236
        %v2614 = vpop.permute.xlu0 %2613
        %2616 = vset.pattern.permute.xlu0 9
        %2617 = vperm.xlu0 %2616, %v237
        %v2618 = vpop.permute.xlu0 %2617
        %2620 = vset.pattern.permute.xlu0 9
        %2621 = vperm.xlu0 %2620, %v238
        %v2622 = vpop.permute.xlu0 %2621
        %2624 = vset.pattern.permute.xlu0 9
        %2625 = vperm.xlu0 %2624, %v239
        %v2626 = vpop.permute.xlu0 %2625
        %2628 = vset.pattern.permute.xlu0 9
        %2629 = vperm.xlu0 %2628, %v240
        %v2630 = vpop.permute.xlu0 %2629
        %2632 = vset.pattern.permute.xlu0 9
        %2633 = vperm.xlu0 %2632, %v241
        %v2634 = vpop.permute.xlu0 %2633
        %2636 = vset.pattern.permute.xlu0 9
        %2637 = vperm.xlu0 %2636, %v242
        %v2638 = vpop.permute.xlu0 %2637
        %2640 = vset.pattern.permute.xlu0 9
        %2641 = vperm.xlu0 %2640, %v243
        %v2642 = vpop.permute.xlu0 %2641
        %2644 = vset.pattern.permute.xlu0 9
        %2645 = vperm.xlu0 %2644, %v244
        %v2646 = vpop.permute.xlu0 %2645
        %2648 = vset.pattern.permute.xlu0 9
        %2649 = vperm.xlu0 %2648, %v245
        %v2650 = vpop.permute.xlu0 %2649
        %2652 = vset.pattern.permute.xlu0 9
        %2653 = vperm.xlu0 %2652, %v246
        %v2654 = vpop.permute.xlu0 %2653
        %2656 = vset.pattern.permute.xlu0 9
        %2657 = vperm.xlu0 %2656, %v247
        %v2658 = vpop.permute.xlu0 %2657
        %2660 = vset.pattern.permute.xlu0 9
        %2661 = vperm.xlu0 %2660, %v248
        %v2662 = vpop.permute.xlu0 %2661
        %2664 = vset.pattern.permute.xlu0 9
        %2665 = vperm.xlu0 %2664, %v249
        %v2666 = vpop.permute.xlu0 %2665
        %2668 = vset.pattern.permute.xlu0 9
        %2669 = vperm.xlu0 %2668, %v250
        %v2670 = vpop.permute.xlu0 %2669
        %2672 = vset.pattern.permute.xlu0 9
        %2673 = vperm.xlu0 %2672, %v251
        %v2674 = vpop.permute.xlu0 %2673
        %2676 = vset.pattern.permute.xlu0 9
        %2677 = vperm.xlu0 %2676, %v252
        %v2678 = vpop.permute.xlu0 %2677
        %2680 = vset.pattern.permute.xlu0 9
        %2681 = vperm.xlu0 %2680, %v253
        %v2682 = vpop.permute.xlu0 %2681
        %2684 = vset.pattern.permute.xlu0 9
        %2685 = vperm.xlu0 %2684, %v254
        %v2686 = vpop.permute.xlu0 %2685
        %2688 = vset.pattern.permute.xlu0 9
        %2689 = vperm.xlu0 %2688, %v255
        %v2690 = vpop.permute.xlu0 %2689
        %2692 = vset.pattern.permute.xlu0 9
        %2693 = vperm.xlu0 %2692, %v256
        %v2694 = vpop.permute.xlu0 %2693
        %2696 = vset.pattern.permute.xlu0 9
        %2697 = vperm.xlu0 %2696, %v257
        %v2698 = vpop.permute.xlu0 %2697
        %2700 = vset.pattern.permute.xlu0 9
        %2701 = vperm.xlu0 %2700, %v258
        %v2702 = vpop.permute.xlu0 %2701
        %2704 = vset.pattern.permute.xlu0 9
        %2705 = vperm.xlu0 %2704, %v259
        %v2706 = vpop.permute.xlu0 %2705
        %2708 = vset.pattern.permute.xlu0 9
        %2709 = vperm.xlu0 %2708, %v260
        %v2710 = vpop.permute.xlu0 %2709
        %2712 = vset.pattern.permute.xlu0 9
        %2713 = vperm.xlu0 %2712, %v261
        %v2714 = vpop.permute.xlu0 %2713
        %2716 = vset.pattern.permute.xlu0 9
        %2717 = vperm.xlu0 %2716, %v262
        %v2718 = vpop.permute.xlu0 %2717
        %2720 = vset.pattern.permute.xlu0 9
        %2721 = vperm.xlu0 %2720, %v263
        %v2722 = vpop.permute.xlu0 %2721
        %2724 = vset.pattern.permute.xlu0 9
        %2725 = vperm.xlu0 %2724, %v264
        %v2726 = vpop.permute.xlu0 %2725
        %2728 = vset.pattern.permute.xlu0 9
        %2729 = vperm.xlu0 %2728, %v265
        %v2730 = vpop.permute.xlu0 %2729
        %2732 = vset.pattern.permute.xlu0 9
        %2733 = vperm.xlu0 %2732, %v266
        %v2734 = vpop.permute.xlu0 %2733
        %2736 = vset.pattern.permute.xlu0 9
        %2737 = vperm.xlu0 %2736, %v267
        %v2738 = vpop.permute.xlu0 %2737
        %2740 = vset.pattern.permute.xlu0 9
        %2741 = vperm.xlu0 %2740, %v268
        %v2742 = vpop.permute.xlu0 %2741
        %2744 = vset.pattern.permute.xlu0 9
        %2745 = vperm.xlu0 %2744, %v269
        %v2746 = vpop.permute.xlu0 %2745
        %2748 = vset.pattern.permute.xlu0 9
        %2749 = vperm.xlu0 %2748, %v270
        %v2750 = vpop.permute.xlu0 %2749
        %2752 = vset.pattern.permute.xlu0 9
        %2753 = vperm.xlu0 %2752, %v271
        %v2754 = vpop.permute.xlu0 %2753
        %2756 = vset.pattern.permute.xlu0 9
        %2757 = vperm.xlu0 %2756, %v272
        %v2758 = vpop.permute.xlu0 %2757
        %2760 = vset.pattern.permute.xlu0 9
        %2761 = vperm.xlu0 %2760, %v273
        %v2762 = vpop.permute.xlu0 %2761
        %2764 = vset.pattern.permute.xlu0 9
        %2765 = vperm.xlu0 %2764, %v274
        %v2766 = vpop.permute.xlu0 %2765
        %2768 = vset.pattern.permute.xlu0 9
        %2769 = vperm.xlu0 %2768, %v275
        %v2770 = vpop.permute.xlu0 %2769
        %2772 = vset.pattern.permute.xlu0 9
        %2773 = vperm.xlu0 %2772, %v276
        %v2774 = vpop.permute.xlu0 %2773
        %v2776 = vmul.f32 %v2582, %v277
        %v2777 = vmul.f32 %v2586, %v278
        %v2778 = vmul.f32 %v2590, %v279
        %v2779 = vmul.f32 %v2594, %v280
        %v2780 = vmul.f32 %v2598, %v281
        %v2781 = vmul.f32 %v2602, %v282
        %v2782 = vmul.f32 %v2606, %v283
        %v2783 = vmul.f32 %v2610, %v284
        %v2784 = vmul.f32 %v2614, %v285
        %v2785 = vmul.f32 %v2618, %v286
        %v2786 = vmul.f32 %v2622, %v287
        %v2787 = vmul.f32 %v2626, %v288
        %v2788 = vmul.f32 %v2630, %v289
        %v2789 = vmul.f32 %v2634, %v290
        %v2790 = vmul.f32 %v2638, %v291
        %v2791 = vmul.f32 %v2642, %v292
        %v2792 = vmul.f32 %v2646, %v293
        %v2793 = vmul.f32 %v2650, %v294
        %v2794 = vmul.f32 %v2654, %v295
        %v2795 = vmul.f32 %v2658, %v296
        %v2796 = vmul.f32 %v2662, %v297
        %v2797 = vmul.f32 %v2666, %v298
        %v2798 = vmul.f32 %v2670, %v299
        %v2799 = vmul.f32 %v2674, %v300
        %v2800 = vmul.f32 %v2678, %v301
        %v2801 = vmul.f32 %v2682, %v302
        %v2802 = vmul.f32 %v2686, %v303
        %v2803 = vmul.f32 %v2690, %v304
        %v2804 = vmul.f32 %v2694, %v305
        %v2805 = vmul.f32 %v2698, %v306
        %v2806 = vmul.f32 %v2702, %v307
        %v2807 = vmul.f32 %v2706, %v308
        %v2808 = vmul.f32 %v2710, %v309
        %v2809 = vmul.f32 %v2714, %v310
        %v2810 = vmul.f32 %v2718, %v311
        %v2811 = vmul.f32 %v2722, %v312
        %v2812 = vmul.f32 %v2726, %v313
        %v2813 = vmul.f32 %v2730, %v314
        %v2814 = vmul.f32 %v2734, %v315
        %v2815 = vmul.f32 %v2738, %v316
        %v2816 = vmul.f32 %v2742, %v317
        %v2817 = vmul.f32 %v2746, %v318
        %v2818 = vmul.f32 %v2750, %v319
        %v2819 = vmul.f32 %v2754, %v320
        %v2820 = vmul.f32 %v2758, %v321
        %v2821 = vmul.f32 %v2762, %v322
        %v2822 = vmul.f32 %v2766, %v323
        %v2823 = vmul.f32 %v2770, %v324
        %v2824 = vmul.f32 %v2774, %v325
        %2825 = vset.pattern.permute.xlu0 10
        %2826 = vperm.xlu0 %2825, %v228
        %v2827 = vpop.permute.xlu0 %2826
        %2829 = vset.pattern.permute.xlu0 10
        %2830 = vperm.xlu0 %2829, %v229
        %v2831 = vpop.permute.xlu0 %2830
        %2833 = vset.pattern.permute.xlu0 10
        %2834 = vperm.xlu0 %2833, %v230
        %v2835 = vpop.permute.xlu0 %2834
        %2837 = vset.pattern.permute.xlu0 10
        %2838 = vperm.xlu0 %2837, %v231
        %v2839 = vpop.permute.xlu0 %2838
        %2841 = vset.pattern.permute.xlu0 10
        %2842 = vperm.xlu0 %2841, %v232
        %v2843 = vpop.permute.xlu0 %2842
        %2845 = vset.pattern.permute.xlu0 10
        %2846 = vperm.xlu0 %2845, %v233
        %v2847 = vpop.permute.xlu0 %2846
        %2849 = vset.pattern.permute.xlu0 10
        %2850 = vperm.xlu0 %2849, %v234
        %v2851 = vpop.permute.xlu0 %2850
        %2853 = vset.pattern.permute.xlu0 10
        %2854 = vperm.xlu0 %2853, %v235
        %v2855 = vpop.permute.xlu0 %2854
        %2857 = vset.pattern.permute.xlu0 10
        %2858 = vperm.xlu0 %2857, %v236
        %v2859 = vpop.permute.xlu0 %2858
        %2861 = vset.pattern.permute.xlu0 10
        %2862 = vperm.xlu0 %2861, %v237
        %v2863 = vpop.permute.xlu0 %2862
        %2865 = vset.pattern.permute.xlu0 10
        %2866 = vperm.xlu0 %2865, %v238
        %v2867 = vpop.permute.xlu0 %2866
        %2869 = vset.pattern.permute.xlu0 10
        %2870 = vperm.xlu0 %2869, %v239
        %v2871 = vpop.permute.xlu0 %2870
        %2873 = vset.pattern.permute.xlu0 10
        %2874 = vperm.xlu0 %2873, %v240
        %v2875 = vpop.permute.xlu0 %2874
        %2877 = vset.pattern.permute.xlu0 10
        %2878 = vperm.xlu0 %2877, %v241
        %v2879 = vpop.permute.xlu0 %2878
        %2881 = vset.pattern.permute.xlu0 10
        %2882 = vperm.xlu0 %2881, %v242
        %v2883 = vpop.permute.xlu0 %2882
        %2885 = vset.pattern.permute.xlu0 10
        %2886 = vperm.xlu0 %2885, %v243
        %v2887 = vpop.permute.xlu0 %2886
        %2889 = vset.pattern.permute.xlu0 10
        %2890 = vperm.xlu0 %2889, %v244
        %v2891 = vpop.permute.xlu0 %2890
        %2893 = vset.pattern.permute.xlu0 10
        %2894 = vperm.xlu0 %2893, %v245
        %v2895 = vpop.permute.xlu0 %2894
        %2897 = vset.pattern.permute.xlu0 10
        %2898 = vperm.xlu0 %2897, %v246
        %v2899 = vpop.permute.xlu0 %2898
        %2901 = vset.pattern.permute.xlu0 10
        %2902 = vperm.xlu0 %2901, %v247
        %v2903 = vpop.permute.xlu0 %2902
        %2905 = vset.pattern.permute.xlu0 10
        %2906 = vperm.xlu0 %2905, %v248
        %v2907 = vpop.permute.xlu0 %2906
        %2909 = vset.pattern.permute.xlu0 10
        %2910 = vperm.xlu0 %2909, %v249
        %v2911 = vpop.permute.xlu0 %2910
        %2913 = vset.pattern.permute.xlu0 10
        %2914 = vperm.xlu0 %2913, %v250
        %v2915 = vpop.permute.xlu0 %2914
        %2917 = vset.pattern.permute.xlu0 10
        %2918 = vperm.xlu0 %2917, %v251
        %v2919 = vpop.permute.xlu0 %2918
        %2921 = vset.pattern.permute.xlu0 10
        %2922 = vperm.xlu0 %2921, %v252
        %v2923 = vpop.permute.xlu0 %2922
        %2925 = vset.pattern.permute.xlu0 10
        %2926 = vperm.xlu0 %2925, %v253
        %v2927 = vpop.permute.xlu0 %2926
        %2929 = vset.pattern.permute.xlu0 10
        %2930 = vperm.xlu0 %2929, %v254
        %v2931 = vpop.permute.xlu0 %2930
        %2933 = vset.pattern.permute.xlu0 10
        %2934 = vperm.xlu0 %2933, %v255
        %v2935 = vpop.permute.xlu0 %2934
        %2937 = vset.pattern.permute.xlu0 10
        %2938 = vperm.xlu0 %2937, %v256
        %v2939 = vpop.permute.xlu0 %2938
        %2941 = vset.pattern.permute.xlu0 10
        %2942 = vperm.xlu0 %2941, %v257
        %v2943 = vpop.permute.xlu0 %2942
        %2945 = vset.pattern.permute.xlu0 10
        %2946 = vperm.xlu0 %2945, %v258
        %v2947 = vpop.permute.xlu0 %2946
        %2949 = vset.pattern.permute.xlu0 10
        %2950 = vperm.xlu0 %2949, %v259
        %v2951 = vpop.permute.xlu0 %2950
        %2953 = vset.pattern.permute.xlu0 10
        %2954 = vperm.xlu0 %2953, %v260
        %v2955 = vpop.permute.xlu0 %2954
        %2957 = vset.pattern.permute.xlu0 10
        %2958 = vperm.xlu0 %2957, %v261
        %v2959 = vpop.permute.xlu0 %2958
        %2961 = vset.pattern.permute.xlu0 10
        %2962 = vperm.xlu0 %2961, %v262
        %v2963 = vpop.permute.xlu0 %2962
        %2965 = vset.pattern.permute.xlu0 10
        %2966 = vperm.xlu0 %2965, %v263
        %v2967 = vpop.permute.xlu0 %2966
        %2969 = vset.pattern.permute.xlu0 10
        %2970 = vperm.xlu0 %2969, %v264
        %v2971 = vpop.permute.xlu0 %2970
        %2973 = vset.pattern.permute.xlu0 10
        %2974 = vperm.xlu0 %2973, %v265
        %v2975 = vpop.permute.xlu0 %2974
        %2977 = vset.pattern.permute.xlu0 10
        %2978 = vperm.xlu0 %2977, %v266
        %v2979 = vpop.permute.xlu0 %2978
        %2981 = vset.pattern.permute.xlu0 10
        %2982 = vperm.xlu0 %2981, %v267
        %v2983 = vpop.permute.xlu0 %2982
        %2985 = vset.pattern.permute.xlu0 10
        %2986 = vperm.xlu0 %2985, %v268
        %v2987 = vpop.permute.xlu0 %2986
        %2989 = vset.pattern.permute.xlu0 10
        %2990 = vperm.xlu0 %2989, %v269
        %v2991 = vpop.permute.xlu0 %2990
        %2993 = vset.pattern.permute.xlu0 10
        %2994 = vperm.xlu0 %2993, %v270
        %v2995 = vpop.permute.xlu0 %2994
        %2997 = vset.pattern.permute.xlu0 10
        %2998 = vperm.xlu0 %2997, %v271
        %v2999 = vpop.permute.xlu0 %2998
        %3001 = vset.pattern.permute.xlu0 10
        %3002 = vperm.xlu0 %3001, %v272
        %v3003 = vpop.permute.xlu0 %3002
        %3005 = vset.pattern.permute.xlu0 10
        %3006 = vperm.xlu0 %3005, %v273
        %v3007 = vpop.permute.xlu0 %3006
        %3009 = vset.pattern.permute.xlu0 10
        %3010 = vperm.xlu0 %3009, %v274
        %v3011 = vpop.permute.xlu0 %3010
        %3013 = vset.pattern.permute.xlu0 10
        %3014 = vperm.xlu0 %3013, %v275
        %v3015 = vpop.permute.xlu0 %3014
        %3017 = vset.pattern.permute.xlu0 10
        %3018 = vperm.xlu0 %3017, %v276
        %v3019 = vpop.permute.xlu0 %3018
        %v3021 = vmul.f32 %v2827, %v277
        %v3022 = vmul.f32 %v2831, %v278
        %v3023 = vmul.f32 %v2835, %v279
        %v3024 = vmul.f32 %v2839, %v280
        %v3025 = vmul.f32 %v2843, %v281
        %v3026 = vmul.f32 %v2847, %v282
        %v3027 = vmul.f32 %v2851, %v283
        %v3028 = vmul.f32 %v2855, %v284
        %v3029 = vmul.f32 %v2859, %v285
        %v3030 = vmul.f32 %v2863, %v286
        %v3031 = vmul.f32 %v2867, %v287
        %v3032 = vmul.f32 %v2871, %v288
        %v3033 = vmul.f32 %v2875, %v289
        %v3034 = vmul.f32 %v2879, %v290
        %v3035 = vmul.f32 %v2883, %v291
        %v3036 = vmul.f32 %v2887, %v292
        %v3037 = vmul.f32 %v2891, %v293
        %v3038 = vmul.f32 %v2895, %v294
        %v3039 = vmul.f32 %v2899, %v295
        %v3040 = vmul.f32 %v2903, %v296
        %v3041 = vmul.f32 %v2907, %v297
        %v3042 = vmul.f32 %v2911, %v298
        %v3043 = vmul.f32 %v2915, %v299
        %v3044 = vmul.f32 %v2919, %v300
        %v3045 = vmul.f32 %v2923, %v301
        %v3046 = vmul.f32 %v2927, %v302
        %v3047 = vmul.f32 %v2931, %v303
        %v3048 = vmul.f32 %v2935, %v304
        %v3049 = vmul.f32 %v2939, %v305
        %v3050 = vmul.f32 %v2943, %v306
        %v3051 = vmul.f32 %v2947, %v307
        %v3052 = vmul.f32 %v2951, %v308
        %v3053 = vmul.f32 %v2955, %v309
        %v3054 = vmul.f32 %v2959, %v310
        %v3055 = vmul.f32 %v2963, %v311
        %v3056 = vmul.f32 %v2967, %v312
        %v3057 = vmul.f32 %v2971, %v313
        %v3058 = vmul.f32 %v2975, %v314
        %v3059 = vmul.f32 %v2979, %v315
        %v3060 = vmul.f32 %v2983, %v316
        %v3061 = vmul.f32 %v2987, %v317
        %v3062 = vmul.f32 %v2991, %v318
        %v3063 = vmul.f32 %v2995, %v319
        %v3064 = vmul.f32 %v2999, %v320
        %v3065 = vmul.f32 %v3003, %v321
        %v3066 = vmul.f32 %v3007, %v322
        %v3067 = vmul.f32 %v3011, %v323
        %v3068 = vmul.f32 %v3015, %v324
        %v3069 = vmul.f32 %v3019, %v325
        %3070 = vset.pattern.permute.xlu0 11
        %3071 = vperm.xlu0 %3070, %v228
        %v3072 = vpop.permute.xlu0 %3071
        %3074 = vset.pattern.permute.xlu0 11
        %3075 = vperm.xlu0 %3074, %v229
        %v3076 = vpop.permute.xlu0 %3075
        %3078 = vset.pattern.permute.xlu0 11
        %3079 = vperm.xlu0 %3078, %v230
        %v3080 = vpop.permute.xlu0 %3079
        %3082 = vset.pattern.permute.xlu0 11
        %3083 = vperm.xlu0 %3082, %v231
        %v3084 = vpop.permute.xlu0 %3083
        %3086 = vset.pattern.permute.xlu0 11
        %3087 = vperm.xlu0 %3086, %v232
        %v3088 = vpop.permute.xlu0 %3087
        %3090 = vset.pattern.permute.xlu0 11
        %3091 = vperm.xlu0 %3090, %v233
        %v3092 = vpop.permute.xlu0 %3091
        %3094 = vset.pattern.permute.xlu0 11
        %3095 = vperm.xlu0 %3094, %v234
        %v3096 = vpop.permute.xlu0 %3095
        %3098 = vset.pattern.permute.xlu0 11
        %3099 = vperm.xlu0 %3098, %v235
        %v3100 = vpop.permute.xlu0 %3099
        %3102 = vset.pattern.permute.xlu0 11
        %3103 = vperm.xlu0 %3102, %v236
        %v3104 = vpop.permute.xlu0 %3103
        %3106 = vset.pattern.permute.xlu0 11
        %3107 = vperm.xlu0 %3106, %v237
        %v3108 = vpop.permute.xlu0 %3107
        %3110 = vset.pattern.permute.xlu0 11
        %3111 = vperm.xlu0 %3110, %v238
        %v3112 = vpop.permute.xlu0 %3111
        %3114 = vset.pattern.permute.xlu0 11
        %3115 = vperm.xlu0 %3114, %v239
        %v3116 = vpop.permute.xlu0 %3115
        %3118 = vset.pattern.permute.xlu0 11
        %3119 = vperm.xlu0 %3118, %v240
        %v3120 = vpop.permute.xlu0 %3119
        %3122 = vset.pattern.permute.xlu0 11
        %3123 = vperm.xlu0 %3122, %v241
        %v3124 = vpop.permute.xlu0 %3123
        %3126 = vset.pattern.permute.xlu0 11
        %3127 = vperm.xlu0 %3126, %v242
        %v3128 = vpop.permute.xlu0 %3127
        %3130 = vset.pattern.permute.xlu0 11
        %3131 = vperm.xlu0 %3130, %v243
        %v3132 = vpop.permute.xlu0 %3131
        %3134 = vset.pattern.permute.xlu0 11
        %3135 = vperm.xlu0 %3134, %v244
        %v3136 = vpop.permute.xlu0 %3135
        %3138 = vset.pattern.permute.xlu0 11
        %3139 = vperm.xlu0 %3138, %v245
        %v3140 = vpop.permute.xlu0 %3139
        %3142 = vset.pattern.permute.xlu0 11
        %3143 = vperm.xlu0 %3142, %v246
        %v3144 = vpop.permute.xlu0 %3143
        %3146 = vset.pattern.permute.xlu0 11
        %3147 = vperm.xlu0 %3146, %v247
        %v3148 = vpop.permute.xlu0 %3147
        %3150 = vset.pattern.permute.xlu0 11
        %3151 = vperm.xlu0 %3150, %v248
        %v3152 = vpop.permute.xlu0 %3151
        %3154 = vset.pattern.permute.xlu0 11
        %3155 = vperm.xlu0 %3154, %v249
        %v3156 = vpop.permute.xlu0 %3155
        %3158 = vset.pattern.permute.xlu0 11
        %3159 = vperm.xlu0 %3158, %v250
        %v3160 = vpop.permute.xlu0 %3159
        %3162 = vset.pattern.permute.xlu0 11
        %3163 = vperm.xlu0 %3162, %v251
        %v3164 = vpop.permute.xlu0 %3163
        %3166 = vset.pattern.permute.xlu0 11
        %3167 = vperm.xlu0 %3166, %v252
        %v3168 = vpop.permute.xlu0 %3167
        %3170 = vset.pattern.permute.xlu0 11
        %3171 = vperm.xlu0 %3170, %v253
        %v3172 = vpop.permute.xlu0 %3171
        %3174 = vset.pattern.permute.xlu0 11
        %3175 = vperm.xlu0 %3174, %v254
        %v3176 = vpop.permute.xlu0 %3175
        %3178 = vset.pattern.permute.xlu0 11
        %3179 = vperm.xlu0 %3178, %v255
        %v3180 = vpop.permute.xlu0 %3179
        %3182 = vset.pattern.permute.xlu0 11
        %3183 = vperm.xlu0 %3182, %v256
        %v3184 = vpop.permute.xlu0 %3183
        %3186 = vset.pattern.permute.xlu0 11
        %3187 = vperm.xlu0 %3186, %v257
        %v3188 = vpop.permute.xlu0 %3187
        %3190 = vset.pattern.permute.xlu0 11
        %3191 = vperm.xlu0 %3190, %v258
        %v3192 = vpop.permute.xlu0 %3191
        %3194 = vset.pattern.permute.xlu0 11
        %3195 = vperm.xlu0 %3194, %v259
        %v3196 = vpop.permute.xlu0 %3195
        %3198 = vset.pattern.permute.xlu0 11
        %3199 = vperm.xlu0 %3198, %v260
        %v3200 = vpop.permute.xlu0 %3199
        %3202 = vset.pattern.permute.xlu0 11
        %3203 = vperm.xlu0 %3202, %v261
        %v3204 = vpop.permute.xlu0 %3203
        %3206 = vset.pattern.permute.xlu0 11
        %3207 = vperm.xlu0 %3206, %v262
        %v3208 = vpop.permute.xlu0 %3207
        %3210 = vset.pattern.permute.xlu0 11
        %3211 = vperm.xlu0 %3210, %v263
        %v3212 = vpop.permute.xlu0 %3211
        %3214 = vset.pattern.permute.xlu0 11
        %3215 = vperm.xlu0 %3214, %v264
        %v3216 = vpop.permute.xlu0 %3215
        %3218 = vset.pattern.permute.xlu0 11
        %3219 = vperm.xlu0 %3218, %v265
        %v3220 = vpop.permute.xlu0 %3219
        %3222 = vset.pattern.permute.xlu0 11
        %3223 = vperm.xlu0 %3222, %v266
        %v3224 = vpop.permute.xlu0 %3223
        %3226 = vset.pattern.permute.xlu0 11
        %3227 = vperm.xlu0 %3226, %v267
        %v3228 = vpop.permute.xlu0 %3227
        %3230 = vset.pattern.permute.xlu0 11
        %3231 = vperm.xlu0 %3230, %v268
        %v3232 = vpop.permute.xlu0 %3231
        %3234 = vset.pattern.permute.xlu0 11
        %3235 = vperm.xlu0 %3234, %v269
        %v3236 = vpop.permute.xlu0 %3235
        %3238 = vset.pattern.permute.xlu0 11
        %3239 = vperm.xlu0 %3238, %v270
        %v3240 = vpop.permute.xlu0 %3239
        %3242 = vset.pattern.permute.xlu0 11
        %3243 = vperm.xlu0 %3242, %v271
        %v3244 = vpop.permute.xlu0 %3243
        %3246 = vset.pattern.permute.xlu0 11
        %3247 = vperm.xlu0 %3246, %v272
        %v3248 = vpop.permute.xlu0 %3247
        %3250 = vset.pattern.permute.xlu0 11
        %3251 = vperm.xlu0 %3250, %v273
        %v3252 = vpop.permute.xlu0 %3251
        %3254 = vset.pattern.permute.xlu0 11
        %3255 = vperm.xlu0 %3254, %v274
        %v3256 = vpop.permute.xlu0 %3255
        %3258 = vset.pattern.permute.xlu0 11
        %3259 = vperm.xlu0 %3258, %v275
        %v3260 = vpop.permute.xlu0 %3259
        %3262 = vset.pattern.permute.xlu0 11
        %3263 = vperm.xlu0 %3262, %v276
        %v3264 = vpop.permute.xlu0 %3263
        %v3266 = vmul.f32 %v3072, %v277
        %v3267 = vmul.f32 %v3076, %v278
        %v3268 = vmul.f32 %v3080, %v279
        %v3269 = vmul.f32 %v3084, %v280
        %v3270 = vmul.f32 %v3088, %v281
        %v3271 = vmul.f32 %v3092, %v282
        %v3272 = vmul.f32 %v3096, %v283
        %v3273 = vmul.f32 %v3100, %v284
        %v3274 = vmul.f32 %v3104, %v285
        %v3275 = vmul.f32 %v3108, %v286
        %v3276 = vmul.f32 %v3112, %v287
        %v3277 = vmul.f32 %v3116, %v288
        %v3278 = vmul.f32 %v3120, %v289
        %v3279 = vmul.f32 %v3124, %v290
        %v3280 = vmul.f32 %v3128, %v291
        %v3281 = vmul.f32 %v3132, %v292
        %v3282 = vmul.f32 %v3136, %v293
        %v3283 = vmul.f32 %v3140, %v294
        %v3284 = vmul.f32 %v3144, %v295
        %v3285 = vmul.f32 %v3148, %v296
        %v3286 = vmul.f32 %v3152, %v297
        %v3287 = vmul.f32 %v3156, %v298
        %v3288 = vmul.f32 %v3160, %v299
        %v3289 = vmul.f32 %v3164, %v300
        %v3290 = vmul.f32 %v3168, %v301
        %v3291 = vmul.f32 %v3172, %v302
        %v3292 = vmul.f32 %v3176, %v303
        %v3293 = vmul.f32 %v3180, %v304
        %v3294 = vmul.f32 %v3184, %v305
        %v3295 = vmul.f32 %v3188, %v306
        %v3296 = vmul.f32 %v3192, %v307
        %v3297 = vmul.f32 %v3196, %v308
        %v3298 = vmul.f32 %v3200, %v309
        %v3299 = vmul.f32 %v3204, %v310
        %v3300 = vmul.f32 %v3208, %v311
        %v3301 = vmul.f32 %v3212, %v312
        %v3302 = vmul.f32 %v3216, %v313
        %v3303 = vmul.f32 %v3220, %v314
        %v3304 = vmul.f32 %v3224, %v315
        %v3305 = vmul.f32 %v3228, %v316
        %v3306 = vmul.f32 %v3232, %v317
        %v3307 = vmul.f32 %v3236, %v318
        %v3308 = vmul.f32 %v3240, %v319
        %v3309 = vmul.f32 %v3244, %v320
        %v3310 = vmul.f32 %v3248, %v321
        %v3311 = vmul.f32 %v3252, %v322
        %v3312 = vmul.f32 %v3256, %v323
        %v3313 = vmul.f32 %v3260, %v324
        %v3314 = vmul.f32 %v3264, %v325
        %3315 = vset.pattern.permute.xlu0 12
        %3316 = vperm.xlu0 %3315, %v228
        %v3317 = vpop.permute.xlu0 %3316
        %3319 = vset.pattern.permute.xlu0 12
        %3320 = vperm.xlu0 %3319, %v229
        %v3321 = vpop.permute.xlu0 %3320
        %3323 = vset.pattern.permute.xlu0 12
        %3324 = vperm.xlu0 %3323, %v230
        %v3325 = vpop.permute.xlu0 %3324
        %3327 = vset.pattern.permute.xlu0 12
        %3328 = vperm.xlu0 %3327, %v231
        %v3329 = vpop.permute.xlu0 %3328
        %3331 = vset.pattern.permute.xlu0 12
        %3332 = vperm.xlu0 %3331, %v232
        %v3333 = vpop.permute.xlu0 %3332
        %3335 = vset.pattern.permute.xlu0 12
        %3336 = vperm.xlu0 %3335, %v233
        %v3337 = vpop.permute.xlu0 %3336
        %3339 = vset.pattern.permute.xlu0 12
        %3340 = vperm.xlu0 %3339, %v234
        %v3341 = vpop.permute.xlu0 %3340
        %3343 = vset.pattern.permute.xlu0 12
        %3344 = vperm.xlu0 %3343, %v235
        %v3345 = vpop.permute.xlu0 %3344
        %3347 = vset.pattern.permute.xlu0 12
        %3348 = vperm.xlu0 %3347, %v236
        %v3349 = vpop.permute.xlu0 %3348
        %3351 = vset.pattern.permute.xlu0 12
        %3352 = vperm.xlu0 %3351, %v237
        %v3353 = vpop.permute.xlu0 %3352
        %3355 = vset.pattern.permute.xlu0 12
        %3356 = vperm.xlu0 %3355, %v238
        %v3357 = vpop.permute.xlu0 %3356
        %3359 = vset.pattern.permute.xlu0 12
        %3360 = vperm.xlu0 %3359, %v239
        %v3361 = vpop.permute.xlu0 %3360
        %3363 = vset.pattern.permute.xlu0 12
        %3364 = vperm.xlu0 %3363, %v240
        %v3365 = vpop.permute.xlu0 %3364
        %3367 = vset.pattern.permute.xlu0 12
        %3368 = vperm.xlu0 %3367, %v241
        %v3369 = vpop.permute.xlu0 %3368
        %3371 = vset.pattern.permute.xlu0 12
        %3372 = vperm.xlu0 %3371, %v242
        %v3373 = vpop.permute.xlu0 %3372
        %3375 = vset.pattern.permute.xlu0 12
        %3376 = vperm.xlu0 %3375, %v243
        %v3377 = vpop.permute.xlu0 %3376
        %3379 = vset.pattern.permute.xlu0 12
        %3380 = vperm.xlu0 %3379, %v244
        %v3381 = vpop.permute.xlu0 %3380
        %3383 = vset.pattern.permute.xlu0 12
        %3384 = vperm.xlu0 %3383, %v245
        %v3385 = vpop.permute.xlu0 %3384
        %3387 = vset.pattern.permute.xlu0 12
        %3388 = vperm.xlu0 %3387, %v246
        %v3389 = vpop.permute.xlu0 %3388
        %3391 = vset.pattern.permute.xlu0 12
        %3392 = vperm.xlu0 %3391, %v247
        %v3393 = vpop.permute.xlu0 %3392
        %3395 = vset.pattern.permute.xlu0 12
        %3396 = vperm.xlu0 %3395, %v248
        %v3397 = vpop.permute.xlu0 %3396
        %3399 = vset.pattern.permute.xlu0 12
        %3400 = vperm.xlu0 %3399, %v249
        %v3401 = vpop.permute.xlu0 %3400
        %3403 = vset.pattern.permute.xlu0 12
        %3404 = vperm.xlu0 %3403, %v250
        %v3405 = vpop.permute.xlu0 %3404
        %3407 = vset.pattern.permute.xlu0 12
        %3408 = vperm.xlu0 %3407, %v251
        %v3409 = vpop.permute.xlu0 %3408
        %3411 = vset.pattern.permute.xlu0 12
        %3412 = vperm.xlu0 %3411, %v252
        %v3413 = vpop.permute.xlu0 %3412
        %3415 = vset.pattern.permute.xlu0 12
        %3416 = vperm.xlu0 %3415, %v253
        %v3417 = vpop.permute.xlu0 %3416
        %3419 = vset.pattern.permute.xlu0 12
        %3420 = vperm.xlu0 %3419, %v254
        %v3421 = vpop.permute.xlu0 %3420
        %3423 = vset.pattern.permute.xlu0 12
        %3424 = vperm.xlu0 %3423, %v255
        %v3425 = vpop.permute.xlu0 %3424
        %3427 = vset.pattern.permute.xlu0 12
        %3428 = vperm.xlu0 %3427, %v256
        %v3429 = vpop.permute.xlu0 %3428
        %3431 = vset.pattern.permute.xlu0 12
        %3432 = vperm.xlu0 %3431, %v257
        %v3433 = vpop.permute.xlu0 %3432
        %3435 = vset.pattern.permute.xlu0 12
        %3436 = vperm.xlu0 %3435, %v258
        %v3437 = vpop.permute.xlu0 %3436
        %3439 = vset.pattern.permute.xlu0 12
        %3440 = vperm.xlu0 %3439, %v259
        %v3441 = vpop.permute.xlu0 %3440
        %3443 = vset.pattern.permute.xlu0 12
        %3444 = vperm.xlu0 %3443, %v260
        %v3445 = vpop.permute.xlu0 %3444
        %3447 = vset.pattern.permute.xlu0 12
        %3448 = vperm.xlu0 %3447, %v261
        %v3449 = vpop.permute.xlu0 %3448
        %3451 = vset.pattern.permute.xlu0 12
        %3452 = vperm.xlu0 %3451, %v262
        %v3453 = vpop.permute.xlu0 %3452
        %3455 = vset.pattern.permute.xlu0 12
        %3456 = vperm.xlu0 %3455, %v263
        %v3457 = vpop.permute.xlu0 %3456
        %3459 = vset.pattern.permute.xlu0 12
        %3460 = vperm.xlu0 %3459, %v264
        %v3461 = vpop.permute.xlu0 %3460
        %3463 = vset.pattern.permute.xlu0 12
        %3464 = vperm.xlu0 %3463, %v265
        %v3465 = vpop.permute.xlu0 %3464
        %3467 = vset.pattern.permute.xlu0 12
        %3468 = vperm.xlu0 %3467, %v266
        %v3469 = vpop.permute.xlu0 %3468
        %3471 = vset.pattern.permute.xlu0 12
        %3472 = vperm.xlu0 %3471, %v267
        %v3473 = vpop.permute.xlu0 %3472
        %3475 = vset.pattern.permute.xlu0 12
        %3476 = vperm.xlu0 %3475, %v268
        %v3477 = vpop.permute.xlu0 %3476
        %3479 = vset.pattern.permute.xlu0 12
        %3480 = vperm.xlu0 %3479, %v269
        %v3481 = vpop.permute.xlu0 %3480
        %3483 = vset.pattern.permute.xlu0 12
        %3484 = vperm.xlu0 %3483, %v270
        %v3485 = vpop.permute.xlu0 %3484
        %3487 = vset.pattern.permute.xlu0 12
        %3488 = vperm.xlu0 %3487, %v271
        %v3489 = vpop.permute.xlu0 %3488
        %3491 = vset.pattern.permute.xlu0 12
        %3492 = vperm.xlu0 %3491, %v272
        %v3493 = vpop.permute.xlu0 %3492
        %3495 = vset.pattern.permute.xlu0 12
        %3496 = vperm.xlu0 %3495, %v273
        %v3497 = vpop.permute.xlu0 %3496
        %3499 = vset.pattern.permute.xlu0 12
        %3500 = vperm.xlu0 %3499, %v274
        %v3501 = vpop.permute.xlu0 %3500
        %3503 = vset.pattern.permute.xlu0 12
        %3504 = vperm.xlu0 %3503, %v275
        %v3505 = vpop.permute.xlu0 %3504
        %3507 = vset.pattern.permute.xlu0 12
        %3508 = vperm.xlu0 %3507, %v276
        %v3509 = vpop.permute.xlu0 %3508
        %v3511 = vmul.f32 %v3317, %v277
        %v3512 = vmul.f32 %v3321, %v278
        %v3513 = vmul.f32 %v3325, %v279
        %v3514 = vmul.f32 %v3329, %v280
        %v3515 = vmul.f32 %v3333, %v281
        %v3516 = vmul.f32 %v3337, %v282
        %v3517 = vmul.f32 %v3341, %v283
        %v3518 = vmul.f32 %v3345, %v284
        %v3519 = vmul.f32 %v3349, %v285
        %v3520 = vmul.f32 %v3353, %v286
        %v3521 = vmul.f32 %v3357, %v287
        %v3522 = vmul.f32 %v3361, %v288
        %v3523 = vmul.f32 %v3365, %v289
        %v3524 = vmul.f32 %v3369, %v290
        %v3525 = vmul.f32 %v3373, %v291
        %v3526 = vmul.f32 %v3377, %v292
        %v3527 = vmul.f32 %v3381, %v293
        %v3528 = vmul.f32 %v3385, %v294
        %v3529 = vmul.f32 %v3389, %v295
        %v3530 = vmul.f32 %v3393, %v296
        %v3531 = vmul.f32 %v3397, %v297
        %v3532 = vmul.f32 %v3401, %v298
        %v3533 = vmul.f32 %v3405, %v299
        %v3534 = vmul.f32 %v3409, %v300
        %v3535 = vmul.f32 %v3413, %v301
        %v3536 = vmul.f32 %v3417, %v302
        %v3537 = vmul.f32 %v3421, %v303
        %v3538 = vmul.f32 %v3425, %v304
        %v3539 = vmul.f32 %v3429, %v305
        %v3540 = vmul.f32 %v3433, %v306
        %v3541 = vmul.f32 %v3437, %v307
        %v3542 = vmul.f32 %v3441, %v308
        %v3543 = vmul.f32 %v3445, %v309
        %v3544 = vmul.f32 %v3449, %v310
        %v3545 = vmul.f32 %v3453, %v311
        %v3546 = vmul.f32 %v3457, %v312
        %v3547 = vmul.f32 %v3461, %v313
        %v3548 = vmul.f32 %v3465, %v314
        %v3549 = vmul.f32 %v3469, %v315
        %v3550 = vmul.f32 %v3473, %v316
        %v3551 = vmul.f32 %v3477, %v317
        %v3552 = vmul.f32 %v3481, %v318
        %v3553 = vmul.f32 %v3485, %v319
        %v3554 = vmul.f32 %v3489, %v320
        %v3555 = vmul.f32 %v3493, %v321
        %v3556 = vmul.f32 %v3497, %v322
        %v3557 = vmul.f32 %v3501, %v323
        %v3558 = vmul.f32 %v3505, %v324
        %v3559 = vmul.f32 %v3509, %v325
        %3560 = vset.pattern.permute.xlu0 13
        %3561 = vperm.xlu0 %3560, %v228
        %v3562 = vpop.permute.xlu0 %3561
        %3564 = vset.pattern.permute.xlu0 13
        %3565 = vperm.xlu0 %3564, %v229
        %v3566 = vpop.permute.xlu0 %3565
        %3568 = vset.pattern.permute.xlu0 13
        %3569 = vperm.xlu0 %3568, %v230
        %v3570 = vpop.permute.xlu0 %3569
        %3572 = vset.pattern.permute.xlu0 13
        %3573 = vperm.xlu0 %3572, %v231
        %v3574 = vpop.permute.xlu0 %3573
        %3576 = vset.pattern.permute.xlu0 13
        %3577 = vperm.xlu0 %3576, %v232
        %v3578 = vpop.permute.xlu0 %3577
        %3580 = vset.pattern.permute.xlu0 13
        %3581 = vperm.xlu0 %3580, %v233
        %v3582 = vpop.permute.xlu0 %3581
        %3584 = vset.pattern.permute.xlu0 13
        %3585 = vperm.xlu0 %3584, %v234
        %v3586 = vpop.permute.xlu0 %3585
        %3588 = vset.pattern.permute.xlu0 13
        %3589 = vperm.xlu0 %3588, %v235
        %v3590 = vpop.permute.xlu0 %3589
        %3592 = vset.pattern.permute.xlu0 13
        %3593 = vperm.xlu0 %3592, %v236
        %v3594 = vpop.permute.xlu0 %3593
        %3596 = vset.pattern.permute.xlu0 13
        %3597 = vperm.xlu0 %3596, %v237
        %v3598 = vpop.permute.xlu0 %3597
        %3600 = vset.pattern.permute.xlu0 13
        %3601 = vperm.xlu0 %3600, %v238
        %v3602 = vpop.permute.xlu0 %3601
        %3604 = vset.pattern.permute.xlu0 13
        %3605 = vperm.xlu0 %3604, %v239
        %v3606 = vpop.permute.xlu0 %3605
        %3608 = vset.pattern.permute.xlu0 13
        %3609 = vperm.xlu0 %3608, %v240
        %v3610 = vpop.permute.xlu0 %3609
        %3612 = vset.pattern.permute.xlu0 13
        %3613 = vperm.xlu0 %3612, %v241
        %v3614 = vpop.permute.xlu0 %3613
        %3616 = vset.pattern.permute.xlu0 13
        %3617 = vperm.xlu0 %3616, %v242
        %v3618 = vpop.permute.xlu0 %3617
        %3620 = vset.pattern.permute.xlu0 13
        %3621 = vperm.xlu0 %3620, %v243
        %v3622 = vpop.permute.xlu0 %3621
        %3624 = vset.pattern.permute.xlu0 13
        %3625 = vperm.xlu0 %3624, %v244
        %v3626 = vpop.permute.xlu0 %3625
        %3628 = vset.pattern.permute.xlu0 13
        %3629 = vperm.xlu0 %3628, %v245
        %v3630 = vpop.permute.xlu0 %3629
        %3632 = vset.pattern.permute.xlu0 13
        %3633 = vperm.xlu0 %3632, %v246
        %v3634 = vpop.permute.xlu0 %3633
        %3636 = vset.pattern.permute.xlu0 13
        %3637 = vperm.xlu0 %3636, %v247
        %v3638 = vpop.permute.xlu0 %3637
        %3640 = vset.pattern.permute.xlu0 13
        %3641 = vperm.xlu0 %3640, %v248
        %v3642 = vpop.permute.xlu0 %3641
        %3644 = vset.pattern.permute.xlu0 13
        %3645 = vperm.xlu0 %3644, %v249
        %v3646 = vpop.permute.xlu0 %3645
        %3648 = vset.pattern.permute.xlu0 13
        %3649 = vperm.xlu0 %3648, %v250
        %v3650 = vpop.permute.xlu0 %3649
        %3652 = vset.pattern.permute.xlu0 13
        %3653 = vperm.xlu0 %3652, %v251
        %v3654 = vpop.permute.xlu0 %3653
        %3656 = vset.pattern.permute.xlu0 13
        %3657 = vperm.xlu0 %3656, %v252
        %v3658 = vpop.permute.xlu0 %3657
        %3660 = vset.pattern.permute.xlu0 13
        %3661 = vperm.xlu0 %3660, %v253
        %v3662 = vpop.permute.xlu0 %3661
        %3664 = vset.pattern.permute.xlu0 13
        %3665 = vperm.xlu0 %3664, %v254
        %v3666 = vpop.permute.xlu0 %3665
        %3668 = vset.pattern.permute.xlu0 13
        %3669 = vperm.xlu0 %3668, %v255
        %v3670 = vpop.permute.xlu0 %3669
        %3672 = vset.pattern.permute.xlu0 13
        %3673 = vperm.xlu0 %3672, %v256
        %v3674 = vpop.permute.xlu0 %3673
        %3676 = vset.pattern.permute.xlu0 13
        %3677 = vperm.xlu0 %3676, %v257
        %v3678 = vpop.permute.xlu0 %3677
        %3680 = vset.pattern.permute.xlu0 13
        %3681 = vperm.xlu0 %3680, %v258
        %v3682 = vpop.permute.xlu0 %3681
        %3684 = vset.pattern.permute.xlu0 13
        %3685 = vperm.xlu0 %3684, %v259
        %v3686 = vpop.permute.xlu0 %3685
        %3688 = vset.pattern.permute.xlu0 13
        %3689 = vperm.xlu0 %3688, %v260
        %v3690 = vpop.permute.xlu0 %3689
        %3692 = vset.pattern.permute.xlu0 13
        %3693 = vperm.xlu0 %3692, %v261
        %v3694 = vpop.permute.xlu0 %3693
        %3696 = vset.pattern.permute.xlu0 13
        %3697 = vperm.xlu0 %3696, %v262
        %v3698 = vpop.permute.xlu0 %3697
        %3700 = vset.pattern.permute.xlu0 13
        %3701 = vperm.xlu0 %3700, %v263
        %v3702 = vpop.permute.xlu0 %3701
        %3704 = vset.pattern.permute.xlu0 13
        %3705 = vperm.xlu0 %3704, %v264
        %v3706 = vpop.permute.xlu0 %3705
        %3708 = vset.pattern.permute.xlu0 13
        %3709 = vperm.xlu0 %3708, %v265
        %v3710 = vpop.permute.xlu0 %3709
        %3712 = vset.pattern.permute.xlu0 13
        %3713 = vperm.xlu0 %3712, %v266
        %v3714 = vpop.permute.xlu0 %3713
        %3716 = vset.pattern.permute.xlu0 13
        %3717 = vperm.xlu0 %3716, %v267
        %v3718 = vpop.permute.xlu0 %3717
        %3720 = vset.pattern.permute.xlu0 13
        %3721 = vperm.xlu0 %3720, %v268
        %v3722 = vpop.permute.xlu0 %3721
        %3724 = vset.pattern.permute.xlu0 13
        %3725 = vperm.xlu0 %3724, %v269
        %v3726 = vpop.permute.xlu0 %3725
        %3728 = vset.pattern.permute.xlu0 13
        %3729 = vperm.xlu0 %3728, %v270
        %v3730 = vpop.permute.xlu0 %3729
        %3732 = vset.pattern.permute.xlu0 13
        %3733 = vperm.xlu0 %3732, %v271
        %v3734 = vpop.permute.xlu0 %3733
        %3736 = vset.pattern.permute.xlu0 13
        %3737 = vperm.xlu0 %3736, %v272
        %v3738 = vpop.permute.xlu0 %3737
        %3740 = vset.pattern.permute.xlu0 13
        %3741 = vperm.xlu0 %3740, %v273
        %v3742 = vpop.permute.xlu0 %3741
        %3744 = vset.pattern.permute.xlu0 13
        %3745 = vperm.xlu0 %3744, %v274
        %v3746 = vpop.permute.xlu0 %3745
        %3748 = vset.pattern.permute.xlu0 13
        %3749 = vperm.xlu0 %3748, %v275
        %v3750 = vpop.permute.xlu0 %3749
        %3752 = vset.pattern.permute.xlu0 13
        %3753 = vperm.xlu0 %3752, %v276
        %v3754 = vpop.permute.xlu0 %3753
        %v3756 = vmul.f32 %v3562, %v277
        %v3757 = vmul.f32 %v3566, %v278
        %v3758 = vmul.f32 %v3570, %v279
        %v3759 = vmul.f32 %v3574, %v280
        %v3760 = vmul.f32 %v3578, %v281
        %v3761 = vmul.f32 %v3582, %v282
        %v3762 = vmul.f32 %v3586, %v283
        %v3763 = vmul.f32 %v3590, %v284
        %v3764 = vmul.f32 %v3594, %v285
        %v3765 = vmul.f32 %v3598, %v286
        %v3766 = vmul.f32 %v3602, %v287
        %v3767 = vmul.f32 %v3606, %v288
        %v3768 = vmul.f32 %v3610, %v289
        %v3769 = vmul.f32 %v3614, %v290
        %v3770 = vmul.f32 %v3618, %v291
        %v3771 = vmul.f32 %v3622, %v292
        %v3772 = vmul.f32 %v3626, %v293
        %v3773 = vmul.f32 %v3630, %v294
        %v3774 = vmul.f32 %v3634, %v295
        %v3775 = vmul.f32 %v3638, %v296
        %v3776 = vmul.f32 %v3642, %v297
        %v3777 = vmul.f32 %v3646, %v298
        %v3778 = vmul.f32 %v3650, %v299
        %v3779 = vmul.f32 %v3654, %v300
        %v3780 = vmul.f32 %v3658, %v301
        %v3781 = vmul.f32 %v3662, %v302
        %v3782 = vmul.f32 %v3666, %v303
        %v3783 = vmul.f32 %v3670, %v304
        %v3784 = vmul.f32 %v3674, %v305
        %v3785 = vmul.f32 %v3678, %v306
        %v3786 = vmul.f32 %v3682, %v307
        %v3787 = vmul.f32 %v3686, %v308
        %v3788 = vmul.f32 %v3690, %v309
        %v3789 = vmul.f32 %v3694, %v310
        %v3790 = vmul.f32 %v3698, %v311
        %v3791 = vmul.f32 %v3702, %v312
        %v3792 = vmul.f32 %v3706, %v313
        %v3793 = vmul.f32 %v3710, %v314
        %v3794 = vmul.f32 %v3714, %v315
        %v3795 = vmul.f32 %v3718, %v316
        %v3796 = vmul.f32 %v3722, %v317
        %v3797 = vmul.f32 %v3726, %v318
        %v3798 = vmul.f32 %v3730, %v319
        %v3799 = vmul.f32 %v3734, %v320
        %v3800 = vmul.f32 %v3738, %v321
        %v3801 = vmul.f32 %v3742, %v322
        %v3802 = vmul.f32 %v3746, %v323
        %v3803 = vmul.f32 %v3750, %v324
        %v3804 = vmul.f32 %v3754, %v325
        %3854 = vrot.lane.b32.xlu0 %v816, 14
        %v3855 = vpop.permute.xlu0 %3854
        %3856 = vrot.lane.b32.xlu0 %v817, 14
        %v3857 = vpop.permute.xlu0 %3856
        %3858 = vrot.lane.b32.xlu0 %v818, 14
        %v3859 = vpop.permute.xlu0 %3858
        %3860 = vrot.lane.b32.xlu0 %v819, 14
        %v3861 = vpop.permute.xlu0 %3860
        %3862 = vrot.lane.b32.xlu0 %v820, 14
        %v3863 = vpop.permute.xlu0 %3862
        %3864 = vrot.lane.b32.xlu0 %v821, 14
        %v3865 = vpop.permute.xlu0 %3864
        %3866 = vrot.lane.b32.xlu0 %v822, 14
        %v3867 = vpop.permute.xlu0 %3866
        %3868 = vrot.lane.b32.xlu0 %v823, 14
        %v3869 = vpop.permute.xlu0 %3868
        %3870 = vrot.lane.b32.xlu0 %v824, 14
        %v3871 = vpop.permute.xlu0 %3870
        %3872 = vrot.lane.b32.xlu0 %v825, 14
        %v3873 = vpop.permute.xlu0 %3872
        %3874 = vrot.lane.b32.xlu0 %v826, 14
        %v3875 = vpop.permute.xlu0 %3874
        %3876 = vrot.lane.b32.xlu0 %v827, 14
        %v3877 = vpop.permute.xlu0 %3876
        %3878 = vrot.lane.b32.xlu0 %v828, 14
        %v3879 = vpop.permute.xlu0 %3878
        %3880 = vrot.lane.b32.xlu0 %v829, 14
        %v3881 = vpop.permute.xlu0 %3880
        %3882 = vrot.lane.b32.xlu0 %v830, 14
        %v3883 = vpop.permute.xlu0 %3882
        %3884 = vrot.lane.b32.xlu0 %v831, 14
        %v3885 = vpop.permute.xlu0 %3884
        %3886 = vrot.lane.b32.xlu0 %v832, 14
        %v3887 = vpop.permute.xlu0 %3886
        %3888 = vrot.lane.b32.xlu0 %v833, 14
        %v3889 = vpop.permute.xlu0 %3888
        %3890 = vrot.lane.b32.xlu0 %v834, 14
        %v3891 = vpop.permute.xlu0 %3890
        %3892 = vrot.lane.b32.xlu0 %v835, 14
        %v3893 = vpop.permute.xlu0 %3892
        %3894 = vrot.lane.b32.xlu0 %v836, 14
        %v3895 = vpop.permute.xlu0 %3894
        %3896 = vrot.lane.b32.xlu0 %v837, 14
        %v3897 = vpop.permute.xlu0 %3896
        %3898 = vrot.lane.b32.xlu0 %v838, 14
        %v3899 = vpop.permute.xlu0 %3898
        %3900 = vrot.lane.b32.xlu0 %v839, 14
        %v3901 = vpop.permute.xlu0 %3900
        %3902 = vrot.lane.b32.xlu0 %v840, 14
        %v3903 = vpop.permute.xlu0 %3902
        %3904 = vrot.lane.b32.xlu0 %v841, 14
        %v3905 = vpop.permute.xlu0 %3904
        %3906 = vrot.lane.b32.xlu0 %v842, 14
        %v3907 = vpop.permute.xlu0 %3906
        %3908 = vrot.lane.b32.xlu0 %v843, 14
        %v3909 = vpop.permute.xlu0 %3908
        %3910 = vrot.lane.b32.xlu0 %v844, 14
        %v3911 = vpop.permute.xlu0 %3910
        %3912 = vrot.lane.b32.xlu0 %v845, 14
        %v3913 = vpop.permute.xlu0 %3912
        %3914 = vrot.lane.b32.xlu0 %v846, 14
        %v3915 = vpop.permute.xlu0 %3914
        %3916 = vrot.lane.b32.xlu0 %v847, 14
        %v3917 = vpop.permute.xlu0 %3916
        %3918 = vrot.lane.b32.xlu0 %v848, 14
        %v3919 = vpop.permute.xlu0 %3918
        %3920 = vrot.lane.b32.xlu0 %v849, 14
        %v3921 = vpop.permute.xlu0 %3920
        %3922 = vrot.lane.b32.xlu0 %v850, 14
        %v3923 = vpop.permute.xlu0 %3922
        %3924 = vrot.lane.b32.xlu0 %v851, 14
        %v3925 = vpop.permute.xlu0 %3924
        %3926 = vrot.lane.b32.xlu0 %v852, 14
        %v3927 = vpop.permute.xlu0 %3926
        %3928 = vrot.lane.b32.xlu0 %v853, 14
        %v3929 = vpop.permute.xlu0 %3928
        %3930 = vrot.lane.b32.xlu0 %v854, 14
        %v3931 = vpop.permute.xlu0 %3930
        %3932 = vrot.lane.b32.xlu0 %v855, 14
        %v3933 = vpop.permute.xlu0 %3932
        %3934 = vrot.lane.b32.xlu0 %v856, 14
        %v3935 = vpop.permute.xlu0 %3934
        %3936 = vrot.lane.b32.xlu0 %v857, 14
        %v3937 = vpop.permute.xlu0 %3936
        %3938 = vrot.lane.b32.xlu0 %v858, 14
        %v3939 = vpop.permute.xlu0 %3938
        %3940 = vrot.lane.b32.xlu0 %v859, 14
        %v3941 = vpop.permute.xlu0 %3940
        %3942 = vrot.lane.b32.xlu0 %v860, 14
        %v3943 = vpop.permute.xlu0 %3942
        %3944 = vrot.lane.b32.xlu0 %v861, 14
        %v3945 = vpop.permute.xlu0 %3944
        %3946 = vrot.lane.b32.xlu0 %v862, 14
        %v3947 = vpop.permute.xlu0 %3946
        %3948 = vrot.lane.b32.xlu0 %v863, 14
        %v3949 = vpop.permute.xlu0 %3948
        %3950 = vrot.lane.b32.xlu0 %v864, 14
        %v3951 = vpop.permute.xlu0 %3950
        %4050 = vrot.lane.b32.xlu0 %v1061, 28
        %v4051 = vpop.permute.xlu0 %4050
        %4052 = vrot.lane.b32.xlu0 %v1062, 28
        %v4053 = vpop.permute.xlu0 %4052
        %4054 = vrot.lane.b32.xlu0 %v1063, 28
        %v4055 = vpop.permute.xlu0 %4054
        %4056 = vrot.lane.b32.xlu0 %v1064, 28
        %v4057 = vpop.permute.xlu0 %4056
        %4058 = vrot.lane.b32.xlu0 %v1065, 28
        %v4059 = vpop.permute.xlu0 %4058
        %4060 = vrot.lane.b32.xlu0 %v1066, 28
        %v4061 = vpop.permute.xlu0 %4060
        %4062 = vrot.lane.b32.xlu0 %v1067, 28
        %v4063 = vpop.permute.xlu0 %4062
        %4064 = vrot.lane.b32.xlu0 %v1068, 28
        %v4065 = vpop.permute.xlu0 %4064
        %4066 = vrot.lane.b32.xlu0 %v1069, 28
        %v4067 = vpop.permute.xlu0 %4066
        %4068 = vrot.lane.b32.xlu0 %v1070, 28
        %v4069 = vpop.permute.xlu0 %4068
        %4070 = vrot.lane.b32.xlu0 %v1071, 28
        %v4071 = vpop.permute.xlu0 %4070
        %4072 = vrot.lane.b32.xlu0 %v1072, 28
        %v4073 = vpop.permute.xlu0 %4072
        %4074 = vrot.lane.b32.xlu0 %v1073, 28
        %v4075 = vpop.permute.xlu0 %4074
        %4076 = vrot.lane.b32.xlu0 %v1074, 28
        %v4077 = vpop.permute.xlu0 %4076
        %4078 = vrot.lane.b32.xlu0 %v1075, 28
        %v4079 = vpop.permute.xlu0 %4078
        %4080 = vrot.lane.b32.xlu0 %v1076, 28
        %v4081 = vpop.permute.xlu0 %4080
        %4082 = vrot.lane.b32.xlu0 %v1077, 28
        %v4083 = vpop.permute.xlu0 %4082
        %4084 = vrot.lane.b32.xlu0 %v1078, 28
        %v4085 = vpop.permute.xlu0 %4084
        %4086 = vrot.lane.b32.xlu0 %v1079, 28
        %v4087 = vpop.permute.xlu0 %4086
        %4088 = vrot.lane.b32.xlu0 %v1080, 28
        %v4089 = vpop.permute.xlu0 %4088
        %4090 = vrot.lane.b32.xlu0 %v1081, 28
        %v4091 = vpop.permute.xlu0 %4090
        %4092 = vrot.lane.b32.xlu0 %v1082, 28
        %v4093 = vpop.permute.xlu0 %4092
        %4094 = vrot.lane.b32.xlu0 %v1083, 28
        %v4095 = vpop.permute.xlu0 %4094
        %4096 = vrot.lane.b32.xlu0 %v1084, 28
        %v4097 = vpop.permute.xlu0 %4096
        %4098 = vrot.lane.b32.xlu0 %v1085, 28
        %v4099 = vpop.permute.xlu0 %4098
        %4100 = vrot.lane.b32.xlu0 %v1086, 28
        %v4101 = vpop.permute.xlu0 %4100
        %4102 = vrot.lane.b32.xlu0 %v1087, 28
        %v4103 = vpop.permute.xlu0 %4102
        %4104 = vrot.lane.b32.xlu0 %v1088, 28
        %v4105 = vpop.permute.xlu0 %4104
        %4106 = vrot.lane.b32.xlu0 %v1089, 28
        %v4107 = vpop.permute.xlu0 %4106
        %4108 = vrot.lane.b32.xlu0 %v1090, 28
        %v4109 = vpop.permute.xlu0 %4108
        %4110 = vrot.lane.b32.xlu0 %v1091, 28
        %v4111 = vpop.permute.xlu0 %4110
        %4112 = vrot.lane.b32.xlu0 %v1092, 28
        %v4113 = vpop.permute.xlu0 %4112
        %4114 = vrot.lane.b32.xlu0 %v1093, 28
        %v4115 = vpop.permute.xlu0 %4114
        %4116 = vrot.lane.b32.xlu0 %v1094, 28
        %v4117 = vpop.permute.xlu0 %4116
        %4118 = vrot.lane.b32.xlu0 %v1095, 28
        %v4119 = vpop.permute.xlu0 %4118
        %4120 = vrot.lane.b32.xlu0 %v1096, 28
        %v4121 = vpop.permute.xlu0 %4120
        %4122 = vrot.lane.b32.xlu0 %v1097, 28
        %v4123 = vpop.permute.xlu0 %4122
        %4124 = vrot.lane.b32.xlu0 %v1098, 28
        %v4125 = vpop.permute.xlu0 %4124
        %4126 = vrot.lane.b32.xlu0 %v1099, 28
        %v4127 = vpop.permute.xlu0 %4126
        %4128 = vrot.lane.b32.xlu0 %v1100, 28
        %v4129 = vpop.permute.xlu0 %4128
        %4130 = vrot.lane.b32.xlu0 %v1101, 28
        %v4131 = vpop.permute.xlu0 %4130
        %4132 = vrot.lane.b32.xlu0 %v1102, 28
        %v4133 = vpop.permute.xlu0 %4132
        %4134 = vrot.lane.b32.xlu0 %v1103, 28
        %v4135 = vpop.permute.xlu0 %4134
        %4136 = vrot.lane.b32.xlu0 %v1104, 28
        %v4137 = vpop.permute.xlu0 %4136
        %4138 = vrot.lane.b32.xlu0 %v1105, 28
        %v4139 = vpop.permute.xlu0 %4138
        %4140 = vrot.lane.b32.xlu0 %v1106, 28
        %v4141 = vpop.permute.xlu0 %4140
        %4142 = vrot.lane.b32.xlu0 %v1107, 28
        %v4143 = vpop.permute.xlu0 %4142
        %4144 = vrot.lane.b32.xlu0 %v1108, 28
        %v4145 = vpop.permute.xlu0 %4144
        %4146 = vrot.lane.b32.xlu0 %v1109, 28
        %v4147 = vpop.permute.xlu0 %4146
        %4246 = vrot.lane.b32.xlu0 %v1306, 42
        %v4247 = vpop.permute.xlu0 %4246
        %4248 = vrot.lane.b32.xlu0 %v1307, 42
        %v4249 = vpop.permute.xlu0 %4248
        %4250 = vrot.lane.b32.xlu0 %v1308, 42
        %v4251 = vpop.permute.xlu0 %4250
        %4252 = vrot.lane.b32.xlu0 %v1309, 42
        %v4253 = vpop.permute.xlu0 %4252
        %4254 = vrot.lane.b32.xlu0 %v1310, 42
        %v4255 = vpop.permute.xlu0 %4254
        %4256 = vrot.lane.b32.xlu0 %v1311, 42
        %v4257 = vpop.permute.xlu0 %4256
        %4258 = vrot.lane.b32.xlu0 %v1312, 42
        %v4259 = vpop.permute.xlu0 %4258
        %4260 = vrot.lane.b32.xlu0 %v1313, 42
        %v4261 = vpop.permute.xlu0 %4260
        %4262 = vrot.lane.b32.xlu0 %v1314, 42
        %v4263 = vpop.permute.xlu0 %4262
        %4264 = vrot.lane.b32.xlu0 %v1315, 42
        %v4265 = vpop.permute.xlu0 %4264
        %4266 = vrot.lane.b32.xlu0 %v1316, 42
        %v4267 = vpop.permute.xlu0 %4266
        %4268 = vrot.lane.b32.xlu0 %v1317, 42
        %v4269 = vpop.permute.xlu0 %4268
        %4270 = vrot.lane.b32.xlu0 %v1318, 42
        %v4271 = vpop.permute.xlu0 %4270
        %4272 = vrot.lane.b32.xlu0 %v1319, 42
        %v4273 = vpop.permute.xlu0 %4272
        %4274 = vrot.lane.b32.xlu0 %v1320, 42
        %v4275 = vpop.permute.xlu0 %4274
        %4276 = vrot.lane.b32.xlu0 %v1321, 42
        %v4277 = vpop.permute.xlu0 %4276
        %4278 = vrot.lane.b32.xlu0 %v1322, 42
        %v4279 = vpop.permute.xlu0 %4278
        %4280 = vrot.lane.b32.xlu0 %v1323, 42
        %v4281 = vpop.permute.xlu0 %4280
        %4282 = vrot.lane.b32.xlu0 %v1324, 42
        %v4283 = vpop.permute.xlu0 %4282
        %4284 = vrot.lane.b32.xlu0 %v1325, 42
        %v4285 = vpop.permute.xlu0 %4284
        %4286 = vrot.lane.b32.xlu0 %v1326, 42
        %v4287 = vpop.permute.xlu0 %4286
        %4288 = vrot.lane.b32.xlu0 %v1327, 42
        %v4289 = vpop.permute.xlu0 %4288
        %4290 = vrot.lane.b32.xlu0 %v1328, 42
        %v4291 = vpop.permute.xlu0 %4290
        %4292 = vrot.lane.b32.xlu0 %v1329, 42
        %v4293 = vpop.permute.xlu0 %4292
        %4294 = vrot.lane.b32.xlu0 %v1330, 42
        %v4295 = vpop.permute.xlu0 %4294
        %4296 = vrot.lane.b32.xlu0 %v1331, 42
        %v4297 = vpop.permute.xlu0 %4296
        %4298 = vrot.lane.b32.xlu0 %v1332, 42
        %v4299 = vpop.permute.xlu0 %4298
        %4300 = vrot.lane.b32.xlu0 %v1333, 42
        %v4301 = vpop.permute.xlu0 %4300
        %4302 = vrot.lane.b32.xlu0 %v1334, 42
        %v4303 = vpop.permute.xlu0 %4302
        %4304 = vrot.lane.b32.xlu0 %v1335, 42
        %v4305 = vpop.permute.xlu0 %4304
        %4306 = vrot.lane.b32.xlu0 %v1336, 42
        %v4307 = vpop.permute.xlu0 %4306
        %4308 = vrot.lane.b32.xlu0 %v1337, 42
        %v4309 = vpop.permute.xlu0 %4308
        %4310 = vrot.lane.b32.xlu0 %v1338, 42
        %v4311 = vpop.permute.xlu0 %4310
        %4312 = vrot.lane.b32.xlu0 %v1339, 42
        %v4313 = vpop.permute.xlu0 %4312
        %4314 = vrot.lane.b32.xlu0 %v1340, 42
        %v4315 = vpop.permute.xlu0 %4314
        %4316 = vrot.lane.b32.xlu0 %v1341, 42
        %v4317 = vpop.permute.xlu0 %4316
        %4318 = vrot.lane.b32.xlu0 %v1342, 42
        %v4319 = vpop.permute.xlu0 %4318
        %4320 = vrot.lane.b32.xlu0 %v1343, 42
        %v4321 = vpop.permute.xlu0 %4320
        %4322 = vrot.lane.b32.xlu0 %v1344, 42
        %v4323 = vpop.permute.xlu0 %4322
        %4324 = vrot.lane.b32.xlu0 %v1345, 42
        %v4325 = vpop.permute.xlu0 %4324
        %4326 = vrot.lane.b32.xlu0 %v1346, 42
        %v4327 = vpop.permute.xlu0 %4326
        %4328 = vrot.lane.b32.xlu0 %v1347, 42
        %v4329 = vpop.permute.xlu0 %4328
        %4330 = vrot.lane.b32.xlu0 %v1348, 42
        %v4331 = vpop.permute.xlu0 %4330
        %4332 = vrot.lane.b32.xlu0 %v1349, 42
        %v4333 = vpop.permute.xlu0 %4332
        %4334 = vrot.lane.b32.xlu0 %v1350, 42
        %v4335 = vpop.permute.xlu0 %4334
        %4336 = vrot.lane.b32.xlu0 %v1351, 42
        %v4337 = vpop.permute.xlu0 %4336
        %4338 = vrot.lane.b32.xlu0 %v1352, 42
        %v4339 = vpop.permute.xlu0 %4338
        %4340 = vrot.lane.b32.xlu0 %v1353, 42
        %v4341 = vpop.permute.xlu0 %4340
        %4342 = vrot.lane.b32.xlu0 %v1354, 42
        %v4343 = vpop.permute.xlu0 %4342
        %4442 = vrot.lane.b32.xlu0 %v1551, 56
        %v4443 = vpop.permute.xlu0 %4442
        %4444 = vrot.lane.b32.xlu0 %v1552, 56
        %v4445 = vpop.permute.xlu0 %4444
        %4446 = vrot.lane.b32.xlu0 %v1553, 56
        %v4447 = vpop.permute.xlu0 %4446
        %4448 = vrot.lane.b32.xlu0 %v1554, 56
        %v4449 = vpop.permute.xlu0 %4448
        %4450 = vrot.lane.b32.xlu0 %v1555, 56
        %v4451 = vpop.permute.xlu0 %4450
        %4452 = vrot.lane.b32.xlu0 %v1556, 56
        %v4453 = vpop.permute.xlu0 %4452
        %4454 = vrot.lane.b32.xlu0 %v1557, 56
        %v4455 = vpop.permute.xlu0 %4454
        %4456 = vrot.lane.b32.xlu0 %v1558, 56
        %v4457 = vpop.permute.xlu0 %4456
        %4458 = vrot.lane.b32.xlu0 %v1559, 56
        %v4459 = vpop.permute.xlu0 %4458
        %4460 = vrot.lane.b32.xlu0 %v1560, 56
        %v4461 = vpop.permute.xlu0 %4460
        %4462 = vrot.lane.b32.xlu0 %v1561, 56
        %v4463 = vpop.permute.xlu0 %4462
        %4464 = vrot.lane.b32.xlu0 %v1562, 56
        %v4465 = vpop.permute.xlu0 %4464
        %4466 = vrot.lane.b32.xlu0 %v1563, 56
        %v4467 = vpop.permute.xlu0 %4466
        %4468 = vrot.lane.b32.xlu0 %v1564, 56
        %v4469 = vpop.permute.xlu0 %4468
        %4470 = vrot.lane.b32.xlu0 %v1565, 56
        %v4471 = vpop.permute.xlu0 %4470
        %4472 = vrot.lane.b32.xlu0 %v1566, 56
        %v4473 = vpop.permute.xlu0 %4472
        %4474 = vrot.lane.b32.xlu0 %v1567, 56
        %v4475 = vpop.permute.xlu0 %4474
        %4476 = vrot.lane.b32.xlu0 %v1568, 56
        %v4477 = vpop.permute.xlu0 %4476
        %4478 = vrot.lane.b32.xlu0 %v1569, 56
        %v4479 = vpop.permute.xlu0 %4478
        %4480 = vrot.lane.b32.xlu0 %v1570, 56
        %v4481 = vpop.permute.xlu0 %4480
        %4482 = vrot.lane.b32.xlu0 %v1571, 56
        %v4483 = vpop.permute.xlu0 %4482
        %4484 = vrot.lane.b32.xlu0 %v1572, 56
        %v4485 = vpop.permute.xlu0 %4484
        %4486 = vrot.lane.b32.xlu0 %v1573, 56
        %v4487 = vpop.permute.xlu0 %4486
        %4488 = vrot.lane.b32.xlu0 %v1574, 56
        %v4489 = vpop.permute.xlu0 %4488
        %4490 = vrot.lane.b32.xlu0 %v1575, 56
        %v4491 = vpop.permute.xlu0 %4490
        %4492 = vrot.lane.b32.xlu0 %v1576, 56
        %v4493 = vpop.permute.xlu0 %4492
        %4494 = vrot.lane.b32.xlu0 %v1577, 56
        %v4495 = vpop.permute.xlu0 %4494
        %4496 = vrot.lane.b32.xlu0 %v1578, 56
        %v4497 = vpop.permute.xlu0 %4496
        %4498 = vrot.lane.b32.xlu0 %v1579, 56
        %v4499 = vpop.permute.xlu0 %4498
        %4500 = vrot.lane.b32.xlu0 %v1580, 56
        %v4501 = vpop.permute.xlu0 %4500
        %4502 = vrot.lane.b32.xlu0 %v1581, 56
        %v4503 = vpop.permute.xlu0 %4502
        %4504 = vrot.lane.b32.xlu0 %v1582, 56
        %v4505 = vpop.permute.xlu0 %4504
        %4506 = vrot.lane.b32.xlu0 %v1583, 56
        %v4507 = vpop.permute.xlu0 %4506
        %4508 = vrot.lane.b32.xlu0 %v1584, 56
        %v4509 = vpop.permute.xlu0 %4508
        %4510 = vrot.lane.b32.xlu0 %v1585, 56
        %v4511 = vpop.permute.xlu0 %4510
        %4512 = vrot.lane.b32.xlu0 %v1586, 56
        %v4513 = vpop.permute.xlu0 %4512
        %4514 = vrot.lane.b32.xlu0 %v1587, 56
        %v4515 = vpop.permute.xlu0 %4514
        %4516 = vrot.lane.b32.xlu0 %v1588, 56
        %v4517 = vpop.permute.xlu0 %4516
        %4518 = vrot.lane.b32.xlu0 %v1589, 56
        %v4519 = vpop.permute.xlu0 %4518
        %4520 = vrot.lane.b32.xlu0 %v1590, 56
        %v4521 = vpop.permute.xlu0 %4520
        %4522 = vrot.lane.b32.xlu0 %v1591, 56
        %v4523 = vpop.permute.xlu0 %4522
        %4524 = vrot.lane.b32.xlu0 %v1592, 56
        %v4525 = vpop.permute.xlu0 %4524
        %4526 = vrot.lane.b32.xlu0 %v1593, 56
        %v4527 = vpop.permute.xlu0 %4526
        %4528 = vrot.lane.b32.xlu0 %v1594, 56
        %v4529 = vpop.permute.xlu0 %4528
        %4530 = vrot.lane.b32.xlu0 %v1595, 56
        %v4531 = vpop.permute.xlu0 %4530
        %4532 = vrot.lane.b32.xlu0 %v1596, 56
        %v4533 = vpop.permute.xlu0 %4532
        %4534 = vrot.lane.b32.xlu0 %v1597, 56
        %v4535 = vpop.permute.xlu0 %4534
        %4536 = vrot.lane.b32.xlu0 %v1598, 56
        %v4537 = vpop.permute.xlu0 %4536
        %4538 = vrot.lane.b32.xlu0 %v1599, 56
        %v4539 = vpop.permute.xlu0 %4538
        %4638 = vrot.lane.b32.xlu0 %v1796, 70
        %v4639 = vpop.permute.xlu0 %4638
        %4640 = vrot.lane.b32.xlu0 %v1797, 70
        %v4641 = vpop.permute.xlu0 %4640
        %4642 = vrot.lane.b32.xlu0 %v1798, 70
        %v4643 = vpop.permute.xlu0 %4642
        %4644 = vrot.lane.b32.xlu0 %v1799, 70
        %v4645 = vpop.permute.xlu0 %4644
        %4646 = vrot.lane.b32.xlu0 %v1800, 70
        %v4647 = vpop.permute.xlu0 %4646
        %4648 = vrot.lane.b32.xlu0 %v1801, 70
        %v4649 = vpop.permute.xlu0 %4648
        %4650 = vrot.lane.b32.xlu0 %v1802, 70
        %v4651 = vpop.permute.xlu0 %4650
        %4652 = vrot.lane.b32.xlu0 %v1803, 70
        %v4653 = vpop.permute.xlu0 %4652
        %4654 = vrot.lane.b32.xlu0 %v1804, 70
        %v4655 = vpop.permute.xlu0 %4654
        %4656 = vrot.lane.b32.xlu0 %v1805, 70
        %v4657 = vpop.permute.xlu0 %4656
        %4658 = vrot.lane.b32.xlu0 %v1806, 70
        %v4659 = vpop.permute.xlu0 %4658
        %4660 = vrot.lane.b32.xlu0 %v1807, 70
        %v4661 = vpop.permute.xlu0 %4660
        %4662 = vrot.lane.b32.xlu0 %v1808, 70
        %v4663 = vpop.permute.xlu0 %4662
        %4664 = vrot.lane.b32.xlu0 %v1809, 70
        %v4665 = vpop.permute.xlu0 %4664
        %4666 = vrot.lane.b32.xlu0 %v1810, 70
        %v4667 = vpop.permute.xlu0 %4666
        %4668 = vrot.lane.b32.xlu0 %v1811, 70
        %v4669 = vpop.permute.xlu0 %4668
        %4670 = vrot.lane.b32.xlu0 %v1812, 70
        %v4671 = vpop.permute.xlu0 %4670
        %4672 = vrot.lane.b32.xlu0 %v1813, 70
        %v4673 = vpop.permute.xlu0 %4672
        %4674 = vrot.lane.b32.xlu0 %v1814, 70
        %v4675 = vpop.permute.xlu0 %4674
        %4676 = vrot.lane.b32.xlu0 %v1815, 70
        %v4677 = vpop.permute.xlu0 %4676
        %4678 = vrot.lane.b32.xlu0 %v1816, 70
        %v4679 = vpop.permute.xlu0 %4678
        %4680 = vrot.lane.b32.xlu0 %v1817, 70
        %v4681 = vpop.permute.xlu0 %4680
        %4682 = vrot.lane.b32.xlu0 %v1818, 70
        %v4683 = vpop.permute.xlu0 %4682
        %4684 = vrot.lane.b32.xlu0 %v1819, 70
        %v4685 = vpop.permute.xlu0 %4684
        %4686 = vrot.lane.b32.xlu0 %v1820, 70
        %v4687 = vpop.permute.xlu0 %4686
        %4688 = vrot.lane.b32.xlu0 %v1821, 70
        %v4689 = vpop.permute.xlu0 %4688
        %4690 = vrot.lane.b32.xlu0 %v1822, 70
        %v4691 = vpop.permute.xlu0 %4690
        %4692 = vrot.lane.b32.xlu0 %v1823, 70
        %v4693 = vpop.permute.xlu0 %4692
        %4694 = vrot.lane.b32.xlu0 %v1824, 70
        %v4695 = vpop.permute.xlu0 %4694
        %4696 = vrot.lane.b32.xlu0 %v1825, 70
        %v4697 = vpop.permute.xlu0 %4696
        %4698 = vrot.lane.b32.xlu0 %v1826, 70
        %v4699 = vpop.permute.xlu0 %4698
        %4700 = vrot.lane.b32.xlu0 %v1827, 70
        %v4701 = vpop.permute.xlu0 %4700
        %4702 = vrot.lane.b32.xlu0 %v1828, 70
        %v4703 = vpop.permute.xlu0 %4702
        %4704 = vrot.lane.b32.xlu0 %v1829, 70
        %v4705 = vpop.permute.xlu0 %4704
        %4706 = vrot.lane.b32.xlu0 %v1830, 70
        %v4707 = vpop.permute.xlu0 %4706
        %4708 = vrot.lane.b32.xlu0 %v1831, 70
        %v4709 = vpop.permute.xlu0 %4708
        %4710 = vrot.lane.b32.xlu0 %v1832, 70
        %v4711 = vpop.permute.xlu0 %4710
        %4712 = vrot.lane.b32.xlu0 %v1833, 70
        %v4713 = vpop.permute.xlu0 %4712
        %4714 = vrot.lane.b32.xlu0 %v1834, 70
        %v4715 = vpop.permute.xlu0 %4714
        %4716 = vrot.lane.b32.xlu0 %v1835, 70
        %v4717 = vpop.permute.xlu0 %4716
        %4718 = vrot.lane.b32.xlu0 %v1836, 70
        %v4719 = vpop.permute.xlu0 %4718
        %4720 = vrot.lane.b32.xlu0 %v1837, 70
        %v4721 = vpop.permute.xlu0 %4720
        %4722 = vrot.lane.b32.xlu0 %v1838, 70
        %v4723 = vpop.permute.xlu0 %4722
        %4724 = vrot.lane.b32.xlu0 %v1839, 70
        %v4725 = vpop.permute.xlu0 %4724
        %4726 = vrot.lane.b32.xlu0 %v1840, 70
        %v4727 = vpop.permute.xlu0 %4726
        %4728 = vrot.lane.b32.xlu0 %v1841, 70
        %v4729 = vpop.permute.xlu0 %4728
        %4730 = vrot.lane.b32.xlu0 %v1842, 70
        %v4731 = vpop.permute.xlu0 %4730
        %4732 = vrot.lane.b32.xlu0 %v1843, 70
        %v4733 = vpop.permute.xlu0 %4732
        %4734 = vrot.lane.b32.xlu0 %v1844, 70
        %v4735 = vpop.permute.xlu0 %4734
        %4834 = vrot.lane.b32.xlu0 %v2041, 84
        %v4835 = vpop.permute.xlu0 %4834
        %4836 = vrot.lane.b32.xlu0 %v2042, 84
        %v4837 = vpop.permute.xlu0 %4836
        %4838 = vrot.lane.b32.xlu0 %v2043, 84
        %v4839 = vpop.permute.xlu0 %4838
        %4840 = vrot.lane.b32.xlu0 %v2044, 84
        %v4841 = vpop.permute.xlu0 %4840
        %4842 = vrot.lane.b32.xlu0 %v2045, 84
        %v4843 = vpop.permute.xlu0 %4842
        %4844 = vrot.lane.b32.xlu0 %v2046, 84
        %v4845 = vpop.permute.xlu0 %4844
        %4846 = vrot.lane.b32.xlu0 %v2047, 84
        %v4847 = vpop.permute.xlu0 %4846
        %4848 = vrot.lane.b32.xlu0 %v2048, 84
        %v4849 = vpop.permute.xlu0 %4848
        %4850 = vrot.lane.b32.xlu0 %v2049, 84
        %v4851 = vpop.permute.xlu0 %4850
        %4852 = vrot.lane.b32.xlu0 %v2050, 84
        %v4853 = vpop.permute.xlu0 %4852
        %4854 = vrot.lane.b32.xlu0 %v2051, 84
        %v4855 = vpop.permute.xlu0 %4854
        %4856 = vrot.lane.b32.xlu0 %v2052, 84
        %v4857 = vpop.permute.xlu0 %4856
        %4858 = vrot.lane.b32.xlu0 %v2053, 84
        %v4859 = vpop.permute.xlu0 %4858
        %4860 = vrot.lane.b32.xlu0 %v2054, 84
        %v4861 = vpop.permute.xlu0 %4860
        %4862 = vrot.lane.b32.xlu0 %v2055, 84
        %v4863 = vpop.permute.xlu0 %4862
        %4864 = vrot.lane.b32.xlu0 %v2056, 84
        %v4865 = vpop.permute.xlu0 %4864
        %4866 = vrot.lane.b32.xlu0 %v2057, 84
        %v4867 = vpop.permute.xlu0 %4866
        %4868 = vrot.lane.b32.xlu0 %v2058, 84
        %v4869 = vpop.permute.xlu0 %4868
        %4870 = vrot.lane.b32.xlu0 %v2059, 84
        %v4871 = vpop.permute.xlu0 %4870
        %4872 = vrot.lane.b32.xlu0 %v2060, 84
        %v4873 = vpop.permute.xlu0 %4872
        %4874 = vrot.lane.b32.xlu0 %v2061, 84
        %v4875 = vpop.permute.xlu0 %4874
        %4876 = vrot.lane.b32.xlu0 %v2062, 84
        %v4877 = vpop.permute.xlu0 %4876
        %4878 = vrot.lane.b32.xlu0 %v2063, 84
        %v4879 = vpop.permute.xlu0 %4878
        %4880 = vrot.lane.b32.xlu0 %v2064, 84
        %v4881 = vpop.permute.xlu0 %4880
        %4882 = vrot.lane.b32.xlu0 %v2065, 84
        %v4883 = vpop.permute.xlu0 %4882
        %4884 = vrot.lane.b32.xlu0 %v2066, 84
        %v4885 = vpop.permute.xlu0 %4884
        %4886 = vrot.lane.b32.xlu0 %v2067, 84
        %v4887 = vpop.permute.xlu0 %4886
        %4888 = vrot.lane.b32.xlu0 %v2068, 84
        %v4889 = vpop.permute.xlu0 %4888
        %4890 = vrot.lane.b32.xlu0 %v2069, 84
        %v4891 = vpop.permute.xlu0 %4890
        %4892 = vrot.lane.b32.xlu0 %v2070, 84
        %v4893 = vpop.permute.xlu0 %4892
        %4894 = vrot.lane.b32.xlu0 %v2071, 84
        %v4895 = vpop.permute.xlu0 %4894
        %4896 = vrot.lane.b32.xlu0 %v2072, 84
        %v4897 = vpop.permute.xlu0 %4896
        %4898 = vrot.lane.b32.xlu0 %v2073, 84
        %v4899 = vpop.permute.xlu0 %4898
        %4900 = vrot.lane.b32.xlu0 %v2074, 84
        %v4901 = vpop.permute.xlu0 %4900
        %4902 = vrot.lane.b32.xlu0 %v2075, 84
        %v4903 = vpop.permute.xlu0 %4902
        %4904 = vrot.lane.b32.xlu0 %v2076, 84
        %v4905 = vpop.permute.xlu0 %4904
        %4906 = vrot.lane.b32.xlu0 %v2077, 84
        %v4907 = vpop.permute.xlu0 %4906
        %4908 = vrot.lane.b32.xlu0 %v2078, 84
        %v4909 = vpop.permute.xlu0 %4908
        %4910 = vrot.lane.b32.xlu0 %v2079, 84
        %v4911 = vpop.permute.xlu0 %4910
        %4912 = vrot.lane.b32.xlu0 %v2080, 84
        %v4913 = vpop.permute.xlu0 %4912
        %4914 = vrot.lane.b32.xlu0 %v2081, 84
        %v4915 = vpop.permute.xlu0 %4914
        %4916 = vrot.lane.b32.xlu0 %v2082, 84
        %v4917 = vpop.permute.xlu0 %4916
        %4918 = vrot.lane.b32.xlu0 %v2083, 84
        %v4919 = vpop.permute.xlu0 %4918
        %4920 = vrot.lane.b32.xlu0 %v2084, 84
        %v4921 = vpop.permute.xlu0 %4920
        %4922 = vrot.lane.b32.xlu0 %v2085, 84
        %v4923 = vpop.permute.xlu0 %4922
        %4924 = vrot.lane.b32.xlu0 %v2086, 84
        %v4925 = vpop.permute.xlu0 %4924
        %4926 = vrot.lane.b32.xlu0 %v2087, 84
        %v4927 = vpop.permute.xlu0 %4926
        %4928 = vrot.lane.b32.xlu0 %v2088, 84
        %v4929 = vpop.permute.xlu0 %4928
        %4930 = vrot.lane.b32.xlu0 %v2089, 84
        %v4931 = vpop.permute.xlu0 %4930
        %5030 = vrot.lane.b32.xlu0 %v2286, 98
        %v5031 = vpop.permute.xlu0 %5030
        %5032 = vrot.lane.b32.xlu0 %v2287, 98
        %v5033 = vpop.permute.xlu0 %5032
        %5034 = vrot.lane.b32.xlu0 %v2288, 98
        %v5035 = vpop.permute.xlu0 %5034
        %5036 = vrot.lane.b32.xlu0 %v2289, 98
        %v5037 = vpop.permute.xlu0 %5036
        %5038 = vrot.lane.b32.xlu0 %v2290, 98
        %v5039 = vpop.permute.xlu0 %5038
        %5040 = vrot.lane.b32.xlu0 %v2291, 98
        %v5041 = vpop.permute.xlu0 %5040
        %5042 = vrot.lane.b32.xlu0 %v2292, 98
        %v5043 = vpop.permute.xlu0 %5042
        %5044 = vrot.lane.b32.xlu0 %v2293, 98
        %v5045 = vpop.permute.xlu0 %5044
        %5046 = vrot.lane.b32.xlu0 %v2294, 98
        %v5047 = vpop.permute.xlu0 %5046
        %5048 = vrot.lane.b32.xlu0 %v2295, 98
        %v5049 = vpop.permute.xlu0 %5048
        %5050 = vrot.lane.b32.xlu0 %v2296, 98
        %v5051 = vpop.permute.xlu0 %5050
        %5052 = vrot.lane.b32.xlu0 %v2297, 98
        %v5053 = vpop.permute.xlu0 %5052
        %5054 = vrot.lane.b32.xlu0 %v2298, 98
        %v5055 = vpop.permute.xlu0 %5054
        %5056 = vrot.lane.b32.xlu0 %v2299, 98
        %v5057 = vpop.permute.xlu0 %5056
        %5058 = vrot.lane.b32.xlu0 %v2300, 98
        %v5059 = vpop.permute.xlu0 %5058
        %5060 = vrot.lane.b32.xlu0 %v2301, 98
        %v5061 = vpop.permute.xlu0 %5060
        %5062 = vrot.lane.b32.xlu0 %v2302, 98
        %v5063 = vpop.permute.xlu0 %5062
        %5064 = vrot.lane.b32.xlu0 %v2303, 98
        %v5065 = vpop.permute.xlu0 %5064
        %5066 = vrot.lane.b32.xlu0 %v2304, 98
        %v5067 = vpop.permute.xlu0 %5066
        %5068 = vrot.lane.b32.xlu0 %v2305, 98
        %v5069 = vpop.permute.xlu0 %5068
        %5070 = vrot.lane.b32.xlu0 %v2306, 98
        %v5071 = vpop.permute.xlu0 %5070
        %5072 = vrot.lane.b32.xlu0 %v2307, 98
        %v5073 = vpop.permute.xlu0 %5072
        %5074 = vrot.lane.b32.xlu0 %v2308, 98
        %v5075 = vpop.permute.xlu0 %5074
        %5076 = vrot.lane.b32.xlu0 %v2309, 98
        %v5077 = vpop.permute.xlu0 %5076
        %5078 = vrot.lane.b32.xlu0 %v2310, 98
        %v5079 = vpop.permute.xlu0 %5078
        %5080 = vrot.lane.b32.xlu0 %v2311, 98
        %v5081 = vpop.permute.xlu0 %5080
        %5082 = vrot.lane.b32.xlu0 %v2312, 98
        %v5083 = vpop.permute.xlu0 %5082
        %5084 = vrot.lane.b32.xlu0 %v2313, 98
        %v5085 = vpop.permute.xlu0 %5084
        %5086 = vrot.lane.b32.xlu0 %v2314, 98
        %v5087 = vpop.permute.xlu0 %5086
        %5088 = vrot.lane.b32.xlu0 %v2315, 98
        %v5089 = vpop.permute.xlu0 %5088
        %5090 = vrot.lane.b32.xlu0 %v2316, 98
        %v5091 = vpop.permute.xlu0 %5090
        %5092 = vrot.lane.b32.xlu0 %v2317, 98
        %v5093 = vpop.permute.xlu0 %5092
        %5094 = vrot.lane.b32.xlu0 %v2318, 98
        %v5095 = vpop.permute.xlu0 %5094
        %5096 = vrot.lane.b32.xlu0 %v2319, 98
        %v5097 = vpop.permute.xlu0 %5096
        %5098 = vrot.lane.b32.xlu0 %v2320, 98
        %v5099 = vpop.permute.xlu0 %5098
        %5100 = vrot.lane.b32.xlu0 %v2321, 98
        %v5101 = vpop.permute.xlu0 %5100
        %5102 = vrot.lane.b32.xlu0 %v2322, 98
        %v5103 = vpop.permute.xlu0 %5102
        %5104 = vrot.lane.b32.xlu0 %v2323, 98
        %v5105 = vpop.permute.xlu0 %5104
        %5106 = vrot.lane.b32.xlu0 %v2324, 98
        %v5107 = vpop.permute.xlu0 %5106
        %5108 = vrot.lane.b32.xlu0 %v2325, 98
        %v5109 = vpop.permute.xlu0 %5108
        %5110 = vrot.lane.b32.xlu0 %v2326, 98
        %v5111 = vpop.permute.xlu0 %5110
        %5112 = vrot.lane.b32.xlu0 %v2327, 98
        %v5113 = vpop.permute.xlu0 %5112
        %5114 = vrot.lane.b32.xlu0 %v2328, 98
        %v5115 = vpop.permute.xlu0 %5114
        %5116 = vrot.lane.b32.xlu0 %v2329, 98
        %v5117 = vpop.permute.xlu0 %5116
        %5118 = vrot.lane.b32.xlu0 %v2330, 98
        %v5119 = vpop.permute.xlu0 %5118
        %5120 = vrot.lane.b32.xlu0 %v2331, 98
        %v5121 = vpop.permute.xlu0 %5120
        %5122 = vrot.lane.b32.xlu0 %v2332, 98
        %v5123 = vpop.permute.xlu0 %5122
        %5124 = vrot.lane.b32.xlu0 %v2333, 98
        %v5125 = vpop.permute.xlu0 %5124
        %5126 = vrot.lane.b32.xlu0 %v2334, 98
        %v5127 = vpop.permute.xlu0 %5126
        %5226 = vrot.lane.b32.xlu0 %v2531, 112
        %v5227 = vpop.permute.xlu0 %5226
        %5228 = vrot.lane.b32.xlu0 %v2532, 112
        %v5229 = vpop.permute.xlu0 %5228
        %5230 = vrot.lane.b32.xlu0 %v2533, 112
        %v5231 = vpop.permute.xlu0 %5230
        %5232 = vrot.lane.b32.xlu0 %v2534, 112
        %v5233 = vpop.permute.xlu0 %5232
        %5234 = vrot.lane.b32.xlu0 %v2535, 112
        %v5235 = vpop.permute.xlu0 %5234
        %5236 = vrot.lane.b32.xlu0 %v2536, 112
        %v5237 = vpop.permute.xlu0 %5236
        %5238 = vrot.lane.b32.xlu0 %v2537, 112
        %v5239 = vpop.permute.xlu0 %5238
        %5240 = vrot.lane.b32.xlu0 %v2538, 112
        %v5241 = vpop.permute.xlu0 %5240
        %5242 = vrot.lane.b32.xlu0 %v2539, 112
        %v5243 = vpop.permute.xlu0 %5242
        %5244 = vrot.lane.b32.xlu0 %v2540, 112
        %v5245 = vpop.permute.xlu0 %5244
        %5246 = vrot.lane.b32.xlu0 %v2541, 112
        %v5247 = vpop.permute.xlu0 %5246
        %5248 = vrot.lane.b32.xlu0 %v2542, 112
        %v5249 = vpop.permute.xlu0 %5248
        %5250 = vrot.lane.b32.xlu0 %v2543, 112
        %v5251 = vpop.permute.xlu0 %5250
        %5252 = vrot.lane.b32.xlu0 %v2544, 112
        %v5253 = vpop.permute.xlu0 %5252
        %5254 = vrot.lane.b32.xlu0 %v2545, 112
        %v5255 = vpop.permute.xlu0 %5254
        %5256 = vrot.lane.b32.xlu0 %v2546, 112
        %v5257 = vpop.permute.xlu0 %5256
        %5258 = vrot.lane.b32.xlu0 %v2547, 112
        %v5259 = vpop.permute.xlu0 %5258
        %5260 = vrot.lane.b32.xlu0 %v2548, 112
        %v5261 = vpop.permute.xlu0 %5260
        %5262 = vrot.lane.b32.xlu0 %v2549, 112
        %v5263 = vpop.permute.xlu0 %5262
        %5264 = vrot.lane.b32.xlu0 %v2550, 112
        %v5265 = vpop.permute.xlu0 %5264
        %5266 = vrot.lane.b32.xlu0 %v2551, 112
        %v5267 = vpop.permute.xlu0 %5266
        %5268 = vrot.lane.b32.xlu0 %v2552, 112
        %v5269 = vpop.permute.xlu0 %5268
        %5270 = vrot.lane.b32.xlu0 %v2553, 112
        %v5271 = vpop.permute.xlu0 %5270
        %5272 = vrot.lane.b32.xlu0 %v2554, 112
        %v5273 = vpop.permute.xlu0 %5272
        %5274 = vrot.lane.b32.xlu0 %v2555, 112
        %v5275 = vpop.permute.xlu0 %5274
        %5276 = vrot.lane.b32.xlu0 %v2556, 112
        %v5277 = vpop.permute.xlu0 %5276
        %5278 = vrot.lane.b32.xlu0 %v2557, 112
        %v5279 = vpop.permute.xlu0 %5278
        %5280 = vrot.lane.b32.xlu0 %v2558, 112
        %v5281 = vpop.permute.xlu0 %5280
        %5282 = vrot.lane.b32.xlu0 %v2559, 112
        %v5283 = vpop.permute.xlu0 %5282
        %5284 = vrot.lane.b32.xlu0 %v2560, 112
        %v5285 = vpop.permute.xlu0 %5284
        %5286 = vrot.lane.b32.xlu0 %v2561, 112
        %v5287 = vpop.permute.xlu0 %5286
        %5288 = vrot.lane.b32.xlu0 %v2562, 112
        %v5289 = vpop.permute.xlu0 %5288
        %5290 = vrot.lane.b32.xlu0 %v2563, 112
        %v5291 = vpop.permute.xlu0 %5290
        %5292 = vrot.lane.b32.xlu0 %v2564, 112
        %v5293 = vpop.permute.xlu0 %5292
        %5294 = vrot.lane.b32.xlu0 %v2565, 112
        %v5295 = vpop.permute.xlu0 %5294
        %5296 = vrot.lane.b32.xlu0 %v2566, 112
        %v5297 = vpop.permute.xlu0 %5296
        %5298 = vrot.lane.b32.xlu0 %v2567, 112
        %v5299 = vpop.permute.xlu0 %5298
        %5300 = vrot.lane.b32.xlu0 %v2568, 112
        %v5301 = vpop.permute.xlu0 %5300
        %5302 = vrot.lane.b32.xlu0 %v2569, 112
        %v5303 = vpop.permute.xlu0 %5302
        %5304 = vrot.lane.b32.xlu0 %v2570, 112
        %v5305 = vpop.permute.xlu0 %5304
        %5306 = vrot.lane.b32.xlu0 %v2571, 112
        %v5307 = vpop.permute.xlu0 %5306
        %5308 = vrot.lane.b32.xlu0 %v2572, 112
        %v5309 = vpop.permute.xlu0 %5308
        %5310 = vrot.lane.b32.xlu0 %v2573, 112
        %v5311 = vpop.permute.xlu0 %5310
        %5312 = vrot.lane.b32.xlu0 %v2574, 112
        %v5313 = vpop.permute.xlu0 %5312
        %5314 = vrot.lane.b32.xlu0 %v2575, 112
        %v5315 = vpop.permute.xlu0 %5314
        %5316 = vrot.lane.b32.xlu0 %v2576, 112
        %v5317 = vpop.permute.xlu0 %5316
        %5318 = vrot.lane.b32.xlu0 %v2577, 112
        %v5319 = vpop.permute.xlu0 %5318
        %5320 = vrot.lane.b32.xlu0 %v2578, 112
        %v5321 = vpop.permute.xlu0 %5320
        %5322 = vrot.lane.b32.xlu0 %v2579, 112
        %v5323 = vpop.permute.xlu0 %5322
        %5422 = vrot.lane.b32.xlu0 %v2776, 126
        %v5423 = vpop.permute.xlu0 %5422
        %5424 = vrot.lane.b32.xlu0 %v2777, 126
        %v5425 = vpop.permute.xlu0 %5424
        %5426 = vrot.lane.b32.xlu0 %v2778, 126
        %v5427 = vpop.permute.xlu0 %5426
        %5428 = vrot.lane.b32.xlu0 %v2779, 126
        %v5429 = vpop.permute.xlu0 %5428
        %5430 = vrot.lane.b32.xlu0 %v2780, 126
        %v5431 = vpop.permute.xlu0 %5430
        %5432 = vrot.lane.b32.xlu0 %v2781, 126
        %v5433 = vpop.permute.xlu0 %5432
        %5434 = vrot.lane.b32.xlu0 %v2782, 126
        %v5435 = vpop.permute.xlu0 %5434
        %5436 = vrot.lane.b32.xlu0 %v2783, 126
        %v5437 = vpop.permute.xlu0 %5436
        %5438 = vrot.lane.b32.xlu0 %v2784, 126
        %v5439 = vpop.permute.xlu0 %5438
        %5440 = vrot.lane.b32.xlu0 %v2785, 126
        %v5441 = vpop.permute.xlu0 %5440
        %5442 = vrot.lane.b32.xlu0 %v2786, 126
        %v5443 = vpop.permute.xlu0 %5442
        %5444 = vrot.lane.b32.xlu0 %v2787, 126
        %v5445 = vpop.permute.xlu0 %5444
        %5446 = vrot.lane.b32.xlu0 %v2788, 126
        %v5447 = vpop.permute.xlu0 %5446
        %5448 = vrot.lane.b32.xlu0 %v2789, 126
        %v5449 = vpop.permute.xlu0 %5448
        %5450 = vrot.lane.b32.xlu0 %v2790, 126
        %v5451 = vpop.permute.xlu0 %5450
        %5452 = vrot.lane.b32.xlu0 %v2791, 126
        %v5453 = vpop.permute.xlu0 %5452
        %5454 = vrot.lane.b32.xlu0 %v2792, 126
        %v5455 = vpop.permute.xlu0 %5454
        %5456 = vrot.lane.b32.xlu0 %v2793, 126
        %v5457 = vpop.permute.xlu0 %5456
        %5458 = vrot.lane.b32.xlu0 %v2794, 126
        %v5459 = vpop.permute.xlu0 %5458
        %5460 = vrot.lane.b32.xlu0 %v2795, 126
        %v5461 = vpop.permute.xlu0 %5460
        %5462 = vrot.lane.b32.xlu0 %v2796, 126
        %v5463 = vpop.permute.xlu0 %5462
        %5464 = vrot.lane.b32.xlu0 %v2797, 126
        %v5465 = vpop.permute.xlu0 %5464
        %5466 = vrot.lane.b32.xlu0 %v2798, 126
        %v5467 = vpop.permute.xlu0 %5466
        %5468 = vrot.lane.b32.xlu0 %v2799, 126
        %v5469 = vpop.permute.xlu0 %5468
        %5470 = vrot.lane.b32.xlu0 %v2800, 126
        %v5471 = vpop.permute.xlu0 %5470
        %5472 = vrot.lane.b32.xlu0 %v2801, 126
        %v5473 = vpop.permute.xlu0 %5472
        %5474 = vrot.lane.b32.xlu0 %v2802, 126
        %v5475 = vpop.permute.xlu0 %5474
        %5476 = vrot.lane.b32.xlu0 %v2803, 126
        %v5477 = vpop.permute.xlu0 %5476
        %5478 = vrot.lane.b32.xlu0 %v2804, 126
        %v5479 = vpop.permute.xlu0 %5478
        %5480 = vrot.lane.b32.xlu0 %v2805, 126
        %v5481 = vpop.permute.xlu0 %5480
        %5482 = vrot.lane.b32.xlu0 %v2806, 126
        %v5483 = vpop.permute.xlu0 %5482
        %5484 = vrot.lane.b32.xlu0 %v2807, 126
        %v5485 = vpop.permute.xlu0 %5484
        %5486 = vrot.lane.b32.xlu0 %v2808, 126
        %v5487 = vpop.permute.xlu0 %5486
        %5488 = vrot.lane.b32.xlu0 %v2809, 126
        %v5489 = vpop.permute.xlu0 %5488
        %5490 = vrot.lane.b32.xlu0 %v2810, 126
        %v5491 = vpop.permute.xlu0 %5490
        %5492 = vrot.lane.b32.xlu0 %v2811, 126
        %v5493 = vpop.permute.xlu0 %5492
        %5494 = vrot.lane.b32.xlu0 %v2812, 126
        %v5495 = vpop.permute.xlu0 %5494
        %5496 = vrot.lane.b32.xlu0 %v2813, 126
        %v5497 = vpop.permute.xlu0 %5496
        %5498 = vrot.lane.b32.xlu0 %v2814, 126
        %v5499 = vpop.permute.xlu0 %5498
        %5500 = vrot.lane.b32.xlu0 %v2815, 126
        %v5501 = vpop.permute.xlu0 %5500
        %5502 = vrot.lane.b32.xlu0 %v2816, 126
        %v5503 = vpop.permute.xlu0 %5502
        %5504 = vrot.lane.b32.xlu0 %v2817, 126
        %v5505 = vpop.permute.xlu0 %5504
        %5506 = vrot.lane.b32.xlu0 %v2818, 126
        %v5507 = vpop.permute.xlu0 %5506
        %5508 = vrot.lane.b32.xlu0 %v2819, 126
        %v5509 = vpop.permute.xlu0 %5508
        %5510 = vrot.lane.b32.xlu0 %v2820, 126
        %v5511 = vpop.permute.xlu0 %5510
        %5512 = vrot.lane.b32.xlu0 %v2821, 126
        %v5513 = vpop.permute.xlu0 %5512
        %5514 = vrot.lane.b32.xlu0 %v2822, 126
        %v5515 = vpop.permute.xlu0 %5514
        %5516 = vrot.lane.b32.xlu0 %v2823, 126
        %v5517 = vpop.permute.xlu0 %5516
        %5518 = vrot.lane.b32.xlu0 %v2824, 126
        %v5519 = vpop.permute.xlu0 %5518
        %5618 = vrot.lane.b32.xlu0 %v3021, 12
        %v5619 = vpop.permute.xlu0 %5618
        %5620 = vrot.lane.b32.xlu0 %v3022, 12
        %v5621 = vpop.permute.xlu0 %5620
        %5622 = vrot.lane.b32.xlu0 %v3023, 12
        %v5623 = vpop.permute.xlu0 %5622
        %5624 = vrot.lane.b32.xlu0 %v3024, 12
        %v5625 = vpop.permute.xlu0 %5624
        %5626 = vrot.lane.b32.xlu0 %v3025, 12
        %v5627 = vpop.permute.xlu0 %5626
        %5628 = vrot.lane.b32.xlu0 %v3026, 12
        %v5629 = vpop.permute.xlu0 %5628
        %5630 = vrot.lane.b32.xlu0 %v3027, 12
        %v5631 = vpop.permute.xlu0 %5630
        %5632 = vrot.lane.b32.xlu0 %v3028, 12
        %v5633 = vpop.permute.xlu0 %5632
        %5634 = vrot.lane.b32.xlu0 %v3029, 12
        %v5635 = vpop.permute.xlu0 %5634
        %5636 = vrot.lane.b32.xlu0 %v3030, 12
        %v5637 = vpop.permute.xlu0 %5636
        %5638 = vrot.lane.b32.xlu0 %v3031, 12
        %v5639 = vpop.permute.xlu0 %5638
        %5640 = vrot.lane.b32.xlu0 %v3032, 12
        %v5641 = vpop.permute.xlu0 %5640
        %5642 = vrot.lane.b32.xlu0 %v3033, 12
        %v5643 = vpop.permute.xlu0 %5642
        %5644 = vrot.lane.b32.xlu0 %v3034, 12
        %v5645 = vpop.permute.xlu0 %5644
        %5646 = vrot.lane.b32.xlu0 %v3035, 12
        %v5647 = vpop.permute.xlu0 %5646
        %5648 = vrot.lane.b32.xlu0 %v3036, 12
        %v5649 = vpop.permute.xlu0 %5648
        %5650 = vrot.lane.b32.xlu0 %v3037, 12
        %v5651 = vpop.permute.xlu0 %5650
        %5652 = vrot.lane.b32.xlu0 %v3038, 12
        %v5653 = vpop.permute.xlu0 %5652
        %5654 = vrot.lane.b32.xlu0 %v3039, 12
        %v5655 = vpop.permute.xlu0 %5654
        %5656 = vrot.lane.b32.xlu0 %v3040, 12
        %v5657 = vpop.permute.xlu0 %5656
        %5658 = vrot.lane.b32.xlu0 %v3041, 12
        %v5659 = vpop.permute.xlu0 %5658
        %5660 = vrot.lane.b32.xlu0 %v3042, 12
        %v5661 = vpop.permute.xlu0 %5660
        %5662 = vrot.lane.b32.xlu0 %v3043, 12
        %v5663 = vpop.permute.xlu0 %5662
        %5664 = vrot.lane.b32.xlu0 %v3044, 12
        %v5665 = vpop.permute.xlu0 %5664
        %5666 = vrot.lane.b32.xlu0 %v3045, 12
        %v5667 = vpop.permute.xlu0 %5666
        %5668 = vrot.lane.b32.xlu0 %v3046, 12
        %v5669 = vpop.permute.xlu0 %5668
        %5670 = vrot.lane.b32.xlu0 %v3047, 12
        %v5671 = vpop.permute.xlu0 %5670
        %5672 = vrot.lane.b32.xlu0 %v3048, 12
        %v5673 = vpop.permute.xlu0 %5672
        %5674 = vrot.lane.b32.xlu0 %v3049, 12
        %v5675 = vpop.permute.xlu0 %5674
        %5676 = vrot.lane.b32.xlu0 %v3050, 12
        %v5677 = vpop.permute.xlu0 %5676
        %5678 = vrot.lane.b32.xlu0 %v3051, 12
        %v5679 = vpop.permute.xlu0 %5678
        %5680 = vrot.lane.b32.xlu0 %v3052, 12
        %v5681 = vpop.permute.xlu0 %5680
        %5682 = vrot.lane.b32.xlu0 %v3053, 12
        %v5683 = vpop.permute.xlu0 %5682
        %5684 = vrot.lane.b32.xlu0 %v3054, 12
        %v5685 = vpop.permute.xlu0 %5684
        %5686 = vrot.lane.b32.xlu0 %v3055, 12
        %v5687 = vpop.permute.xlu0 %5686
        %5688 = vrot.lane.b32.xlu0 %v3056, 12
        %v5689 = vpop.permute.xlu0 %5688
        %5690 = vrot.lane.b32.xlu0 %v3057, 12
        %v5691 = vpop.permute.xlu0 %5690
        %5692 = vrot.lane.b32.xlu0 %v3058, 12
        %v5693 = vpop.permute.xlu0 %5692
        %5694 = vrot.lane.b32.xlu0 %v3059, 12
        %v5695 = vpop.permute.xlu0 %5694
        %5696 = vrot.lane.b32.xlu0 %v3060, 12
        %v5697 = vpop.permute.xlu0 %5696
        %5698 = vrot.lane.b32.xlu0 %v3061, 12
        %v5699 = vpop.permute.xlu0 %5698
        %5700 = vrot.lane.b32.xlu0 %v3062, 12
        %v5701 = vpop.permute.xlu0 %5700
        %5702 = vrot.lane.b32.xlu0 %v3063, 12
        %v5703 = vpop.permute.xlu0 %5702
        %5704 = vrot.lane.b32.xlu0 %v3064, 12
        %v5705 = vpop.permute.xlu0 %5704
        %5706 = vrot.lane.b32.xlu0 %v3065, 12
        %v5707 = vpop.permute.xlu0 %5706
        %5708 = vrot.lane.b32.xlu0 %v3066, 12
        %v5709 = vpop.permute.xlu0 %5708
        %5710 = vrot.lane.b32.xlu0 %v3067, 12
        %v5711 = vpop.permute.xlu0 %5710
        %5712 = vrot.lane.b32.xlu0 %v3068, 12
        %v5713 = vpop.permute.xlu0 %5712
        %5714 = vrot.lane.b32.xlu0 %v3069, 12
        %v5715 = vpop.permute.xlu0 %5714
        %5814 = vrot.lane.b32.xlu0 %v3266, 26
        %v5815 = vpop.permute.xlu0 %5814
        %5816 = vrot.lane.b32.xlu0 %v3267, 26
        %v5817 = vpop.permute.xlu0 %5816
        %5818 = vrot.lane.b32.xlu0 %v3268, 26
        %v5819 = vpop.permute.xlu0 %5818
        %5820 = vrot.lane.b32.xlu0 %v3269, 26
        %v5821 = vpop.permute.xlu0 %5820
        %5822 = vrot.lane.b32.xlu0 %v3270, 26
        %v5823 = vpop.permute.xlu0 %5822
        %5824 = vrot.lane.b32.xlu0 %v3271, 26
        %v5825 = vpop.permute.xlu0 %5824
        %5826 = vrot.lane.b32.xlu0 %v3272, 26
        %v5827 = vpop.permute.xlu0 %5826
        %5828 = vrot.lane.b32.xlu0 %v3273, 26
        %v5829 = vpop.permute.xlu0 %5828
        %5830 = vrot.lane.b32.xlu0 %v3274, 26
        %v5831 = vpop.permute.xlu0 %5830
        %5832 = vrot.lane.b32.xlu0 %v3275, 26
        %v5833 = vpop.permute.xlu0 %5832
        %5834 = vrot.lane.b32.xlu0 %v3276, 26
        %v5835 = vpop.permute.xlu0 %5834
        %5836 = vrot.lane.b32.xlu0 %v3277, 26
        %v5837 = vpop.permute.xlu0 %5836
        %5838 = vrot.lane.b32.xlu0 %v3278, 26
        %v5839 = vpop.permute.xlu0 %5838
        %5840 = vrot.lane.b32.xlu0 %v3279, 26
        %v5841 = vpop.permute.xlu0 %5840
        %5842 = vrot.lane.b32.xlu0 %v3280, 26
        %v5843 = vpop.permute.xlu0 %5842
        %5844 = vrot.lane.b32.xlu0 %v3281, 26
        %v5845 = vpop.permute.xlu0 %5844
        %5846 = vrot.lane.b32.xlu0 %v3282, 26
        %v5847 = vpop.permute.xlu0 %5846
        %5848 = vrot.lane.b32.xlu0 %v3283, 26
        %v5849 = vpop.permute.xlu0 %5848
        %5850 = vrot.lane.b32.xlu0 %v3284, 26
        %v5851 = vpop.permute.xlu0 %5850
        %5852 = vrot.lane.b32.xlu0 %v3285, 26
        %v5853 = vpop.permute.xlu0 %5852
        %5854 = vrot.lane.b32.xlu0 %v3286, 26
        %v5855 = vpop.permute.xlu0 %5854
        %5856 = vrot.lane.b32.xlu0 %v3287, 26
        %v5857 = vpop.permute.xlu0 %5856
        %5858 = vrot.lane.b32.xlu0 %v3288, 26
        %v5859 = vpop.permute.xlu0 %5858
        %5860 = vrot.lane.b32.xlu0 %v3289, 26
        %v5861 = vpop.permute.xlu0 %5860
        %5862 = vrot.lane.b32.xlu0 %v3290, 26
        %v5863 = vpop.permute.xlu0 %5862
        %5864 = vrot.lane.b32.xlu0 %v3291, 26
        %v5865 = vpop.permute.xlu0 %5864
        %5866 = vrot.lane.b32.xlu0 %v3292, 26
        %v5867 = vpop.permute.xlu0 %5866
        %5868 = vrot.lane.b32.xlu0 %v3293, 26
        %v5869 = vpop.permute.xlu0 %5868
        %5870 = vrot.lane.b32.xlu0 %v3294, 26
        %v5871 = vpop.permute.xlu0 %5870
        %5872 = vrot.lane.b32.xlu0 %v3295, 26
        %v5873 = vpop.permute.xlu0 %5872
        %5874 = vrot.lane.b32.xlu0 %v3296, 26
        %v5875 = vpop.permute.xlu0 %5874
        %5876 = vrot.lane.b32.xlu0 %v3297, 26
        %v5877 = vpop.permute.xlu0 %5876
        %5878 = vrot.lane.b32.xlu0 %v3298, 26
        %v5879 = vpop.permute.xlu0 %5878
        %5880 = vrot.lane.b32.xlu0 %v3299, 26
        %v5881 = vpop.permute.xlu0 %5880
        %5882 = vrot.lane.b32.xlu0 %v3300, 26
        %v5883 = vpop.permute.xlu0 %5882
        %5884 = vrot.lane.b32.xlu0 %v3301, 26
        %v5885 = vpop.permute.xlu0 %5884
        %5886 = vrot.lane.b32.xlu0 %v3302, 26
        %v5887 = vpop.permute.xlu0 %5886
        %5888 = vrot.lane.b32.xlu0 %v3303, 26
        %v5889 = vpop.permute.xlu0 %5888
        %5890 = vrot.lane.b32.xlu0 %v3304, 26
        %v5891 = vpop.permute.xlu0 %5890
        %5892 = vrot.lane.b32.xlu0 %v3305, 26
        %v5893 = vpop.permute.xlu0 %5892
        %5894 = vrot.lane.b32.xlu0 %v3306, 26
        %v5895 = vpop.permute.xlu0 %5894
        %5896 = vrot.lane.b32.xlu0 %v3307, 26
        %v5897 = vpop.permute.xlu0 %5896
        %5898 = vrot.lane.b32.xlu0 %v3308, 26
        %v5899 = vpop.permute.xlu0 %5898
        %5900 = vrot.lane.b32.xlu0 %v3309, 26
        %v5901 = vpop.permute.xlu0 %5900
        %5902 = vrot.lane.b32.xlu0 %v3310, 26
        %v5903 = vpop.permute.xlu0 %5902
        %5904 = vrot.lane.b32.xlu0 %v3311, 26
        %v5905 = vpop.permute.xlu0 %5904
        %5906 = vrot.lane.b32.xlu0 %v3312, 26
        %v5907 = vpop.permute.xlu0 %5906
        %5908 = vrot.lane.b32.xlu0 %v3313, 26
        %v5909 = vpop.permute.xlu0 %5908
        %5910 = vrot.lane.b32.xlu0 %v3314, 26
        %v5911 = vpop.permute.xlu0 %5910
        %6010 = vrot.lane.b32.xlu0 %v3511, 40
        %v6011 = vpop.permute.xlu0 %6010
        %6012 = vrot.lane.b32.xlu0 %v3512, 40
        %v6013 = vpop.permute.xlu0 %6012
        %6014 = vrot.lane.b32.xlu0 %v3513, 40
        %v6015 = vpop.permute.xlu0 %6014
        %6016 = vrot.lane.b32.xlu0 %v3514, 40
        %v6017 = vpop.permute.xlu0 %6016
        %6018 = vrot.lane.b32.xlu0 %v3515, 40
        %v6019 = vpop.permute.xlu0 %6018
        %6020 = vrot.lane.b32.xlu0 %v3516, 40
        %v6021 = vpop.permute.xlu0 %6020
        %6022 = vrot.lane.b32.xlu0 %v3517, 40
        %v6023 = vpop.permute.xlu0 %6022
        %6024 = vrot.lane.b32.xlu0 %v3518, 40
        %v6025 = vpop.permute.xlu0 %6024
        %6026 = vrot.lane.b32.xlu0 %v3519, 40
        %v6027 = vpop.permute.xlu0 %6026
        %6028 = vrot.lane.b32.xlu0 %v3520, 40
        %v6029 = vpop.permute.xlu0 %6028
        %6030 = vrot.lane.b32.xlu0 %v3521, 40
        %v6031 = vpop.permute.xlu0 %6030
        %6032 = vrot.lane.b32.xlu0 %v3522, 40
        %v6033 = vpop.permute.xlu0 %6032
        %6034 = vrot.lane.b32.xlu0 %v3523, 40
        %v6035 = vpop.permute.xlu0 %6034
        %6036 = vrot.lane.b32.xlu0 %v3524, 40
        %v6037 = vpop.permute.xlu0 %6036
        %6038 = vrot.lane.b32.xlu0 %v3525, 40
        %v6039 = vpop.permute.xlu0 %6038
        %6040 = vrot.lane.b32.xlu0 %v3526, 40
        %v6041 = vpop.permute.xlu0 %6040
        %6042 = vrot.lane.b32.xlu0 %v3527, 40
        %v6043 = vpop.permute.xlu0 %6042
        %6044 = vrot.lane.b32.xlu0 %v3528, 40
        %v6045 = vpop.permute.xlu0 %6044
        %6046 = vrot.lane.b32.xlu0 %v3529, 40
        %v6047 = vpop.permute.xlu0 %6046
        %6048 = vrot.lane.b32.xlu0 %v3530, 40
        %v6049 = vpop.permute.xlu0 %6048
        %6050 = vrot.lane.b32.xlu0 %v3531, 40
        %v6051 = vpop.permute.xlu0 %6050
        %6052 = vrot.lane.b32.xlu0 %v3532, 40
        %v6053 = vpop.permute.xlu0 %6052
        %6054 = vrot.lane.b32.xlu0 %v3533, 40
        %v6055 = vpop.permute.xlu0 %6054
        %6056 = vrot.lane.b32.xlu0 %v3534, 40
        %v6057 = vpop.permute.xlu0 %6056
        %6058 = vrot.lane.b32.xlu0 %v3535, 40
        %v6059 = vpop.permute.xlu0 %6058
        %6060 = vrot.lane.b32.xlu0 %v3536, 40
        %v6061 = vpop.permute.xlu0 %6060
        %6062 = vrot.lane.b32.xlu0 %v3537, 40
        %v6063 = vpop.permute.xlu0 %6062
        %6064 = vrot.lane.b32.xlu0 %v3538, 40
        %v6065 = vpop.permute.xlu0 %6064
        %6066 = vrot.lane.b32.xlu0 %v3539, 40
        %v6067 = vpop.permute.xlu0 %6066
        %6068 = vrot.lane.b32.xlu0 %v3540, 40
        %v6069 = vpop.permute.xlu0 %6068
        %6070 = vrot.lane.b32.xlu0 %v3541, 40
        %v6071 = vpop.permute.xlu0 %6070
        %6072 = vrot.lane.b32.xlu0 %v3542, 40
        %v6073 = vpop.permute.xlu0 %6072
        %6074 = vrot.lane.b32.xlu0 %v3543, 40
        %v6075 = vpop.permute.xlu0 %6074
        %6076 = vrot.lane.b32.xlu0 %v3544, 40
        %v6077 = vpop.permute.xlu0 %6076
        %6078 = vrot.lane.b32.xlu0 %v3545, 40
        %v6079 = vpop.permute.xlu0 %6078
        %6080 = vrot.lane.b32.xlu0 %v3546, 40
        %v6081 = vpop.permute.xlu0 %6080
        %6082 = vrot.lane.b32.xlu0 %v3547, 40
        %v6083 = vpop.permute.xlu0 %6082
        %6084 = vrot.lane.b32.xlu0 %v3548, 40
        %v6085 = vpop.permute.xlu0 %6084
        %6086 = vrot.lane.b32.xlu0 %v3549, 40
        %v6087 = vpop.permute.xlu0 %6086
        %6088 = vrot.lane.b32.xlu0 %v3550, 40
        %v6089 = vpop.permute.xlu0 %6088
        %6090 = vrot.lane.b32.xlu0 %v3551, 40
        %v6091 = vpop.permute.xlu0 %6090
        %6092 = vrot.lane.b32.xlu0 %v3552, 40
        %v6093 = vpop.permute.xlu0 %6092
        %6094 = vrot.lane.b32.xlu0 %v3553, 40
        %v6095 = vpop.permute.xlu0 %6094
        %6096 = vrot.lane.b32.xlu0 %v3554, 40
        %v6097 = vpop.permute.xlu0 %6096
        %6098 = vrot.lane.b32.xlu0 %v3555, 40
        %v6099 = vpop.permute.xlu0 %6098
        %6100 = vrot.lane.b32.xlu0 %v3556, 40
        %v6101 = vpop.permute.xlu0 %6100
        %6102 = vrot.lane.b32.xlu0 %v3557, 40
        %v6103 = vpop.permute.xlu0 %6102
        %6104 = vrot.lane.b32.xlu0 %v3558, 40
        %v6105 = vpop.permute.xlu0 %6104
        %6106 = vrot.lane.b32.xlu0 %v3559, 40
        %v6107 = vpop.permute.xlu0 %6106
        %6206 = vrot.lane.b32.xlu0 %v3756, 54
        %v6207 = vpop.permute.xlu0 %6206
        %6208 = vrot.lane.b32.xlu0 %v3757, 54
        %v6209 = vpop.permute.xlu0 %6208
        %6210 = vrot.lane.b32.xlu0 %v3758, 54
        %v6211 = vpop.permute.xlu0 %6210
        %6212 = vrot.lane.b32.xlu0 %v3759, 54
        %v6213 = vpop.permute.xlu0 %6212
        %6214 = vrot.lane.b32.xlu0 %v3760, 54
        %v6215 = vpop.permute.xlu0 %6214
        %6216 = vrot.lane.b32.xlu0 %v3761, 54
        %v6217 = vpop.permute.xlu0 %6216
        %6218 = vrot.lane.b32.xlu0 %v3762, 54
        %v6219 = vpop.permute.xlu0 %6218
        %6220 = vrot.lane.b32.xlu0 %v3763, 54
        %v6221 = vpop.permute.xlu0 %6220
        %6222 = vrot.lane.b32.xlu0 %v3764, 54
        %v6223 = vpop.permute.xlu0 %6222
        %6224 = vrot.lane.b32.xlu0 %v3765, 54
        %v6225 = vpop.permute.xlu0 %6224
        %6226 = vrot.lane.b32.xlu0 %v3766, 54
        %v6227 = vpop.permute.xlu0 %6226
        %6228 = vrot.lane.b32.xlu0 %v3767, 54
        %v6229 = vpop.permute.xlu0 %6228
        %6230 = vrot.lane.b32.xlu0 %v3768, 54
        %v6231 = vpop.permute.xlu0 %6230
        %6232 = vrot.lane.b32.xlu0 %v3769, 54
        %v6233 = vpop.permute.xlu0 %6232
        %6234 = vrot.lane.b32.xlu0 %v3770, 54
        %v6235 = vpop.permute.xlu0 %6234
        %6236 = vrot.lane.b32.xlu0 %v3771, 54
        %v6237 = vpop.permute.xlu0 %6236
        %6238 = vrot.lane.b32.xlu0 %v3772, 54
        %v6239 = vpop.permute.xlu0 %6238
        %6240 = vrot.lane.b32.xlu0 %v3773, 54
        %v6241 = vpop.permute.xlu0 %6240
        %6242 = vrot.lane.b32.xlu0 %v3774, 54
        %v6243 = vpop.permute.xlu0 %6242
        %6244 = vrot.lane.b32.xlu0 %v3775, 54
        %v6245 = vpop.permute.xlu0 %6244
        %6246 = vrot.lane.b32.xlu0 %v3776, 54
        %v6247 = vpop.permute.xlu0 %6246
        %6248 = vrot.lane.b32.xlu0 %v3777, 54
        %v6249 = vpop.permute.xlu0 %6248
        %6250 = vrot.lane.b32.xlu0 %v3778, 54
        %v6251 = vpop.permute.xlu0 %6250
        %6252 = vrot.lane.b32.xlu0 %v3779, 54
        %v6253 = vpop.permute.xlu0 %6252
        %6254 = vrot.lane.b32.xlu0 %v3780, 54
        %v6255 = vpop.permute.xlu0 %6254
        %6256 = vrot.lane.b32.xlu0 %v3781, 54
        %v6257 = vpop.permute.xlu0 %6256
        %6258 = vrot.lane.b32.xlu0 %v3782, 54
        %v6259 = vpop.permute.xlu0 %6258
        %6260 = vrot.lane.b32.xlu0 %v3783, 54
        %v6261 = vpop.permute.xlu0 %6260
        %6262 = vrot.lane.b32.xlu0 %v3784, 54
        %v6263 = vpop.permute.xlu0 %6262
        %6264 = vrot.lane.b32.xlu0 %v3785, 54
        %v6265 = vpop.permute.xlu0 %6264
        %6266 = vrot.lane.b32.xlu0 %v3786, 54
        %v6267 = vpop.permute.xlu0 %6266
        %6268 = vrot.lane.b32.xlu0 %v3787, 54
        %v6269 = vpop.permute.xlu0 %6268
        %6270 = vrot.lane.b32.xlu0 %v3788, 54
        %v6271 = vpop.permute.xlu0 %6270
        %6272 = vrot.lane.b32.xlu0 %v3789, 54
        %v6273 = vpop.permute.xlu0 %6272
        %6274 = vrot.lane.b32.xlu0 %v3790, 54
        %v6275 = vpop.permute.xlu0 %6274
        %6276 = vrot.lane.b32.xlu0 %v3791, 54
        %v6277 = vpop.permute.xlu0 %6276
        %6278 = vrot.lane.b32.xlu0 %v3792, 54
        %v6279 = vpop.permute.xlu0 %6278
        %6280 = vrot.lane.b32.xlu0 %v3793, 54
        %v6281 = vpop.permute.xlu0 %6280
        %6282 = vrot.lane.b32.xlu0 %v3794, 54
        %v6283 = vpop.permute.xlu0 %6282
        %6284 = vrot.lane.b32.xlu0 %v3795, 54
        %v6285 = vpop.permute.xlu0 %6284
        %6286 = vrot.lane.b32.xlu0 %v3796, 54
        %v6287 = vpop.permute.xlu0 %6286
        %6288 = vrot.lane.b32.xlu0 %v3797, 54
        %v6289 = vpop.permute.xlu0 %6288
        %6290 = vrot.lane.b32.xlu0 %v3798, 54
        %v6291 = vpop.permute.xlu0 %6290
        %6292 = vrot.lane.b32.xlu0 %v3799, 54
        %v6293 = vpop.permute.xlu0 %6292
        %6294 = vrot.lane.b32.xlu0 %v3800, 54
        %v6295 = vpop.permute.xlu0 %6294
        %6296 = vrot.lane.b32.xlu0 %v3801, 54
        %v6297 = vpop.permute.xlu0 %6296
        %6298 = vrot.lane.b32.xlu0 %v3802, 54
        %v6299 = vpop.permute.xlu0 %6298
        %6300 = vrot.lane.b32.xlu0 %v3803, 54
        %v6301 = vpop.permute.xlu0 %6300
        %6302 = vrot.lane.b32.xlu0 %v3804, 54
        %v6303 = vpop.permute.xlu0 %6302
        %vm6353 = vcmask 113664
        %v6354 = vsel %vm6353, %v571, %v3855
        %v6355 = vsel %vm6353, %v572, %v3857
        %v6356 = vsel %vm6353, %v573, %v3859
        %v6357 = vsel %vm6353, %v574, %v3861
        %v6358 = vsel %vm6353, %v575, %v3863
        %v6359 = vsel %vm6353, %v576, %v3865
        %v6360 = vsel %vm6353, %v577, %v3867
        %v6361 = vsel %vm6353, %v578, %v3869
        %v6362 = vsel %vm6353, %v579, %v3871
        %v6363 = vsel %vm6353, %v580, %v3873
        %v6364 = vsel %vm6353, %v581, %v3875
        %v6365 = vsel %vm6353, %v582, %v3877
        %v6366 = vsel %vm6353, %v583, %v3879
        %v6367 = vsel %vm6353, %v584, %v3881
        %v6368 = vsel %vm6353, %v585, %v3883
        %v6369 = vsel %vm6353, %v586, %v3885
        %v6370 = vsel %vm6353, %v587, %v3887
        %v6371 = vsel %vm6353, %v588, %v3889
        %v6372 = vsel %vm6353, %v589, %v3891
        %v6373 = vsel %vm6353, %v590, %v3893
        %v6374 = vsel %vm6353, %v591, %v3895
        %v6375 = vsel %vm6353, %v592, %v3897
        %v6376 = vsel %vm6353, %v593, %v3899
        %v6377 = vsel %vm6353, %v594, %v3901
        %v6378 = vsel %vm6353, %v595, %v3903
        %v6379 = vsel %vm6353, %v596, %v3905
        %v6380 = vsel %vm6353, %v597, %v3907
        %v6381 = vsel %vm6353, %v598, %v3909
        %v6382 = vsel %vm6353, %v599, %v3911
        %v6383 = vsel %vm6353, %v600, %v3913
        %v6384 = vsel %vm6353, %v601, %v3915
        %v6385 = vsel %vm6353, %v602, %v3917
        %v6386 = vsel %vm6353, %v603, %v3919
        %v6387 = vsel %vm6353, %v604, %v3921
        %v6388 = vsel %vm6353, %v605, %v3923
        %v6389 = vsel %vm6353, %v606, %v3925
        %v6390 = vsel %vm6353, %v607, %v3927
        %v6391 = vsel %vm6353, %v608, %v3929
        %v6392 = vsel %vm6353, %v609, %v3931
        %v6393 = vsel %vm6353, %v610, %v3933
        %v6394 = vsel %vm6353, %v611, %v3935
        %v6395 = vsel %vm6353, %v612, %v3937
        %v6396 = vsel %vm6353, %v613, %v3939
        %v6397 = vsel %vm6353, %v614, %v3941
        %v6398 = vsel %vm6353, %v615, %v3943
        %v6399 = vsel %vm6353, %v616, %v3945
        %v6400 = vsel %vm6353, %v617, %v3947
        %v6401 = vsel %vm6353, %v618, %v3949
        %v6402 = vsel %vm6353, %v619, %v3951
        %vm6403 = vcmask 228352
        %v6404 = vsel %vm6403, %v6354, %v4051
        %v6405 = vsel %vm6403, %v6355, %v4053
        %v6406 = vsel %vm6403, %v6356, %v4055
        %v6407 = vsel %vm6403, %v6357, %v4057
        %v6408 = vsel %vm6403, %v6358, %v4059
        %v6409 = vsel %vm6403, %v6359, %v4061
        %v6410 = vsel %vm6403, %v6360, %v4063
        %v6411 = vsel %vm6403, %v6361, %v4065
        %v6412 = vsel %vm6403, %v6362, %v4067
        %v6413 = vsel %vm6403, %v6363, %v4069
        %v6414 = vsel %vm6403, %v6364, %v4071
        %v6415 = vsel %vm6403, %v6365, %v4073
        %v6416 = vsel %vm6403, %v6366, %v4075
        %v6417 = vsel %vm6403, %v6367, %v4077
        %v6418 = vsel %vm6403, %v6368, %v4079
        %v6419 = vsel %vm6403, %v6369, %v4081
        %v6420 = vsel %vm6403, %v6370, %v4083
        %v6421 = vsel %vm6403, %v6371, %v4085
        %v6422 = vsel %vm6403, %v6372, %v4087
        %v6423 = vsel %vm6403, %v6373, %v4089
        %v6424 = vsel %vm6403, %v6374, %v4091
        %v6425 = vsel %vm6403, %v6375, %v4093
        %v6426 = vsel %vm6403, %v6376, %v4095
        %v6427 = vsel %vm6403, %v6377, %v4097
        %v6428 = vsel %vm6403, %v6378, %v4099
        %v6429 = vsel %vm6403, %v6379, %v4101
        %v6430 = vsel %vm6403, %v6380, %v4103
        %v6431 = vsel %vm6403, %v6381, %v4105
        %v6432 = vsel %vm6403, %v6382, %v4107
        %v6433 = vsel %vm6403, %v6383, %v4109
        %v6434 = vsel %vm6403, %v6384, %v4111
        %v6435 = vsel %vm6403, %v6385, %v4113
        %v6436 = vsel %vm6403, %v6386, %v4115
        %v6437 = vsel %vm6403, %v6387, %v4117
        %v6438 = vsel %vm6403, %v6388, %v4119
        %v6439 = vsel %vm6403, %v6389, %v4121
        %v6440 = vsel %vm6403, %v6390, %v4123
        %v6441 = vsel %vm6403, %v6391, %v4125
        %v6442 = vsel %vm6403, %v6392, %v4127
        %v6443 = vsel %vm6403, %v6393, %v4129
        %v6444 = vsel %vm6403, %v6394, %v4131
        %v6445 = vsel %vm6403, %v6395, %v4133
        %v6446 = vsel %vm6403, %v6396, %v4135
        %v6447 = vsel %vm6403, %v6397, %v4137
        %v6448 = vsel %vm6403, %v6398, %v4139
        %v6449 = vsel %vm6403, %v6399, %v4141
        %v6450 = vsel %vm6403, %v6400, %v4143
        %v6451 = vsel %vm6403, %v6401, %v4145
        %v6452 = vsel %vm6403, %v6402, %v4147
        %vm6453 = vcmask 343040
        %v6454 = vsel %vm6453, %v6404, %v4247
        %v6455 = vsel %vm6453, %v6405, %v4249
        %v6456 = vsel %vm6453, %v6406, %v4251
        %v6457 = vsel %vm6453, %v6407, %v4253
        %v6458 = vsel %vm6453, %v6408, %v4255
        %v6459 = vsel %vm6453, %v6409, %v4257
        %v6460 = vsel %vm6453, %v6410, %v4259
        %v6461 = vsel %vm6453, %v6411, %v4261
        %v6462 = vsel %vm6453, %v6412, %v4263
        %v6463 = vsel %vm6453, %v6413, %v4265
        %v6464 = vsel %vm6453, %v6414, %v4267
        %v6465 = vsel %vm6453, %v6415, %v4269
        %v6466 = vsel %vm6453, %v6416, %v4271
        %v6467 = vsel %vm6453, %v6417, %v4273
        %v6468 = vsel %vm6453, %v6418, %v4275
        %v6469 = vsel %vm6453, %v6419, %v4277
        %v6470 = vsel %vm6453, %v6420, %v4279
        %v6471 = vsel %vm6453, %v6421, %v4281
        %v6472 = vsel %vm6453, %v6422, %v4283
        %v6473 = vsel %vm6453, %v6423, %v4285
        %v6474 = vsel %vm6453, %v6424, %v4287
        %v6475 = vsel %vm6453, %v6425, %v4289
        %v6476 = vsel %vm6453, %v6426, %v4291
        %v6477 = vsel %vm6453, %v6427, %v4293
        %v6478 = vsel %vm6453, %v6428, %v4295
        %v6479 = vsel %vm6453, %v6429, %v4297
        %v6480 = vsel %vm6453, %v6430, %v4299
        %v6481 = vsel %vm6453, %v6431, %v4301
        %v6482 = vsel %vm6453, %v6432, %v4303
        %v6483 = vsel %vm6453, %v6433, %v4305
        %v6484 = vsel %vm6453, %v6434, %v4307
        %v6485 = vsel %vm6453, %v6435, %v4309
        %v6486 = vsel %vm6453, %v6436, %v4311
        %v6487 = vsel %vm6453, %v6437, %v4313
        %v6488 = vsel %vm6453, %v6438, %v4315
        %v6489 = vsel %vm6453, %v6439, %v4317
        %v6490 = vsel %vm6453, %v6440, %v4319
        %v6491 = vsel %vm6453, %v6441, %v4321
        %v6492 = vsel %vm6453, %v6442, %v4323
        %v6493 = vsel %vm6453, %v6443, %v4325
        %v6494 = vsel %vm6453, %v6444, %v4327
        %v6495 = vsel %vm6453, %v6445, %v4329
        %v6496 = vsel %vm6453, %v6446, %v4331
        %v6497 = vsel %vm6453, %v6447, %v4333
        %v6498 = vsel %vm6453, %v6448, %v4335
        %v6499 = vsel %vm6453, %v6449, %v4337
        %v6500 = vsel %vm6453, %v6450, %v4339
        %v6501 = vsel %vm6453, %v6451, %v4341
        %v6502 = vsel %vm6453, %v6452, %v4343
        %vm6503 = vcmask 457728
        %v6504 = vsel %vm6503, %v6454, %v4443
        %v6505 = vsel %vm6503, %v6455, %v4445
        %v6506 = vsel %vm6503, %v6456, %v4447
        %v6507 = vsel %vm6503, %v6457, %v4449
        %v6508 = vsel %vm6503, %v6458, %v4451
        %v6509 = vsel %vm6503, %v6459, %v4453
        %v6510 = vsel %vm6503, %v6460, %v4455
        %v6511 = vsel %vm6503, %v6461, %v4457
        %v6512 = vsel %vm6503, %v6462, %v4459
        %v6513 = vsel %vm6503, %v6463, %v4461
        %v6514 = vsel %vm6503, %v6464, %v4463
        %v6515 = vsel %vm6503, %v6465, %v4465
        %v6516 = vsel %vm6503, %v6466, %v4467
        %v6517 = vsel %vm6503, %v6467, %v4469
        %v6518 = vsel %vm6503, %v6468, %v4471
        %v6519 = vsel %vm6503, %v6469, %v4473
        %v6520 = vsel %vm6503, %v6470, %v4475
        %v6521 = vsel %vm6503, %v6471, %v4477
        %v6522 = vsel %vm6503, %v6472, %v4479
        %v6523 = vsel %vm6503, %v6473, %v4481
        %v6524 = vsel %vm6503, %v6474, %v4483
        %v6525 = vsel %vm6503, %v6475, %v4485
        %v6526 = vsel %vm6503, %v6476, %v4487
        %v6527 = vsel %vm6503, %v6477, %v4489
        %v6528 = vsel %vm6503, %v6478, %v4491
        %v6529 = vsel %vm6503, %v6479, %v4493
        %v6530 = vsel %vm6503, %v6480, %v4495
        %v6531 = vsel %vm6503, %v6481, %v4497
        %v6532 = vsel %vm6503, %v6482, %v4499
        %v6533 = vsel %vm6503, %v6483, %v4501
        %v6534 = vsel %vm6503, %v6484, %v4503
        %v6535 = vsel %vm6503, %v6485, %v4505
        %v6536 = vsel %vm6503, %v6486, %v4507
        %v6537 = vsel %vm6503, %v6487, %v4509
        %v6538 = vsel %vm6503, %v6488, %v4511
        %v6539 = vsel %vm6503, %v6489, %v4513
        %v6540 = vsel %vm6503, %v6490, %v4515
        %v6541 = vsel %vm6503, %v6491, %v4517
        %v6542 = vsel %vm6503, %v6492, %v4519
        %v6543 = vsel %vm6503, %v6493, %v4521
        %v6544 = vsel %vm6503, %v6494, %v4523
        %v6545 = vsel %vm6503, %v6495, %v4525
        %v6546 = vsel %vm6503, %v6496, %v4527
        %v6547 = vsel %vm6503, %v6497, %v4529
        %v6548 = vsel %vm6503, %v6498, %v4531
        %v6549 = vsel %vm6503, %v6499, %v4533
        %v6550 = vsel %vm6503, %v6500, %v4535
        %v6551 = vsel %vm6503, %v6501, %v4537
        %v6552 = vsel %vm6503, %v6502, %v4539
        %vm6553 = vcmask 572416
        %v6554 = vsel %vm6553, %v6504, %v4639
        %v6555 = vsel %vm6553, %v6505, %v4641
        %v6556 = vsel %vm6553, %v6506, %v4643
        %v6557 = vsel %vm6553, %v6507, %v4645
        %v6558 = vsel %vm6553, %v6508, %v4647
        %v6559 = vsel %vm6553, %v6509, %v4649
        %v6560 = vsel %vm6553, %v6510, %v4651
        %v6561 = vsel %vm6553, %v6511, %v4653
        %v6562 = vsel %vm6553, %v6512, %v4655
        %v6563 = vsel %vm6553, %v6513, %v4657
        %v6564 = vsel %vm6553, %v6514, %v4659
        %v6565 = vsel %vm6553, %v6515, %v4661
        %v6566 = vsel %vm6553, %v6516, %v4663
        %v6567 = vsel %vm6553, %v6517, %v4665
        %v6568 = vsel %vm6553, %v6518, %v4667
        %v6569 = vsel %vm6553, %v6519, %v4669
        %v6570 = vsel %vm6553, %v6520, %v4671
        %v6571 = vsel %vm6553, %v6521, %v4673
        %v6572 = vsel %vm6553, %v6522, %v4675
        %v6573 = vsel %vm6553, %v6523, %v4677
        %v6574 = vsel %vm6553, %v6524, %v4679
        %v6575 = vsel %vm6553, %v6525, %v4681
        %v6576 = vsel %vm6553, %v6526, %v4683
        %v6577 = vsel %vm6553, %v6527, %v4685
        %v6578 = vsel %vm6553, %v6528, %v4687
        %v6579 = vsel %vm6553, %v6529, %v4689
        %v6580 = vsel %vm6553, %v6530, %v4691
        %v6581 = vsel %vm6553, %v6531, %v4693
        %v6582 = vsel %vm6553, %v6532, %v4695
        %v6583 = vsel %vm6553, %v6533, %v4697
        %v6584 = vsel %vm6553, %v6534, %v4699
        %v6585 = vsel %vm6553, %v6535, %v4701
        %v6586 = vsel %vm6553, %v6536, %v4703
        %v6587 = vsel %vm6553, %v6537, %v4705
        %v6588 = vsel %vm6553, %v6538, %v4707
        %v6589 = vsel %vm6553, %v6539, %v4709
        %v6590 = vsel %vm6553, %v6540, %v4711
        %v6591 = vsel %vm6553, %v6541, %v4713
        %v6592 = vsel %vm6553, %v6542, %v4715
        %v6593 = vsel %vm6553, %v6543, %v4717
        %v6594 = vsel %vm6553, %v6544, %v4719
        %v6595 = vsel %vm6553, %v6545, %v4721
        %v6596 = vsel %vm6553, %v6546, %v4723
        %v6597 = vsel %vm6553, %v6547, %v4725
        %v6598 = vsel %vm6553, %v6548, %v4727
        %v6599 = vsel %vm6553, %v6549, %v4729
        %v6600 = vsel %vm6553, %v6550, %v4731
        %v6601 = vsel %vm6553, %v6551, %v4733
        %v6602 = vsel %vm6553, %v6552, %v4735
        %vm6603 = vcmask 687104
        %v6604 = vsel %vm6603, %v6554, %v4835
        %v6605 = vsel %vm6603, %v6555, %v4837
        %v6606 = vsel %vm6603, %v6556, %v4839
        %v6607 = vsel %vm6603, %v6557, %v4841
        %v6608 = vsel %vm6603, %v6558, %v4843
        %v6609 = vsel %vm6603, %v6559, %v4845
        %v6610 = vsel %vm6603, %v6560, %v4847
        %v6611 = vsel %vm6603, %v6561, %v4849
        %v6612 = vsel %vm6603, %v6562, %v4851
        %v6613 = vsel %vm6603, %v6563, %v4853
        %v6614 = vsel %vm6603, %v6564, %v4855
        %v6615 = vsel %vm6603, %v6565, %v4857
        %v6616 = vsel %vm6603, %v6566, %v4859
        %v6617 = vsel %vm6603, %v6567, %v4861
        %v6618 = vsel %vm6603, %v6568, %v4863
        %v6619 = vsel %vm6603, %v6569, %v4865
        %v6620 = vsel %vm6603, %v6570, %v4867
        %v6621 = vsel %vm6603, %v6571, %v4869
        %v6622 = vsel %vm6603, %v6572, %v4871
        %v6623 = vsel %vm6603, %v6573, %v4873
        %v6624 = vsel %vm6603, %v6574, %v4875
        %v6625 = vsel %vm6603, %v6575, %v4877
        %v6626 = vsel %vm6603, %v6576, %v4879
        %v6627 = vsel %vm6603, %v6577, %v4881
        %v6628 = vsel %vm6603, %v6578, %v4883
        %v6629 = vsel %vm6603, %v6579, %v4885
        %v6630 = vsel %vm6603, %v6580, %v4887
        %v6631 = vsel %vm6603, %v6581, %v4889
        %v6632 = vsel %vm6603, %v6582, %v4891
        %v6633 = vsel %vm6603, %v6583, %v4893
        %v6634 = vsel %vm6603, %v6584, %v4895
        %v6635 = vsel %vm6603, %v6585, %v4897
        %v6636 = vsel %vm6603, %v6586, %v4899
        %v6637 = vsel %vm6603, %v6587, %v4901
        %v6638 = vsel %vm6603, %v6588, %v4903
        %v6639 = vsel %vm6603, %v6589, %v4905
        %v6640 = vsel %vm6603, %v6590, %v4907
        %v6641 = vsel %vm6603, %v6591, %v4909
        %v6642 = vsel %vm6603, %v6592, %v4911
        %v6643 = vsel %vm6603, %v6593, %v4913
        %v6644 = vsel %vm6603, %v6594, %v4915
        %v6645 = vsel %vm6603, %v6595, %v4917
        %v6646 = vsel %vm6603, %v6596, %v4919
        %v6647 = vsel %vm6603, %v6597, %v4921
        %v6648 = vsel %vm6603, %v6598, %v4923
        %v6649 = vsel %vm6603, %v6599, %v4925
        %v6650 = vsel %vm6603, %v6600, %v4927
        %v6651 = vsel %vm6603, %v6601, %v4929
        %v6652 = vsel %vm6603, %v6602, %v4931
        %vm6653 = vcmask 801792
        %v6654 = vsel %vm6653, %v6604, %v5031
        %v6655 = vsel %vm6653, %v6605, %v5033
        %v6656 = vsel %vm6653, %v6606, %v5035
        %v6657 = vsel %vm6653, %v6607, %v5037
        %v6658 = vsel %vm6653, %v6608, %v5039
        %v6659 = vsel %vm6653, %v6609, %v5041
        %v6660 = vsel %vm6653, %v6610, %v5043
        %v6661 = vsel %vm6653, %v6611, %v5045
        %v6662 = vsel %vm6653, %v6612, %v5047
        %v6663 = vsel %vm6653, %v6613, %v5049
        %v6664 = vsel %vm6653, %v6614, %v5051
        %v6665 = vsel %vm6653, %v6615, %v5053
        %v6666 = vsel %vm6653, %v6616, %v5055
        %v6667 = vsel %vm6653, %v6617, %v5057
        %v6668 = vsel %vm6653, %v6618, %v5059
        %v6669 = vsel %vm6653, %v6619, %v5061
        %v6670 = vsel %vm6653, %v6620, %v5063
        %v6671 = vsel %vm6653, %v6621, %v5065
        %v6672 = vsel %vm6653, %v6622, %v5067
        %v6673 = vsel %vm6653, %v6623, %v5069
        %v6674 = vsel %vm6653, %v6624, %v5071
        %v6675 = vsel %vm6653, %v6625, %v5073
        %v6676 = vsel %vm6653, %v6626, %v5075
        %v6677 = vsel %vm6653, %v6627, %v5077
        %v6678 = vsel %vm6653, %v6628, %v5079
        %v6679 = vsel %vm6653, %v6629, %v5081
        %v6680 = vsel %vm6653, %v6630, %v5083
        %v6681 = vsel %vm6653, %v6631, %v5085
        %v6682 = vsel %vm6653, %v6632, %v5087
        %v6683 = vsel %vm6653, %v6633, %v5089
        %v6684 = vsel %vm6653, %v6634, %v5091
        %v6685 = vsel %vm6653, %v6635, %v5093
        %v6686 = vsel %vm6653, %v6636, %v5095
        %v6687 = vsel %vm6653, %v6637, %v5097
        %v6688 = vsel %vm6653, %v6638, %v5099
        %v6689 = vsel %vm6653, %v6639, %v5101
        %v6690 = vsel %vm6653, %v6640, %v5103
        %v6691 = vsel %vm6653, %v6641, %v5105
        %v6692 = vsel %vm6653, %v6642, %v5107
        %v6693 = vsel %vm6653, %v6643, %v5109
        %v6694 = vsel %vm6653, %v6644, %v5111
        %v6695 = vsel %vm6653, %v6645, %v5113
        %v6696 = vsel %vm6653, %v6646, %v5115
        %v6697 = vsel %vm6653, %v6647, %v5117
        %v6698 = vsel %vm6653, %v6648, %v5119
        %v6699 = vsel %vm6653, %v6649, %v5121
        %v6700 = vsel %vm6653, %v6650, %v5123
        %v6701 = vsel %vm6653, %v6651, %v5125
        %v6702 = vsel %vm6653, %v6652, %v5127
        %vm6703 = vcmask 916480
        %v6704 = vsel %vm6703, %v6654, %v5227
        %v6705 = vsel %vm6703, %v6655, %v5229
        %v6706 = vsel %vm6703, %v6656, %v5231
        %v6707 = vsel %vm6703, %v6657, %v5233
        %v6708 = vsel %vm6703, %v6658, %v5235
        %v6709 = vsel %vm6703, %v6659, %v5237
        %v6710 = vsel %vm6703, %v6660, %v5239
        %v6711 = vsel %vm6703, %v6661, %v5241
        %v6712 = vsel %vm6703, %v6662, %v5243
        %v6713 = vsel %vm6703, %v6663, %v5245
        %v6714 = vsel %vm6703, %v6664, %v5247
        %v6715 = vsel %vm6703, %v6665, %v5249
        %v6716 = vsel %vm6703, %v6666, %v5251
        %v6717 = vsel %vm6703, %v6667, %v5253
        %v6718 = vsel %vm6703, %v6668, %v5255
        %v6719 = vsel %vm6703, %v6669, %v5257
        %v6720 = vsel %vm6703, %v6670, %v5259
        %v6721 = vsel %vm6703, %v6671, %v5261
        %v6722 = vsel %vm6703, %v6672, %v5263
        %v6723 = vsel %vm6703, %v6673, %v5265
        %v6724 = vsel %vm6703, %v6674, %v5267
        %v6725 = vsel %vm6703, %v6675, %v5269
        %v6726 = vsel %vm6703, %v6676, %v5271
        %v6727 = vsel %vm6703, %v6677, %v5273
        %v6728 = vsel %vm6703, %v6678, %v5275
        %v6729 = vsel %vm6703, %v6679, %v5277
        %v6730 = vsel %vm6703, %v6680, %v5279
        %v6731 = vsel %vm6703, %v6681, %v5281
        %v6732 = vsel %vm6703, %v6682, %v5283
        %v6733 = vsel %vm6703, %v6683, %v5285
        %v6734 = vsel %vm6703, %v6684, %v5287
        %v6735 = vsel %vm6703, %v6685, %v5289
        %v6736 = vsel %vm6703, %v6686, %v5291
        %v6737 = vsel %vm6703, %v6687, %v5293
        %v6738 = vsel %vm6703, %v6688, %v5295
        %v6739 = vsel %vm6703, %v6689, %v5297
        %v6740 = vsel %vm6703, %v6690, %v5299
        %v6741 = vsel %vm6703, %v6691, %v5301
        %v6742 = vsel %vm6703, %v6692, %v5303
        %v6743 = vsel %vm6703, %v6693, %v5305
        %v6744 = vsel %vm6703, %v6694, %v5307
        %v6745 = vsel %vm6703, %v6695, %v5309
        %v6746 = vsel %vm6703, %v6696, %v5311
        %v6747 = vsel %vm6703, %v6697, %v5313
        %v6748 = vsel %vm6703, %v6698, %v5315
        %v6749 = vsel %vm6703, %v6699, %v5317
        %v6750 = vsel %vm6703, %v6700, %v5319
        %v6751 = vsel %vm6703, %v6701, %v5321
        %v6752 = vsel %vm6703, %v6702, %v5323
        %vm6753 = vcmask 1031168
        %v6754 = vsel %vm6753, %v6704, %v5423
        %v6755 = vsel %vm6753, %v6705, %v5425
        %v6756 = vsel %vm6753, %v6706, %v5427
        %v6757 = vsel %vm6753, %v6707, %v5429
        %v6758 = vsel %vm6753, %v6708, %v5431
        %v6759 = vsel %vm6753, %v6709, %v5433
        %v6760 = vsel %vm6753, %v6710, %v5435
        %v6761 = vsel %vm6753, %v6711, %v5437
        %v6762 = vsel %vm6753, %v6712, %v5439
        %v6763 = vsel %vm6753, %v6713, %v5441
        %v6764 = vsel %vm6753, %v6714, %v5443
        %v6765 = vsel %vm6753, %v6715, %v5445
        %v6766 = vsel %vm6753, %v6716, %v5447
        %v6767 = vsel %vm6753, %v6717, %v5449
        %v6768 = vsel %vm6753, %v6718, %v5451
        %v6769 = vsel %vm6753, %v6719, %v5453
        %v6770 = vsel %vm6753, %v6720, %v5455
        %v6771 = vsel %vm6753, %v6721, %v5457
        %v6772 = vsel %vm6753, %v6722, %v5459
        %v6773 = vsel %vm6753, %v6723, %v5461
        %v6774 = vsel %vm6753, %v6724, %v5463
        %v6775 = vsel %vm6753, %v6725, %v5465
        %v6776 = vsel %vm6753, %v6726, %v5467
        %v6777 = vsel %vm6753, %v6727, %v5469
        %v6778 = vsel %vm6753, %v6728, %v5471
        %v6779 = vsel %vm6753, %v6729, %v5473
        %v6780 = vsel %vm6753, %v6730, %v5475
        %v6781 = vsel %vm6753, %v6731, %v5477
        %v6782 = vsel %vm6753, %v6732, %v5479
        %v6783 = vsel %vm6753, %v6733, %v5481
        %v6784 = vsel %vm6753, %v6734, %v5483
        %v6785 = vsel %vm6753, %v6735, %v5485
        %v6786 = vsel %vm6753, %v6736, %v5487
        %v6787 = vsel %vm6753, %v6737, %v5489
        %v6788 = vsel %vm6753, %v6738, %v5491
        %v6789 = vsel %vm6753, %v6739, %v5493
        %v6790 = vsel %vm6753, %v6740, %v5495
        %v6791 = vsel %vm6753, %v6741, %v5497
        %v6792 = vsel %vm6753, %v6742, %v5499
        %v6793 = vsel %vm6753, %v6743, %v5501
        %v6794 = vsel %vm6753, %v6744, %v5503
        %v6795 = vsel %vm6753, %v6745, %v5505
        %v6796 = vsel %vm6753, %v6746, %v5507
        %v6797 = vsel %vm6753, %v6747, %v5509
        %v6798 = vsel %vm6753, %v6748, %v5511
        %v6799 = vsel %vm6753, %v6749, %v5513
        %v6800 = vsel %vm6753, %v6750, %v5515
        %v6801 = vsel %vm6753, %v6751, %v5517
        %v6802 = vsel %vm6753, %v6752, %v5519
        %vm6803 = vcmask 97280
        %v6804 = vsel %vm6803, %v5423, %v5619
        %v6805 = vsel %vm6803, %v5425, %v5621
        %v6806 = vsel %vm6803, %v5427, %v5623
        %v6807 = vsel %vm6803, %v5429, %v5625
        %v6808 = vsel %vm6803, %v5431, %v5627
        %v6809 = vsel %vm6803, %v5433, %v5629
        %v6810 = vsel %vm6803, %v5435, %v5631
        %v6811 = vsel %vm6803, %v5437, %v5633
        %v6812 = vsel %vm6803, %v5439, %v5635
        %v6813 = vsel %vm6803, %v5441, %v5637
        %v6814 = vsel %vm6803, %v5443, %v5639
        %v6815 = vsel %vm6803, %v5445, %v5641
        %v6816 = vsel %vm6803, %v5447, %v5643
        %v6817 = vsel %vm6803, %v5449, %v5645
        %v6818 = vsel %vm6803, %v5451, %v5647
        %v6819 = vsel %vm6803, %v5453, %v5649
        %v6820 = vsel %vm6803, %v5455, %v5651
        %v6821 = vsel %vm6803, %v5457, %v5653
        %v6822 = vsel %vm6803, %v5459, %v5655
        %v6823 = vsel %vm6803, %v5461, %v5657
        %v6824 = vsel %vm6803, %v5463, %v5659
        %v6825 = vsel %vm6803, %v5465, %v5661
        %v6826 = vsel %vm6803, %v5467, %v5663
        %v6827 = vsel %vm6803, %v5469, %v5665
        %v6828 = vsel %vm6803, %v5471, %v5667
        %v6829 = vsel %vm6803, %v5473, %v5669
        %v6830 = vsel %vm6803, %v5475, %v5671
        %v6831 = vsel %vm6803, %v5477, %v5673
        %v6832 = vsel %vm6803, %v5479, %v5675
        %v6833 = vsel %vm6803, %v5481, %v5677
        %v6834 = vsel %vm6803, %v5483, %v5679
        %v6835 = vsel %vm6803, %v5485, %v5681
        %v6836 = vsel %vm6803, %v5487, %v5683
        %v6837 = vsel %vm6803, %v5489, %v5685
        %v6838 = vsel %vm6803, %v5491, %v5687
        %v6839 = vsel %vm6803, %v5493, %v5689
        %v6840 = vsel %vm6803, %v5495, %v5691
        %v6841 = vsel %vm6803, %v5497, %v5693
        %v6842 = vsel %vm6803, %v5499, %v5695
        %v6843 = vsel %vm6803, %v5501, %v5697
        %v6844 = vsel %vm6803, %v5503, %v5699
        %v6845 = vsel %vm6803, %v5505, %v5701
        %v6846 = vsel %vm6803, %v5507, %v5703
        %v6847 = vsel %vm6803, %v5509, %v5705
        %v6848 = vsel %vm6803, %v5511, %v5707
        %v6849 = vsel %vm6803, %v5513, %v5709
        %v6850 = vsel %vm6803, %v5515, %v5711
        %v6851 = vsel %vm6803, %v5517, %v5713
        %v6852 = vsel %vm6803, %v5519, %v5715
        %vm6853 = vcmask 211968
        %v6854 = vsel %vm6853, %v6804, %v5815
        %v6855 = vsel %vm6853, %v6805, %v5817
        %v6856 = vsel %vm6853, %v6806, %v5819
        %v6857 = vsel %vm6853, %v6807, %v5821
        %v6858 = vsel %vm6853, %v6808, %v5823
        %v6859 = vsel %vm6853, %v6809, %v5825
        %v6860 = vsel %vm6853, %v6810, %v5827
        %v6861 = vsel %vm6853, %v6811, %v5829
        %v6862 = vsel %vm6853, %v6812, %v5831
        %v6863 = vsel %vm6853, %v6813, %v5833
        %v6864 = vsel %vm6853, %v6814, %v5835
        %v6865 = vsel %vm6853, %v6815, %v5837
        %v6866 = vsel %vm6853, %v6816, %v5839
        %v6867 = vsel %vm6853, %v6817, %v5841
        %v6868 = vsel %vm6853, %v6818, %v5843
        %v6869 = vsel %vm6853, %v6819, %v5845
        %v6870 = vsel %vm6853, %v6820, %v5847
        %v6871 = vsel %vm6853, %v6821, %v5849
        %v6872 = vsel %vm6853, %v6822, %v5851
        %v6873 = vsel %vm6853, %v6823, %v5853
        %v6874 = vsel %vm6853, %v6824, %v5855
        %v6875 = vsel %vm6853, %v6825, %v5857
        %v6876 = vsel %vm6853, %v6826, %v5859
        %v6877 = vsel %vm6853, %v6827, %v5861
        %v6878 = vsel %vm6853, %v6828, %v5863
        %v6879 = vsel %vm6853, %v6829, %v5865
        %v6880 = vsel %vm6853, %v6830, %v5867
        %v6881 = vsel %vm6853, %v6831, %v5869
        %v6882 = vsel %vm6853, %v6832, %v5871
        %v6883 = vsel %vm6853, %v6833, %v5873
        %v6884 = vsel %vm6853, %v6834, %v5875
        %v6885 = vsel %vm6853, %v6835, %v5877
        %v6886 = vsel %vm6853, %v6836, %v5879
        %v6887 = vsel %vm6853, %v6837, %v5881
        %v6888 = vsel %vm6853, %v6838, %v5883
        %v6889 = vsel %vm6853, %v6839, %v5885
        %v6890 = vsel %vm6853, %v6840, %v5887
        %v6891 = vsel %vm6853, %v6841, %v5889
        %v6892 = vsel %vm6853, %v6842, %v5891
        %v6893 = vsel %vm6853, %v6843, %v5893
        %v6894 = vsel %vm6853, %v6844, %v5895
        %v6895 = vsel %vm6853, %v6845, %v5897
        %v6896 = vsel %vm6853, %v6846, %v5899
        %v6897 = vsel %vm6853, %v6847, %v5901
        %v6898 = vsel %vm6853, %v6848, %v5903
        %v6899 = vsel %vm6853, %v6849, %v5905
        %v6900 = vsel %vm6853, %v6850, %v5907
        %v6901 = vsel %vm6853, %v6851, %v5909
        %v6902 = vsel %vm6853, %v6852, %v5911
        %vm6903 = vcmask 326656
        %v6904 = vsel %vm6903, %v6854, %v6011
        %v6905 = vsel %vm6903, %v6855, %v6013
        %v6906 = vsel %vm6903, %v6856, %v6015
        %v6907 = vsel %vm6903, %v6857, %v6017
        %v6908 = vsel %vm6903, %v6858, %v6019
        %v6909 = vsel %vm6903, %v6859, %v6021
        %v6910 = vsel %vm6903, %v6860, %v6023
        %v6911 = vsel %vm6903, %v6861, %v6025
        %v6912 = vsel %vm6903, %v6862, %v6027
        %v6913 = vsel %vm6903, %v6863, %v6029
        %v6914 = vsel %vm6903, %v6864, %v6031
        %v6915 = vsel %vm6903, %v6865, %v6033
        %v6916 = vsel %vm6903, %v6866, %v6035
        %v6917 = vsel %vm6903, %v6867, %v6037
        %v6918 = vsel %vm6903, %v6868, %v6039
        %v6919 = vsel %vm6903, %v6869, %v6041
        %v6920 = vsel %vm6903, %v6870, %v6043
        %v6921 = vsel %vm6903, %v6871, %v6045
        %v6922 = vsel %vm6903, %v6872, %v6047
        %v6923 = vsel %vm6903, %v6873, %v6049
        %v6924 = vsel %vm6903, %v6874, %v6051
        %v6925 = vsel %vm6903, %v6875, %v6053
        %v6926 = vsel %vm6903, %v6876, %v6055
        %v6927 = vsel %vm6903, %v6877, %v6057
        %v6928 = vsel %vm6903, %v6878, %v6059
        %v6929 = vsel %vm6903, %v6879, %v6061
        %v6930 = vsel %vm6903, %v6880, %v6063
        %v6931 = vsel %vm6903, %v6881, %v6065
        %v6932 = vsel %vm6903, %v6882, %v6067
        %v6933 = vsel %vm6903, %v6883, %v6069
        %v6934 = vsel %vm6903, %v6884, %v6071
        %v6935 = vsel %vm6903, %v6885, %v6073
        %v6936 = vsel %vm6903, %v6886, %v6075
        %v6937 = vsel %vm6903, %v6887, %v6077
        %v6938 = vsel %vm6903, %v6888, %v6079
        %v6939 = vsel %vm6903, %v6889, %v6081
        %v6940 = vsel %vm6903, %v6890, %v6083
        %v6941 = vsel %vm6903, %v6891, %v6085
        %v6942 = vsel %vm6903, %v6892, %v6087
        %v6943 = vsel %vm6903, %v6893, %v6089
        %v6944 = vsel %vm6903, %v6894, %v6091
        %v6945 = vsel %vm6903, %v6895, %v6093
        %v6946 = vsel %vm6903, %v6896, %v6095
        %v6947 = vsel %vm6903, %v6897, %v6097
        %v6948 = vsel %vm6903, %v6898, %v6099
        %v6949 = vsel %vm6903, %v6899, %v6101
        %v6950 = vsel %vm6903, %v6900, %v6103
        %v6951 = vsel %vm6903, %v6901, %v6105
        %v6952 = vsel %vm6903, %v6902, %v6107
        %vm6953 = vcmask 441344
        %v6954 = vsel %vm6953, %v6904, %v6207
        %v6955 = vsel %vm6953, %v6905, %v6209
        %v6956 = vsel %vm6953, %v6906, %v6211
        %v6957 = vsel %vm6953, %v6907, %v6213
        %v6958 = vsel %vm6953, %v6908, %v6215
        %v6959 = vsel %vm6953, %v6909, %v6217
        %v6960 = vsel %vm6953, %v6910, %v6219
        %v6961 = vsel %vm6953, %v6911, %v6221
        %v6962 = vsel %vm6953, %v6912, %v6223
        %v6963 = vsel %vm6953, %v6913, %v6225
        %v6964 = vsel %vm6953, %v6914, %v6227
        %v6965 = vsel %vm6953, %v6915, %v6229
        %v6966 = vsel %vm6953, %v6916, %v6231
        %v6967 = vsel %vm6953, %v6917, %v6233
        %v6968 = vsel %vm6953, %v6918, %v6235
        %v6969 = vsel %vm6953, %v6919, %v6237
        %v6970 = vsel %vm6953, %v6920, %v6239
        %v6971 = vsel %vm6953, %v6921, %v6241
        %v6972 = vsel %vm6953, %v6922, %v6243
        %v6973 = vsel %vm6953, %v6923, %v6245
        %v6974 = vsel %vm6953, %v6924, %v6247
        %v6975 = vsel %vm6953, %v6925, %v6249
        %v6976 = vsel %vm6953, %v6926, %v6251
        %v6977 = vsel %vm6953, %v6927, %v6253
        %v6978 = vsel %vm6953, %v6928, %v6255
        %v6979 = vsel %vm6953, %v6929, %v6257
        %v6980 = vsel %vm6953, %v6930, %v6259
        %v6981 = vsel %vm6953, %v6931, %v6261
        %v6982 = vsel %vm6953, %v6932, %v6263
        %v6983 = vsel %vm6953, %v6933, %v6265
        %v6984 = vsel %vm6953, %v6934, %v6267
        %v6985 = vsel %vm6953, %v6935, %v6269
        %v6986 = vsel %vm6953, %v6936, %v6271
        %v6987 = vsel %vm6953, %v6937, %v6273
        %v6988 = vsel %vm6953, %v6938, %v6275
        %v6989 = vsel %vm6953, %v6939, %v6277
        %v6990 = vsel %vm6953, %v6940, %v6279
        %v6991 = vsel %vm6953, %v6941, %v6281
        %v6992 = vsel %vm6953, %v6942, %v6283
        %v6993 = vsel %vm6953, %v6943, %v6285
        %v6994 = vsel %vm6953, %v6944, %v6287
        %v6995 = vsel %vm6953, %v6945, %v6289
        %v6996 = vsel %vm6953, %v6946, %v6291
        %v6997 = vsel %vm6953, %v6947, %v6293
        %v6998 = vsel %vm6953, %v6948, %v6295
        %v6999 = vsel %vm6953, %v6949, %v6297
        %v7000 = vsel %vm6953, %v6950, %v6299
        %v7001 = vsel %vm6953, %v6951, %v6301
        %v7002 = vsel %vm6953, %v6952, %v6303
        %v7003 = vld [vmem:[%s225] sm:$0xff]
        %v7004 = vld [vmem:[%s225 + $0x8] sm:$0xff]
        %v7005 = vld [vmem:[%s225 + $0x10] sm:$0xff]
        %v7006 = vld [vmem:[%s225 + $0x18] sm:$0xff]
        %v7007 = vld [vmem:[%s225 + $0x20] sm:$0xff]
        %v7008 = vld [vmem:[%s225 + $0x28] sm:$0xff]
        %v7009 = vld [vmem:[%s225 + $0x30] sm:$0xff]
        %v7010 = vld [vmem:[%s225 + $0x38] sm:$0xff]
        %v7011 = vld [vmem:[%s225 + $0x40] sm:$0xff]
        %v7012 = vld [vmem:[%s225 + $0x48] sm:$0xff]
        %v7013 = vld [vmem:[%s225 + $0x50] sm:$0xff]
        %v7014 = vld [vmem:[%s225 + $0x58] sm:$0xff]
        %v7015 = vld [vmem:[%s225 + $0x60] sm:$0xff]
        %v7016 = vld [vmem:[%s225 + $0x68] sm:$0xff]
        %v7017 = vld [vmem:[%s225 + $0x70] sm:$0xff]
        %v7018 = vld [vmem:[%s225 + $0x78] sm:$0xff]
        %v7019 = vld [vmem:[%s225 + $0x80] sm:$0xff]
        %v7020 = vld [vmem:[%s225 + $0x88] sm:$0xff]
        %v7021 = vld [vmem:[%s225 + $0x90] sm:$0xff]
        %v7022 = vld [vmem:[%s225 + $0x98] sm:$0xff]
        %v7023 = vld [vmem:[%s225 + $0xa0] sm:$0xff]
        %v7024 = vld [vmem:[%s225 + $0xa8] sm:$0xff]
        %v7025 = vld [vmem:[%s225 + $0xb0] sm:$0xff]
        %v7026 = vld [vmem:[%s225 + $0xb8] sm:$0xff]
        %v7027 = vld [vmem:[%s225 + $0xc0] sm:$0xff]
        %v7028 = vld [vmem:[%s225 + $0xc8] sm:$0xff]
        %v7029 = vld [vmem:[%s225 + $0xd0] sm:$0xff]
        %v7030 = vld [vmem:[%s225 + $0xd8] sm:$0xff]
        %v7031 = vld [vmem:[%s225 + $0xe0] sm:$0xff]
        %v7032 = vld [vmem:[%s225 + $0xe8] sm:$0xff]
        %v7033 = vld [vmem:[%s225 + $0xf0] sm:$0xff]
        %v7034 = vld [vmem:[%s225 + $0xf8] sm:$0xff]
        %vm7035 = vcmask 556032
        %v7037 = vsel %vm7035, %v6954, 0
        %v7040 = vsel %vm7035, %v6955, 0
        %v7043 = vsel %vm7035, %v6956, 0
        %v7046 = vsel %vm7035, %v6957, 0
        %v7049 = vsel %vm7035, %v6958, 0
        %v7052 = vsel %vm7035, %v6959, 0
        %v7055 = vsel %vm7035, %v6960, 0
        %v7058 = vsel %vm7035, %v6961, 0
        %v7061 = vsel %vm7035, %v6962, 0
        %v7064 = vsel %vm7035, %v6963, 0
        %v7067 = vsel %vm7035, %v6964, 0
        %v7070 = vsel %vm7035, %v6965, 0
        %v7073 = vsel %vm7035, %v6966, 0
        %v7076 = vsel %vm7035, %v6967, 0
        %v7079 = vsel %vm7035, %v6968, 0
        %v7082 = vsel %vm7035, %v6969, 0
        %v7085 = vsel %vm7035, %v6970, 0
        %v7088 = vsel %vm7035, %v6971, 0
        %v7091 = vsel %vm7035, %v6972, 0
        %v7094 = vsel %vm7035, %v6973, 0
        %v7097 = vsel %vm7035, %v6974, 0
        %v7100 = vsel %vm7035, %v6975, 0
        %v7103 = vsel %vm7035, %v6976, 0
        %v7106 = vsel %vm7035, %v6977, 0
        %v7109 = vsel %vm7035, %v6978, 0
        %v7112 = vsel %vm7035, %v6979, 0
        %v7115 = vsel %vm7035, %v6980, 0
        %v7118 = vsel %vm7035, %v6981, 0
        %v7121 = vsel %vm7035, %v6982, 0
        %v7124 = vsel %vm7035, %v6983, 0
        %v7127 = vsel %vm7035, %v6984, 0
        %v7130 = vsel %vm7035, %v6985, 0
        %v7133 = vsel %vm7035, %v6986, 0
        %v7136 = vsel %vm7035, %v6987, 0
        %v7139 = vsel %vm7035, %v6988, 0
        %v7142 = vsel %vm7035, %v6989, 0
        %v7145 = vsel %vm7035, %v6990, 0
        %v7148 = vsel %vm7035, %v6991, 0
        %v7151 = vsel %vm7035, %v6992, 0
        %v7154 = vsel %vm7035, %v6993, 0
        %v7157 = vsel %vm7035, %v6994, 0
        %v7160 = vsel %vm7035, %v6995, 0
        %v7163 = vsel %vm7035, %v6996, 0
        %v7166 = vsel %vm7035, %v6997, 0
        %v7169 = vsel %vm7035, %v6998, 0
        %v7172 = vsel %vm7035, %v6999, 0
        %v7175 = vsel %vm7035, %v7000, 0
        %v7178 = vsel %vm7035, %v7001, 0
        %v7181 = vsel %vm7035, %v7002, 0
        %v7184 = vsel %vm7035, %v7004, 0
        %v7187 = vsel %vm7035, %v7006, 0
        %v7190 = vsel %vm7035, %v7008, 0
        %v7193 = vsel %vm7035, %v7010, 0
        %v7196 = vsel %vm7035, %v7012, 0
        %v7199 = vsel %vm7035, %v7014, 0
        %v7202 = vsel %vm7035, %v7016, 0
        %v7205 = vsel %vm7035, %v7018, 0
        %v7208 = vsel %vm7035, %v7020, 0
        %v7211 = vsel %vm7035, %v7022, 0
        %v7214 = vsel %vm7035, %v7024, 0
        %v7217 = vsel %vm7035, %v7026, 0
        %v7220 = vsel %vm7035, %v7028, 0
        %v7223 = vsel %vm7035, %v7030, 0
        %v7226 = vsel %vm7035, %v7032, 0
        %v7229 = vsel %vm7035, %v7034, 0
        %7231 = vmatprep.subr.mxu0 %v7184
        %7232 = vmatpush1.xpose.msra.mxu0 %v7003
        %7233 = vmatprep.subr.mxu0 %v7187
        %7234 = vmatpush1.xpose.msra.mxu0 %v7005
        %7235 = vmatprep.subr.mxu0 %v7190
        %7236 = vmatpush1.xpose.msra.mxu0 %v7007
        %7237 = vmatprep.subr.mxu0 %v7193
        %7238 = vmatpush1.xpose.msra.mxu0 %v7009
        %7239 = vmatprep.subr.mxu0 %v7196
        %7240 = vmatpush1.xpose.msra.mxu0 %v7011
        %7241 = vmatprep.subr.mxu0 %v7199
        %7242 = vmatpush1.xpose.msra.mxu0 %v7013
        %7243 = vmatprep.subr.mxu0 %v7202
        %7244 = vmatpush1.xpose.msra.mxu0 %v7015
        %7245 = vmatprep.subr.mxu0 %v7205
        %7246 = vmatpush1.xpose.msra.mxu0 %v7017
        %7247 = vmatprep.subr.mxu0 %v7208
        %7248 = vmatpush1.xpose.msra.mxu0 %v7019
        %7249 = vmatprep.subr.mxu0 %v7211
        %7250 = vmatpush1.xpose.msra.mxu0 %v7021
        %7251 = vmatprep.subr.mxu0 %v7214
        %7252 = vmatpush1.xpose.msra.mxu0 %v7023
        %7253 = vmatprep.subr.mxu0 %v7217
        %7254 = vmatpush1.xpose.msra.mxu0 %v7025
        %7255 = vmatprep.subr.mxu0 %v7220
        %7256 = vmatpush1.xpose.msra.mxu0 %v7027
        %7257 = vmatprep.subr.mxu0 %v7223
        %7258 = vmatpush1.xpose.msra.mxu0 %v7029
        %7259 = vmatprep.subr.mxu0 %v7226
        %7260 = vmatpush1.xpose.msra.mxu0 %v7031
        %7261 = vmatprep.subr.mxu0 %v7229
        %7262 = vmatpush1.xpose.msra.mxu0 %v7033
        %7263 = vmatprep.subr.mxu0 0.0
        %7264 = vmatpush1.xpose.msra.mxu0 0.0
        %7265 = vmatprep.subr.mxu0 0.0
        %7266 = vmatpush1.xpose.msra.mxu0 0.0
        %7267 = vmatprep.subr.mxu0 0.0
        %7268 = vmatpush1.xpose.msra.mxu0 0.0
        %7269 = vmatprep.subr.mxu0 0.0
        %7270 = vmatpush1.xpose.msra.mxu0 0.0
        %7271 = vmatprep.subr.mxu0 0.0
        %7272 = vmatpush1.xpose.msra.mxu0 0.0
        %7273 = vmatprep.subr.mxu0 0.0
        %7274 = vmatpush1.xpose.msra.mxu0 0.0
        %7275 = vmatprep.subr.mxu0 0.0
        %7276 = vmatpush1.xpose.msra.mxu0 0.0
        %7277 = vmatprep.subr.mxu0 0.0
        %7278 = vmatpush1.xpose.msra.mxu0 0.0
        %7279 = vmatprep.subr.mxu0 0.0
        %7280 = vmatpush1.xpose.msra.mxu0 0.0
        %7281 = vmatprep.subr.mxu0 0.0
        %7282 = vmatpush1.xpose.msra.mxu0 0.0
        %7283 = vmatprep.subr.mxu0 0.0
        %7284 = vmatpush1.xpose.msra.mxu0 0.0
        %7285 = vmatprep.subr.mxu0 0.0
        %7286 = vmatpush1.xpose.msra.mxu0 0.0
        %7287 = vmatprep.subr.mxu0 0.0
        %7288 = vmatpush1.xpose.msra.mxu0 0.0
        %7289 = vmatprep.subr.mxu0 0.0
        %7290 = vmatpush1.xpose.msra.mxu0 0.0
        %7291 = vmatprep.subr.mxu0 0.0
        %7292 = vmatpush1.xpose.msra.mxu0 0.0
        %7293 = vmatprep.subr.mxu0 0.0
        %7294 = vmatpush1.xpose.msra.mxu0 0.0
        %7295 = vmatprep.mubr.f32.mxu0 %v7037
        %7296 = vmatmul.mubr.f32.gmra.mrb[0].mxu0 %v6754
        %v7297 = vpop.f32.mrb[0].mxu0
        %v7298 = vadd.f32 0.0, %v7297
        %v7299 = vpop.f32.mrb[0].mxu0
        %7300 = vmatprep.mubr.f32.mxu0 %v7040
        %7301 = vmatmul.mubr.f32.gmra.mrb[0].mxu0 %v6755
        %v7302 = vpop.f32.mrb[0].mxu0
        %v7303 = vadd.f32 0.0, %v7302
        %v7304 = vpop.f32.mrb[0].mxu0
        %7305 = vmatprep.mubr.f32.mxu0 %v7043
        %7306 = vmatmul.mubr.f32.gmra.mrb[0].mxu0 %v6756
        %v7307 = vpop.f32.mrb[0].mxu0
        %v7308 = vadd.f32 0.0, %v7307
        %v7309 = vpop.f32.mrb[0].mxu0
        %7310 = vmatprep.mubr.f32.mxu0 %v7046
        %7311 = vmatmul.mubr.f32.gmra.mrb[0].mxu0 %v6757
        %v7312 = vpop.f32.mrb[0].mxu0
        %v7313 = vadd.f32 0.0, %v7312
        %v7314 = vpop.f32.mrb[0].mxu0
        %7315 = vmatprep.mubr.f32.mxu0 %v7049
        %7316 = vmatmul.mubr.f32.gmra.mrb[0].mxu0 %v6758
        %v7317 = vpop.f32.mrb[0].mxu0
        %v7318 = vadd.f32 0.0, %v7317
        %v7319 = vpop.f32.mrb[0].mxu0
        %7320 = vmatprep.mubr.f32.mxu0 %v7052
        %7321 = vmatmul.mubr.f32.gmra.mrb[0].mxu0 %v6759
        %v7322 = vpop.f32.mrb[0].mxu0
        %v7323 = vadd.f32 0.0, %v7322
        %v7324 = vpop.f32.mrb[0].mxu0
        %7325 = vmatprep.mubr.f32.mxu0 %v7055
        %7326 = vmatmul.mubr.f32.gmra.mrb[0].mxu0 %v6760
        %v7327 = vpop.f32.mrb[0].mxu0
        %v7328 = vadd.f32 0.0, %v7327
        %v7329 = vpop.f32.mrb[0].mxu0
        %7330 = vmatprep.mubr.f32.mxu0 %v7058
        %7331 = vmatmul.mubr.f32.gmra.mrb[0].mxu0 %v6761
        %v7332 = vpop.f32.mrb[0].mxu0
        %v7333 = vadd.f32 0.0, %v7332
        %v7334 = vpop.f32.mrb[0].mxu0
        %7335 = vmatprep.mubr.f32.mxu0 %v7061
        %7336 = vmatmul.mubr.f32.gmra.mrb[0].mxu0 %v6762
        %v7337 = vpop.f32.mrb[0].mxu0
        %v7338 = vadd.f32 0.0, %v7337
        %v7339 = vpop.f32.mrb[0].mxu0
        %7340 = vmatprep.mubr.f32.mxu0 %v7064
        %7341 = vmatmul.mubr.f32.gmra.mrb[0].mxu0 %v6763
        %v7342 = vpop.f32.mrb[0].mxu0
        %v7343 = vadd.f32 0.0, %v7342
        %v7344 = vpop.f32.mrb[0].mxu0
        %7345 = vmatprep.mubr.f32.mxu0 %v7067
        %7346 = vmatmul.mubr.f32.gmra.mrb[0].mxu0 %v6764
        %v7347 = vpop.f32.mrb[0].mxu0
        %v7348 = vadd.f32 0.0, %v7347
        %v7349 = vpop.f32.mrb[0].mxu0
        %7350 = vmatprep.mubr.f32.mxu0 %v7070
        %7351 = vmatmul.mubr.f32.gmra.mrb[0].mxu0 %v6765
        %v7352 = vpop.f32.mrb[0].mxu0
        %v7353 = vadd.f32 0.0, %v7352
        %v7354 = vpop.f32.mrb[0].mxu0
        %7355 = vmatprep.mubr.f32.mxu0 %v7073
        %7356 = vmatmul.mubr.f32.gmra.mrb[0].mxu0 %v6766
        %v7357 = vpop.f32.mrb[0].mxu0
        %v7358 = vadd.f32 0.0, %v7357
        %v7359 = vpop.f32.mrb[0].mxu0
        %7360 = vmatprep.mubr.f32.mxu0 %v7076
        %7361 = vmatmul.mubr.f32.gmra.mrb[0].mxu0 %v6767
        %v7362 = vpop.f32.mrb[0].mxu0
        %v7363 = vadd.f32 0.0, %v7362
        %v7364 = vpop.f32.mrb[0].mxu0
        %7365 = vmatprep.mubr.f32.mxu0 %v7079
        %7366 = vmatmul.mubr.f32.gmra.mrb[0].mxu0 %v6768
        %v7367 = vpop.f32.mrb[0].mxu0
        %v7368 = vadd.f32 0.0, %v7367
        %v7369 = vpop.f32.mrb[0].mxu0
        %7370 = vmatprep.mubr.f32.mxu0 %v7082
        %7371 = vmatmul.mubr.f32.gmra.mrb[0].mxu0 %v6769
        %v7372 = vpop.f32.mrb[0].mxu0
        %v7373 = vadd.f32 0.0, %v7372
        %v7374 = vpop.f32.mrb[0].mxu0
        %7375 = vmatprep.mubr.f32.mxu0 %v7085
        %7376 = vmatmul.mubr.f32.gmra.mrb[0].mxu0 %v6770
        %v7377 = vpop.f32.mrb[0].mxu0
        %v7378 = vadd.f32 0.0, %v7377
        %v7379 = vpop.f32.mrb[0].mxu0
        %7380 = vmatprep.mubr.f32.mxu0 %v7088
        %7381 = vmatmul.mubr.f32.gmra.mrb[0].mxu0 %v6771
        %v7382 = vpop.f32.mrb[0].mxu0
        %v7383 = vadd.f32 0.0, %v7382
        %v7384 = vpop.f32.mrb[0].mxu0
        %7385 = vmatprep.mubr.f32.mxu0 %v7091
        %7386 = vmatmul.mubr.f32.gmra.mrb[0].mxu0 %v6772
        %v7387 = vpop.f32.mrb[0].mxu0
        %v7388 = vadd.f32 0.0, %v7387
        %v7389 = vpop.f32.mrb[0].mxu0
        %7390 = vmatprep.mubr.f32.mxu0 %v7094
        %7391 = vmatmul.mubr.f32.gmra.mrb[0].mxu0 %v6773
        %v7392 = vpop.f32.mrb[0].mxu0
        %v7393 = vadd.f32 0.0, %v7392
        %v7394 = vpop.f32.mrb[0].mxu0
        %7395 = vmatprep.mubr.f32.mxu0 %v7097
        %7396 = vmatmul.mubr.f32.gmra.mrb[0].mxu0 %v6774
        %v7397 = vpop.f32.mrb[0].mxu0
        %v7398 = vadd.f32 0.0, %v7397
        %v7399 = vpop.f32.mrb[0].mxu0
        %7400 = vmatprep.mubr.f32.mxu0 %v7100
        %7401 = vmatmul.mubr.f32.gmra.mrb[0].mxu0 %v6775
        %v7402 = vpop.f32.mrb[0].mxu0
        %v7403 = vadd.f32 0.0, %v7402
        %v7404 = vpop.f32.mrb[0].mxu0
        %7405 = vmatprep.mubr.f32.mxu0 %v7103
        %7406 = vmatmul.mubr.f32.gmra.mrb[0].mxu0 %v6776
        %v7407 = vpop.f32.mrb[0].mxu0
        %v7408 = vadd.f32 0.0, %v7407
        %v7409 = vpop.f32.mrb[0].mxu0
        %7410 = vmatprep.mubr.f32.mxu0 %v7106
        %7411 = vmatmul.mubr.f32.gmra.mrb[0].mxu0 %v6777
        %v7412 = vpop.f32.mrb[0].mxu0
        %v7413 = vadd.f32 0.0, %v7412
        %v7414 = vpop.f32.mrb[0].mxu0
        %7415 = vmatprep.mubr.f32.mxu0 %v7109
        %7416 = vmatmul.mubr.f32.gmra.mrb[0].mxu0 %v6778
        %v7417 = vpop.f32.mrb[0].mxu0
        %v7418 = vadd.f32 0.0, %v7417
        %v7419 = vpop.f32.mrb[0].mxu0
        %7420 = vmatprep.mubr.f32.mxu0 %v7112
        %7421 = vmatmul.mubr.f32.gmra.mrb[0].mxu0 %v6779
        %v7422 = vpop.f32.mrb[0].mxu0
        %v7423 = vadd.f32 0.0, %v7422
        %v7424 = vpop.f32.mrb[0].mxu0
        %7425 = vmatprep.mubr.f32.mxu0 %v7115
        %7426 = vmatmul.mubr.f32.gmra.mrb[0].mxu0 %v6780
        %v7427 = vpop.f32.mrb[0].mxu0
        %v7428 = vadd.f32 0.0, %v7427
        %v7429 = vpop.f32.mrb[0].mxu0
        %7430 = vmatprep.mubr.f32.mxu0 %v7118
        %7431 = vmatmul.mubr.f32.gmra.mrb[0].mxu0 %v6781
        %v7432 = vpop.f32.mrb[0].mxu0
        %v7433 = vadd.f32 0.0, %v7432
        %v7434 = vpop.f32.mrb[0].mxu0
        %7435 = vmatprep.mubr.f32.mxu0 %v7121
        %7436 = vmatmul.mubr.f32.gmra.mrb[0].mxu0 %v6782
        %v7437 = vpop.f32.mrb[0].mxu0
        %v7438 = vadd.f32 0.0, %v7437
        %v7439 = vpop.f32.mrb[0].mxu0
        %7440 = vmatprep.mubr.f32.mxu0 %v7124
        %7441 = vmatmul.mubr.f32.gmra.mrb[0].mxu0 %v6783
        %v7442 = vpop.f32.mrb[0].mxu0
        %v7443 = vadd.f32 0.0, %v7442
        %v7444 = vpop.f32.mrb[0].mxu0
        %7445 = vmatprep.mubr.f32.mxu0 %v7127
        %7446 = vmatmul.mubr.f32.gmra.mrb[0].mxu0 %v6784
        %v7447 = vpop.f32.mrb[0].mxu0
        %v7448 = vadd.f32 0.0, %v7447
        %v7449 = vpop.f32.mrb[0].mxu0
        %7450 = vmatprep.mubr.f32.mxu0 %v7130
        %7451 = vmatmul.mubr.f32.gmra.mrb[0].mxu0 %v6785
        %v7452 = vpop.f32.mrb[0].mxu0
        %v7453 = vadd.f32 0.0, %v7452
        %v7454 = vpop.f32.mrb[0].mxu0
        %7455 = vmatprep.mubr.f32.mxu0 %v7133
        %7456 = vmatmul.mubr.f32.gmra.mrb[0].mxu0 %v6786
        %v7457 = vpop.f32.mrb[0].mxu0
        %v7458 = vadd.f32 0.0, %v7457
        %v7459 = vpop.f32.mrb[0].mxu0
        %7460 = vmatprep.mubr.f32.mxu0 %v7136
        %7461 = vmatmul.mubr.f32.gmra.mrb[0].mxu0 %v6787
        %v7462 = vpop.f32.mrb[0].mxu0
        %v7463 = vadd.f32 0.0, %v7462
        %v7464 = vpop.f32.mrb[0].mxu0
        %7465 = vmatprep.mubr.f32.mxu0 %v7139
        %7466 = vmatmul.mubr.f32.gmra.mrb[0].mxu0 %v6788
        %v7467 = vpop.f32.mrb[0].mxu0
        %v7468 = vadd.f32 0.0, %v7467
        %v7469 = vpop.f32.mrb[0].mxu0
        %7470 = vmatprep.mubr.f32.mxu0 %v7142
        %7471 = vmatmul.mubr.f32.gmra.mrb[0].mxu0 %v6789
        %v7472 = vpop.f32.mrb[0].mxu0
        %v7473 = vadd.f32 0.0, %v7472
        %v7474 = vpop.f32.mrb[0].mxu0
        %7475 = vmatprep.mubr.f32.mxu0 %v7145
        %7476 = vmatmul.mubr.f32.gmra.mrb[0].mxu0 %v6790
        %v7477 = vpop.f32.mrb[0].mxu0
        %v7478 = vadd.f32 0.0, %v7477
        %v7479 = vpop.f32.mrb[0].mxu0
        %7480 = vmatprep.mubr.f32.mxu0 %v7148
        %7481 = vmatmul.mubr.f32.gmra.mrb[0].mxu0 %v6791
        %v7482 = vpop.f32.mrb[0].mxu0
        %v7483 = vadd.f32 0.0, %v7482
        %v7484 = vpop.f32.mrb[0].mxu0
        %7485 = vmatprep.mubr.f32.mxu0 %v7151
        %7486 = vmatmul.mubr.f32.gmra.mrb[0].mxu0 %v6792
        %v7487 = vpop.f32.mrb[0].mxu0
        %v7488 = vadd.f32 0.0, %v7487
        %v7489 = vpop.f32.mrb[0].mxu0
        %7490 = vmatprep.mubr.f32.mxu0 %v7154
        %7491 = vmatmul.mubr.f32.gmra.mrb[0].mxu0 %v6793
        %v7492 = vpop.f32.mrb[0].mxu0
        %v7493 = vadd.f32 0.0, %v7492
        %v7494 = vpop.f32.mrb[0].mxu0
        %7495 = vmatprep.mubr.f32.mxu0 %v7157
        %7496 = vmatmul.mubr.f32.gmra.mrb[0].mxu0 %v6794
        %v7497 = vpop.f32.mrb[0].mxu0
        %v7498 = vadd.f32 0.0, %v7497
        %v7499 = vpop.f32.mrb[0].mxu0
        %7500 = vmatprep.mubr.f32.mxu0 %v7160
        %7501 = vmatmul.mubr.f32.gmra.mrb[0].mxu0 %v6795
        %v7502 = vpop.f32.mrb[0].mxu0
        %v7503 = vadd.f32 0.0, %v7502
        %v7504 = vpop.f32.mrb[0].mxu0
        %7505 = vmatprep.mubr.f32.mxu0 %v7163
        %7506 = vmatmul.mubr.f32.gmra.mrb[0].mxu0 %v6796
        %v7507 = vpop.f32.mrb[0].mxu0
        %v7508 = vadd.f32 0.0, %v7507
        %v7509 = vpop.f32.mrb[0].mxu0
        %7510 = vmatprep.mubr.f32.mxu0 %v7166
        %7511 = vmatmul.mubr.f32.gmra.mrb[0].mxu0 %v6797
        %v7512 = vpop.f32.mrb[0].mxu0
        %v7513 = vadd.f32 0.0, %v7512
        %v7514 = vpop.f32.mrb[0].mxu0
        %7515 = vmatprep.mubr.f32.mxu0 %v7169
        %7516 = vmatmul.mubr.f32.gmra.mrb[0].mxu0 %v6798
        %v7517 = vpop.f32.mrb[0].mxu0
        %v7518 = vadd.f32 0.0, %v7517
        %v7519 = vpop.f32.mrb[0].mxu0
        %7520 = vmatprep.mubr.f32.mxu0 %v7172
        %7521 = vmatmul.mubr.f32.gmra.mrb[0].mxu0 %v6799
        %v7522 = vpop.f32.mrb[0].mxu0
        %v7523 = vadd.f32 0.0, %v7522
        %v7524 = vpop.f32.mrb[0].mxu0
        %7525 = vmatprep.mubr.f32.mxu0 %v7175
        %7526 = vmatmul.mubr.f32.gmra.mrb[0].mxu0 %v6800
        %v7527 = vpop.f32.mrb[0].mxu0
        %v7528 = vadd.f32 0.0, %v7527
        %v7529 = vpop.f32.mrb[0].mxu0
        %7530 = vmatprep.mubr.f32.mxu0 %v7178
        %7531 = vmatmul.mubr.f32.gmra.mrb[0].mxu0 %v6801
        %v7532 = vpop.f32.mrb[0].mxu0
        %v7533 = vadd.f32 0.0, %v7532
        %v7534 = vpop.f32.mrb[0].mxu0
        %7535 = vmatprep.mubr.f32.mxu0 %v7181
        %7536 = vmatmul.mubr.f32.gmra.mrb[0].mxu0 %v6802
        %v7537 = vpop.f32.mrb[0].mxu0
        %v7538 = vadd.f32 0.0, %v7537
        %v7539 = vpop.f32.mrb[0].mxu0
        %7540 = vdwg.mxu0
        %7541 = vst [vmem:[%s207] sm:$0xff] %v7298
        %7542 = vst [vmem:[%s207 + $0x8] sm:$0xff] %v7303
        %7543 = vst [vmem:[%s207 + $0x10] sm:$0xff] %v7308
        %7544 = vst [vmem:[%s207 + $0x18] sm:$0xff] %v7313
        %7545 = vst [vmem:[%s207 + $0x20] sm:$0xff] %v7318
        %7546 = vst [vmem:[%s207 + $0x28] sm:$0xff] %v7323
        %7547 = vst [vmem:[%s207 + $0x30] sm:$0xff] %v7328
        %7548 = vst [vmem:[%s207 + $0x38] sm:$0xff] %v7333
        %7549 = vst [vmem:[%s207 + $0x40] sm:$0xff] %v7338
        %7550 = vst [vmem:[%s207 + $0x48] sm:$0xff] %v7343
        %7551 = vst [vmem:[%s207 + $0x50] sm:$0xff] %v7348
        %7552 = vst [vmem:[%s207 + $0x58] sm:$0xff] %v7353
        %7553 = vst [vmem:[%s207 + $0x60] sm:$0xff] %v7358
        %7554 = vst [vmem:[%s207 + $0x68] sm:$0xff] %v7363
        %7555 = vst [vmem:[%s207 + $0x70] sm:$0xff] %v7368
        %7556 = vst [vmem:[%s207 + $0x78] sm:$0xff] %v7373
        %7557 = vst [vmem:[%s207 + $0x80] sm:$0xff] %v7378
        %7558 = vst [vmem:[%s207 + $0x88] sm:$0xff] %v7383
        %7559 = vst [vmem:[%s207 + $0x90] sm:$0xff] %v7388
        %7560 = vst [vmem:[%s207 + $0x98] sm:$0xff] %v7393
        %7561 = vst [vmem:[%s207 + $0xa0] sm:$0xff] %v7398
        %7562 = vst [vmem:[%s207 + $0xa8] sm:$0xff] %v7403
        %7563 = vst [vmem:[%s207 + $0xb0] sm:$0xff] %v7408
        %7564 = vst [vmem:[%s207 + $0xb8] sm:$0xff] %v7413
        %7565 = vst [vmem:[%s207 + $0xc0] sm:$0xff] %v7418
        %7566 = vst [vmem:[%s207 + $0xc8] sm:$0xff] %v7423
        %7567 = vst [vmem:[%s207 + $0xd0] sm:$0xff] %v7428
        %7568 = vst [vmem:[%s207 + $0xd8] sm:$0xff] %v7433
        %7569 = vst [vmem:[%s207 + $0xe0] sm:$0xff] %v7438
        %7570 = vst [vmem:[%s207 + $0xe8] sm:$0xff] %v7443
        %7571 = vst [vmem:[%s207 + $0xf0] sm:$0xff] %v7448
        %7572 = vst [vmem:[%s207 + $0xf8] sm:$0xff] %v7453
        %7573 = vst [vmem:[%s207 + $0x100] sm:$0xff] %v7458
        %7574 = vst [vmem:[%s207 + $0x108] sm:$0xff] %v7463
        %7575 = vst [vmem:[%s207 + $0x110] sm:$0xff] %v7468
        %7576 = vst [vmem:[%s207 + $0x118] sm:$0xff] %v7473
        %7577 = vst [vmem:[%s207 + $0x120] sm:$0xff] %v7478
        %7578 = vst [vmem:[%s207 + $0x128] sm:$0xff] %v7483
        %7579 = vst [vmem:[%s207 + $0x130] sm:$0xff] %v7488
        %7580 = vst [vmem:[%s207 + $0x138] sm:$0xff] %v7493
        %7581 = vst [vmem:[%s207 + $0x140] sm:$0xff] %v7498
        %7582 = vst [vmem:[%s207 + $0x148] sm:$0xff] %v7503
        %7583 = vst [vmem:[%s207 + $0x150] sm:$0xff] %v7508
        %7584 = vst [vmem:[%s207 + $0x158] sm:$0xff] %v7513
        %7585 = vst [vmem:[%s207 + $0x160] sm:$0xff] %v7518
        %7586 = vst [vmem:[%s207 + $0x168] sm:$0xff] %v7523
        %7587 = vst [vmem:[%s207 + $0x170] sm:$0xff] %v7528
        %7588 = vst [vmem:[%s207 + $0x178] sm:$0xff] %v7533
        %7589 = vst [vmem:[%s207 + $0x180] sm:$0xff] %v7538
        %s7590 = sand.u32 %s112, 1
        %s7591 = scalar_lea.sflag [#allocation5], %s7590
        %s7592 = sand.u32 %s112, 1
        %s7593 = smul.addr %s7592, 392
        %s7594 = scalar_lea.vmem [#allocation4], %s7593
        // Predicated region
        $region33: #{tpu_custom_call.1} parent=31 // pred_check
          %p7595 = pneg %p122
        $region34: #{tpu_custom_call.1} parent=31 // pred_check_branch
          %7597 = sbr.rel (%p7595) target = $region36
        $region35: #{tpu_custom_call.1} parent=31 // pred_region
          %s7598 = smul.u32 49, %s24
          %s7600 = ssub.s32 6272, 6272
          %7601 = vsyncadd %s7591, %s7600
          %s7602 = smul.addr %s7598, 128
          %s7603 = scalar_lea.hbm %s4, %s7602
          %s7604 = sshll.u32 %s7594, 4
          %s7605 = int_to_ptr.vmem [resolvable:$true] %s7604
          %7610 = dma.vmem_to_hbm [thread:$0]  %s7605, 6272, %s7603, %s7591, 128, 128, 8
        $region36: #{tpu_custom_call.1} parent=31 // pred_fallthru
          _
      $region32: #{tpu_custom_call.1} parent=5 // pred_fallthru
        _
      %p7611 = scmp.le.s32.totalorder 2, %s19
      // Predicated region
      $region37: #{tpu_custom_call.1} parent=5 // pred_check
        %p7612 = pneg %p7611
      $region38: #{tpu_custom_call.1} parent=5 // pred_check_branch
        %7614 = sbr.rel (%p7612) target = $region40
      $region39: #{tpu_custom_call.1} parent=5 // pred_region
        %s7615 = ssub.s32 %s19, 2
        // Predicated region
        $region41: #{tpu_custom_call.1} parent=39 // pred_check
          %p7616 = pneg %p128
        $region42: #{tpu_custom_call.1} parent=39 // pred_check_branch
          %7618 = sbr.rel (%p7616) target = $region44
        $region43: #{tpu_custom_call.1} parent=39 // pred_region
          %s7619 = sand.u32 %s113, 1
          %s7620 = scalar_lea.sflag [#allocation5], %s7619
          %s7621 = sand.u32 %s113, 1
          %s7622 = smul.addr %s7621, 392
          %s7623 = scalar_lea.vmem [#allocation4], %s7622
          %7624 = dma.done %s7620, 6272
        $region44: #{tpu_custom_call.1} parent=39 // pred_fallthru
          _
      $region40: #{tpu_custom_call.1} parent=5 // pred_fallthru
        _
    $region6: #{tpu_custom_call.1} parent=1 // loop_footer
      %s23 = sadd.s32 1, %s19
    $region7: #{tpu_custom_call.1} parent=1 // loop_footer_branch
      %18 = sbr.rel target = $region3
    $region8: #{tpu_custom_call.1} parent=1 // loop_exit
      _
    %7625 = vsyncpa [#allocation5], 1
    %s7626 = scalar_lea.sflag [#allocation5], 1
    %7627 = vsyncpa %s7626, 1

</llo_original>
